<compile_context>
chip_gen: v5e
topology: v5e:2x2
jax: 0.10.0
libtpu: 0.0.40
codegen_flags: <defaults>
</compile_context>

<pallas_src>
import functools

import jax
import jax.numpy as jnp
from jax.experimental import pallas as pl
from jax.experimental.pallas import tpu as pltpu

_CPAD = 128    # lane-padded output channels (nclass + 2 + zero pad)
_SUBLANE = 8   # f32 sublane tile; keeps the bulk scratch store sublane-aligned


# ----------------------------------------------------------------------------
# Fused kernel: conv0(3x3, Cin->C0, BN, ReLU) -> [dropout = identity, eval] ->
#               conv1(3x3, C0->nclass, BN, ReLU) & conv2(3x3, C0->2, BN, Softmax)
# One batch element per program.  Spatial dims enter flattened as (H*W, C)
# (flatten done in the wrapper; W should be a multiple of 8 for cheap in-kernel
# (H,W,C) <-> (H*W,C) relayouts).
# ----------------------------------------------------------------------------
def _scnn_head_kernel(x_ref, w0_ref, s0_ref, b0_ref, w12_ref, s12_ref, b12_ref,
                      o_ref, zp_ref, xp_ref, *, nclass, H, W):
    HW = H * W
    C0 = xp_ref.shape[-1]      # 32
    C0S = zp_ref.shape[-1]     # 9*C0 padded to a 128-lane multiple (384)
    CP = o_ref.shape[-1]       # 128
    LO = _SUBLANE              # sublane-aligned low-side pad of the W axis

    # ---- conv0: ONE stacked-tap matmul (K=Cin, N=9*C0 padded to C0S) -------
    x = x_ref[0]                                                    # (HW, Cin) bf16
    z = jnp.dot(x, w0_ref[...], preferred_element_type=jnp.float32)  # (HW, C0S)

    # Gather form of the 3x3 / pad=1 conv: write z ONCE (lane-dense, sublane-
    # aligned offset) into a spatially padded buffer, then sum the 9 shifted
    # tap windows in registers (no repeated masked RMW accumulator stores).
    zp_ref[...] = jnp.zeros_like(zp_ref)
    zp_ref[1:H + 1, LO:LO + W, :] = z.reshape(H, W, C0S)
    xi = jnp.zeros((HW, C0), jnp.float32)
    for t in range(9):
        dy, dx = t // 3, t % 3
        win = zp_ref[dy:dy + H, LO - 1 + dx:LO - 1 + dx + W, :].reshape(HW, C0S)
        xi = xi + win[:, t * C0:(t + 1) * C0]

    # BatchNorm(eval) affine + ReLU.  nn.Dropout2d() is identity in eval mode.
    xi = jnp.maximum(xi * s0_ref[...] + b0_ref[...], 0.0)

    # ---- conv1 + conv2 via im2col: ONE bf16 matmul (K=9*C0=288, N=128) -----
    xp_ref[...] = jnp.zeros_like(xp_ref)
    xp_ref[1:H + 1, LO:LO + W, :] = xi.reshape(H, W, C0)
    patches = jnp.concatenate(
        [xp_ref[dy:dy + H, LO - 1 + dx:LO - 1 + dx + W, :].reshape(HW, C0)
         for dy in range(3) for dx in range(3)], axis=-1)            # (HW, 9*C0)
    a = jnp.dot(patches.astype(jnp.bfloat16), w12_ref[...],
                preferred_element_type=jnp.float32)                  # (HW, CP)
    a = a * s12_ref[...] + b12_ref[...]          # fused BN affine (conv1 & conv2)

    # Epilogue: ReLU on conv1 lanes; EXACT 2-class channel softmax on the two
    # conv2 lanes computed as a sigmoid of the logit difference (narrow slice,
    # no full-width max/exp/sum).  Padding lanes -> 0.
    d = a[:, nclass + 1:nclass + 2] - a[:, nclass:nclass + 1]        # a1 - a0
    e = jnp.exp(d)
    p0 = 1.0 / (1.0 + e)
    p1 = 1.0 - p0
    col = jax.lax.broadcasted_iota(jnp.int32, (HW, CP), 1)
    out = jnp.where(col < nclass, jnp.maximum(a, 0.0), 0.0)
    out = jnp.where(col == nclass, p0, out)
    out = jnp.where(col == nclass + 1, p1, out)
    o_ref[0] = out.astype(o_ref.dtype)


def scnn_head_fused(x_flat, w0s, s0, b0, w12, s12, b12, *, nclass, H, W):
    N, HW, Cin = x_flat.shape
    C0 = s0.shape[-1]
    C0S = w0s.shape[-1]
    CP = _CPAD
    kernel = functools.partial(_scnn_head_kernel, nclass=nclass, H=H, W=W)
    # TODO(synk): add a row-tiled spatial grid axis with a 2-row halo before
    # running realistic (~36x100) shapes, sized against v7x's 64 MiB VMEM.
    return pl.pallas_call(
        kernel,
        out_shape=jax.ShapeDtypeStruct((N, HW, CP), jnp.bfloat16),
        grid_spec=pltpu.PrefetchScalarGridSpec(
            num_scalar_prefetch=0,
            grid=(N,),
            in_specs=[
                pl.BlockSpec((1, HW, Cin), lambda n: (n, 0, 0)),
                pl.BlockSpec((Cin, C0S), lambda n: (0, 0)),   # constant index ->
                pl.BlockSpec((1, C0), lambda n: (0, 0)),      # weights/scales are
                pl.BlockSpec((1, C0), lambda n: (0, 0)),      # not re-fetched per
                pl.BlockSpec((9 * C0, CP), lambda n: (0, 0)),  # grid step
                pl.BlockSpec((1, CP), lambda n: (0, 0)),
                pl.BlockSpec((1, CP), lambda n: (0, 0)),
            ],
            out_specs=pl.BlockSpec((1, HW, CP), lambda n: (n, 0, 0)),
            scratch_shapes=[
                pltpu.VMEM((H + 2, W + _SUBLANE + 1, C0S), jnp.float32),  # conv0 pad
                pltpu.VMEM((H + 2, W + _SUBLANE + 1, C0), jnp.float32),   # im2col pad
            ],
        ),
        compiler_params=pltpu.CompilerParams(
            dimension_semantics=("parallel",),
            vmem_limit_bytes=64 * 1024 * 1024),
    )(x_flat, w0s, s0, b0, w12, s12, b12)


# ----------------------------------------------------------------------------
# Parameter packing for the fused kernel (pure jnp, runs under jit).
# ----------------------------------------------------------------------------
def _pack_params(p, nclass):
    cin, c0 = p["w0"].shape[2], p["w0"].shape[3]
    c0s = ((9 * c0 + 127) // 128) * 128
    # conv0 HWIO (3,3,Cin,C0) -> stacked-tap (Cin, 9*C0); tap t=(t//3, t%3)
    # occupies columns t*C0:(t+1)*C0; zero-padded to a 128-lane multiple, bf16.
    w0s = jnp.transpose(p["w0"].reshape(9, cin, c0), (1, 0, 2)).reshape(cin, 9 * c0)
    w0s = jnp.pad(w0s, ((0, 0), (0, c0s - 9 * c0))).astype(jnp.bfloat16)
    s0 = p["scale0"].reshape(1, c0)
    b0 = p["shift0"].reshape(1, c0)
    # conv1+conv2 im2col weights: rows = 9 taps x C0 (tap-major); columns
    # padded to 128 lanes: [0:nclass]=conv1, [nclass:nclass+2]=conv2, rest 0.
    w1r = p["w1"].reshape(9 * c0, nclass)
    w2r = p["w2"].reshape(9 * c0, 2)
    zc = jnp.zeros((9 * c0, _CPAD - nclass - 2), jnp.float32)
    w12 = jnp.concatenate([w1r, w2r, zc], axis=-1).astype(jnp.bfloat16)
    zpad = jnp.zeros((_CPAD - nclass - 2,), jnp.float32)
    s12 = jnp.concatenate([p["scale1"], p["scale2"], zpad]).reshape(1, _CPAD)
    b12 = jnp.concatenate([p["shift1"], p["shift2"], zpad]).reshape(1, _CPAD)
    return w0s, s0, b0, w12, s12, b12


# ----------------------------------------------------------------------------
# Deterministic parameter init (synthetic; shapes from SCNN.__init__)
# ----------------------------------------------------------------------------
def _make_conv_bn(key, cin, cout, eps=1e-5):
    kw, kg, kb, km, kv = jax.random.split(key, 5)
    w = jax.random.normal(kw, (3, 3, cin, cout), jnp.float32) * (2.0 / (9 * cin)) ** 0.5
    gamma = jax.random.uniform(kg, (cout,), jnp.float32, 0.5, 1.5)
    beta = jax.random.normal(kb, (cout,), jnp.float32) * 0.1
    mean = jax.random.normal(km, (cout,), jnp.float32) * 0.1
    var = jax.random.uniform(kv, (cout,), jnp.float32, 0.5, 1.5)
    scale = gamma / jnp.sqrt(var + eps)
    shift = beta - mean * scale
    return w, scale, shift


def init_scnn_params(key, nclass=19):
    k0, k1, k2 = jax.random.split(key, 3)
    w0, s0, b0 = _make_conv_bn(k0, 2048, 32)      # conv0: 2048 -> 32
    w1, s1, b1 = _make_conv_bn(k1, 32, nclass)    # conv1: 32 -> nclass
    w2, s2, b2 = _make_conv_bn(k2, 32, 2)         # conv2: 32 -> 2
    return dict(w0=w0, scale0=s0, shift0=b0,
                w1=w1, scale1=s1, shift1=b1,
                w2=w2, scale2=s2, shift2=b2)


# ----------------------------------------------------------------------------
# SCNN forward (eval semantics)
# ----------------------------------------------------------------------------
def scnn_forward(x1_nchw, params, nclass=19):
    N, Cin, H, W = x1_nchw.shape
    # TODO(synk): build_backbone is not defined in the provided source; the
    # input here IS the backbone feature x1 (2048 ch); x2/x3/x4 are unused.
    # permute(0,2,3,1) -> NHWC; the flatten-to-(N,H*W,C) and bf16 cast fuse
    # into the same XLA transpose-copy.  TODO(synk): push a bf16 NHWC layout
    # upstream into the backbone so this HBM copy of the 2048-ch map vanishes.
    x = jnp.transpose(x1_nchw, (0, 2, 3, 1)).reshape(N, H * W, Cin)
    x = x.astype(jnp.bfloat16)
    # TODO(synk): build_rnn(32) definition not provided; treated as identity.
    w0s, s0, b0, w12, s12, b12 = _pack_params(params, nclass)
    # nn.Dropout2d() is identity in eval mode (handled in-kernel as identity).
    # TODO(synk): build_extension(ext=None) definition not provided; identity.
    out = scnn_head_fused(x, w0s, s0, b0, w12, s12, b12, nclass=nclass, H=H, W=W)
    out = out.astype(jnp.float32).reshape(N, H, W, _CPAD)
    xo = jnp.transpose(out[..., :nclass], (0, 3, 1, 2))           # conv1 (ReLU)
    y = jnp.transpose(out[..., nclass:nclass + 2], (0, 3, 1, 2))  # conv2 (softmax)
    return xo, y


# ----------------------------------------------------------------------------
# Pure-JAX reference (mirrors the kernel's deliberate bf16 quantization of
# the conv0 operands so the check exercises kernel correctness, not bf16).
# ----------------------------------------------------------------------------
def _ref_conv_bn_act(x_nhwc, w, scale, shift, act):
    y = jax.lax.conv_general_dilated(
        x_nhwc, w, (1, 1), "SAME",
        dimension_numbers=("NHWC", "HWIO", "NHWC"),
        precision=jax.lax.Precision.HIGHEST)
    y = y * scale[None, None, None, :] + shift[None, None, None, :]
    if act == "relu":
        return jnp.maximum(y, 0.0)
    return jax.nn.softmax(y, axis=-1)


def _ref_forward(x1_nchw, p, nclass=19):
    x = jnp.transpose(x1_nchw, (0, 2, 3, 1))
    xq = x.astype(jnp.bfloat16).astype(jnp.float32)
    w0q = p["w0"].astype(jnp.bfloat16).astype(jnp.float32)
    h = _ref_conv_bn_act(xq, w0q, p["scale0"], p["shift0"], "relu")
    y = _ref_conv_bn_act(h, p["w2"], p["scale2"], p["shift2"], "softmax")
    xo = _ref_conv_bn_act(h, p["w1"], p["scale1"], p["shift1"], "relu")
    return jnp.transpose(xo, (0, 3, 1, 2)), jnp.transpose(y, (0, 3, 1, 2))


if __name__ == "__main__":
    key = jax.random.PRNGKey(0)
    kx, kp = jax.random.split(key)
    # x1: backbone output feature map (batch=2, 2048 channels, 4x8 spatial)
    x1 = jax.random.normal(kx, (2, 2048, 4, 8), jnp.float32) * 0.1
    params = init_scnn_params(kp, nclass=19)

    fwd = jax.jit(functools.partial(scnn_forward, nclass=19))
    out_x, out_y = fwd(x1, params)
    jax.block_until_ready((out_x, out_y))

    ref_x, ref_y = _ref_forward(x1, params, nclass=19)
    assert out_x.shape == (2, 19, 4, 8) and out_y.shape == (2, 2, 4, 8)
    assert jnp.allclose(out_x, ref_x, atol=1e-2, rtol=1e-2)
    assert jnp.allclose(out_y, ref_y, atol=1e-2, rtol=1e-2)
    print("KERNEL_OK")
</pallas_src>

<mosaic_0001>
module attributes {stable_mosaic.version = 11 : i64} {
  func.func @_scnn_head_kernel(%arg0: i32, %arg1: memref<1x32x2048xbf16, #tpu.memory_space<vmem>>, %arg2: memref<2048x384xbf16, #tpu.memory_space<vmem>>, %arg3: memref<1x32xf32, #tpu.memory_space<vmem>>, %arg4: memref<1x32xf32, #tpu.memory_space<vmem>>, %arg5: memref<288x128xbf16, #tpu.memory_space<vmem>>, %arg6: memref<1x128xf32, #tpu.memory_space<vmem>>, %arg7: memref<1x128xf32, #tpu.memory_space<vmem>>, %arg8: memref<1x32x128xbf16, #tpu.memory_space<vmem>>, %arg9: memref<6x17x384xf32, #tpu.memory_space<vmem>>, %arg10: memref<6x17x32xf32, #tpu.memory_space<vmem>>) attributes {dimension_semantics = [#tpu.dimension_semantics<parallel>], iteration_bounds = array<i64: 2>, scalar_prefetch = 0 : i64, scratch_operands = 2 : i64, tpu.core_type = #tpu.core_type<tc>, window_params = [{transform_indices = @transform_0, window_bounds = array<i64: 1, 32, 2048>}, {pipeline_mode = #tpu.pipeline_mode<synchronous>, transform_indices = @transform_1, window_bounds = array<i64: 2048, 384>}, {pipeline_mode = #tpu.pipeline_mode<synchronous>, transform_indices = @transform_2, window_bounds = array<i64: 1, 32>}, {pipeline_mode = #tpu.pipeline_mode<synchronous>, transform_indices = @transform_3, window_bounds = array<i64: 1, 32>}, {pipeline_mode = #tpu.pipeline_mode<synchronous>, transform_indices = @transform_4, window_bounds = array<i64: 288, 128>}, {pipeline_mode = #tpu.pipeline_mode<synchronous>, transform_indices = @transform_5, window_bounds = array<i64: 1, 128>}, {pipeline_mode = #tpu.pipeline_mode<synchronous>, transform_indices = @transform_6, window_bounds = array<i64: 1, 128>}, {transform_indices = @transform_7, window_bounds = array<i64: 1, 32, 128>}]} {
    %c0 = arith.constant 0 : index
    %c0_0 = arith.constant 0 : index
    %c0_1 = arith.constant 0 : index
    %0 = vector.load %arg1[%c0, %c0_0, %c0_1] : memref<1x32x2048xbf16, #tpu.memory_space<vmem>>, vector<1x32x2048xbf16>
    %1 = vector.shape_cast %0 : vector<1x32x2048xbf16> to vector<32x2048xbf16>
    %c0_2 = arith.constant 0 : index
    %c0_3 = arith.constant 0 : index
    %2 = vector.load %arg2[%c0_2, %c0_3] : memref<2048x384xbf16, #tpu.memory_space<vmem>>, vector<2048x384xbf16>
    %cst = arith.constant dense<0.000000e+00> : vector<32x384xf32>
    %3 = tpu.matmul %1, %2, %cst {dimension_numbers = #tpu.dot_dimension_numbers<[1], [0], [0], [1], [0, 0, 1, 1], [], []>} : vector<32x2048xbf16>, vector<2048x384xbf16>, vector<32x384xf32> -> vector<32x384xf32>
    %cst_4 = arith.constant 0.000000e+00 : f32
    %4 = vector.broadcast %cst_4 : f32 to vector<6x17x384xf32>
    %c0_5 = arith.constant 0 : index
    %c0_6 = arith.constant 0 : index
    %c0_7 = arith.constant 0 : index
    %5 = vector.load %arg9[%c0_5, %c0_6, %c0_7] : memref<6x17x384xf32, #tpu.memory_space<vmem>>, vector<6x17x384xf32>
    tpu.vector_store %arg9[%c0_5, %c0_6, %c0_7], %4 {strides = array<i32>} : memref<6x17x384xf32, #tpu.memory_space<vmem>>, vector<6x17x384xf32>,
    %6 = vector.shape_cast %3 : vector<32x384xf32> to vector<4x8x384xf32>
    %c1 = arith.constant 1 : index
    %c8 = arith.constant 8 : index
    %c0_8 = arith.constant 0 : index
    %7 = vector.load %arg9[%c1, %c8, %c0_8] : memref<6x17x384xf32, #tpu.memory_space<vmem>>, vector<4x8x384xf32>
    tpu.vector_store %arg9[%c1, %c8, %c0_8], %6 {strides = array<i32>} : memref<6x17x384xf32, #tpu.memory_space<vmem>>, vector<4x8x384xf32>,
    %cst_9 = arith.constant 0.000000e+00 : f32
    %8 = vector.broadcast %cst_9 : f32 to vector<32x32xf32>
    %c0_10 = arith.constant 0 : index
    %c7 = arith.constant 7 : index
    %c0_11 = arith.constant 0 : index
    %9 = vector.load %arg9[%c0_10, %c7, %c0_11] : memref<6x17x384xf32, #tpu.memory_space<vmem>>, vector<4x8x384xf32>
    %10 = vector.shape_cast %9 : vector<4x8x384xf32> to vector<32x384xf32>
    %11 = vector.extract_strided_slice %10 {offsets = [0, 0], sizes = [32, 32], strides = [1, 1]} : vector<32x384xf32> to vector<32x32xf32>
    %12 = arith.addf %8, %11 : vector<32x32xf32>
    %c0_12 = arith.constant 0 : index
    %c8_13 = arith.constant 8 : index
    %c0_14 = arith.constant 0 : index
    %13 = vector.load %arg9[%c0_12, %c8_13, %c0_14] : memref<6x17x384xf32, #tpu.memory_space<vmem>>, vector<4x8x384xf32>
    %14 = vector.shape_cast %13 : vector<4x8x384xf32> to vector<32x384xf32>
    %15 = vector.extract_strided_slice %14 {offsets = [0, 32], sizes = [32, 32], strides = [1, 1]} : vector<32x384xf32> to vector<32x32xf32>
    %16 = arith.addf %12, %15 : vector<32x32xf32>
    %c0_15 = arith.constant 0 : index
    %c9 = arith.constant 9 : index
    %c0_16 = arith.constant 0 : index
    %17 = vector.load %arg9[%c0_15, %c9, %c0_16] : memref<6x17x384xf32, #tpu.memory_space<vmem>>, vector<4x8x384xf32>
    %18 = vector.shape_cast %17 : vector<4x8x384xf32> to vector<32x384xf32>
    %19 = vector.extract_strided_slice %18 {offsets = [0, 64], sizes = [32, 32], strides = [1, 1]} : vector<32x384xf32> to vector<32x32xf32>
    %20 = arith.addf %16, %19 : vector<32x32xf32>
    %c1_17 = arith.constant 1 : index
    %c7_18 = arith.constant 7 : index
    %c0_19 = arith.constant 0 : index
    %21 = vector.load %arg9[%c1_17, %c7_18, %c0_19] : memref<6x17x384xf32, #tpu.memory_space<vmem>>, vector<4x8x384xf32>
    %22 = vector.shape_cast %21 : vector<4x8x384xf32> to vector<32x384xf32>
    %23 = vector.extract_strided_slice %22 {offsets = [0, 96], sizes = [32, 32], strides = [1, 1]} : vector<32x384xf32> to vector<32x32xf32>
    %24 = arith.addf %20, %23 : vector<32x32xf32>
    %c1_20 = arith.constant 1 : index
    %c8_21 = arith.constant 8 : index
    %c0_22 = arith.constant 0 : index
    %25 = vector.load %arg9[%c1_20, %c8_21, %c0_22] : memref<6x17x384xf32, #tpu.memory_space<vmem>>, vector<4x8x384xf32>
    %26 = vector.shape_cast %25 : vector<4x8x384xf32> to vector<32x384xf32>
    %27 = vector.extract_strided_slice %26 {offsets = [0, 128], sizes = [32, 32], strides = [1, 1]} : vector<32x384xf32> to vector<32x32xf32>
    %28 = arith.addf %24, %27 : vector<32x32xf32>
    %c1_23 = arith.constant 1 : index
    %c9_24 = arith.constant 9 : index
    %c0_25 = arith.constant 0 : index
    %29 = vector.load %arg9[%c1_23, %c9_24, %c0_25] : memref<6x17x384xf32, #tpu.memory_space<vmem>>, vector<4x8x384xf32>
    %30 = vector.shape_cast %29 : vector<4x8x384xf32> to vector<32x384xf32>
    %31 = vector.extract_strided_slice %30 {offsets = [0, 160], sizes = [32, 32], strides = [1, 1]} : vector<32x384xf32> to vector<32x32xf32>
    %32 = arith.addf %28, %31 : vector<32x32xf32>
    %c2 = arith.constant 2 : index
    %c7_26 = arith.constant 7 : index
    %c0_27 = arith.constant 0 : index
    %33 = vector.load %arg9[%c2, %c7_26, %c0_27] : memref<6x17x384xf32, #tpu.memory_space<vmem>>, vector<4x8x384xf32>
    %34 = vector.shape_cast %33 : vector<4x8x384xf32> to vector<32x384xf32>
    %35 = vector.extract_strided_slice %34 {offsets = [0, 192], sizes = [32, 32], strides = [1, 1]} : vector<32x384xf32> to vector<32x32xf32>
    %36 = arith.addf %32, %35 : vector<32x32xf32>
    %c2_28 = arith.constant 2 : index
    %c8_29 = arith.constant 8 : index
    %c0_30 = arith.constant 0 : index
    %37 = vector.load %arg9[%c2_28, %c8_29, %c0_30] : memref<6x17x384xf32, #tpu.memory_space<vmem>>, vector<4x8x384xf32>
    %38 = vector.shape_cast %37 : vector<4x8x384xf32> to vector<32x384xf32>
    %39 = vector.extract_strided_slice %38 {offsets = [0, 224], sizes = [32, 32], strides = [1, 1]} : vector<32x384xf32> to vector<32x32xf32>
    %40 = arith.addf %36, %39 : vector<32x32xf32>
    %c2_31 = arith.constant 2 : index
    %c9_32 = arith.constant 9 : index
    %c0_33 = arith.constant 0 : index
    %41 = vector.load %arg9[%c2_31, %c9_32, %c0_33] : memref<6x17x384xf32, #tpu.memory_space<vmem>>, vector<4x8x384xf32>
    %42 = vector.shape_cast %41 : vector<4x8x384xf32> to vector<32x384xf32>
    %43 = vector.extract_strided_slice %42 {offsets = [0, 256], sizes = [32, 32], strides = [1, 1]} : vector<32x384xf32> to vector<32x32xf32>
    %44 = arith.addf %40, %43 : vector<32x32xf32>
    %c0_34 = arith.constant 0 : index
    %c0_35 = arith.constant 0 : index
    %45 = vector.load %arg3[%c0_34, %c0_35] : memref<1x32xf32, #tpu.memory_space<vmem>>, vector<1x32xf32>
    %46 = vector.broadcast %45 : vector<1x32xf32> to vector<32x32xf32>
    %47 = arith.mulf %44, %46 : vector<32x32xf32>
    %c0_36 = arith.constant 0 : index
    %c0_37 = arith.constant 0 : index
    %48 = vector.load %arg4[%c0_36, %c0_37] : memref<1x32xf32, #tpu.memory_space<vmem>>, vector<1x32xf32>
    %49 = vector.broadcast %48 : vector<1x32xf32> to vector<32x32xf32>
    %50 = arith.addf %47, %49 : vector<32x32xf32>
    %cst_38 = arith.constant 0.000000e+00 : f32
    %51 = vector.broadcast %cst_38 : f32 to vector<32x32xf32>
    %52 = arith.maximumf %50, %51 : vector<32x32xf32>
    %cst_39 = arith.constant 0.000000e+00 : f32
    %53 = vector.broadcast %cst_39 : f32 to vector<6x17x32xf32>
    %c0_40 = arith.constant 0 : index
    %c0_41 = arith.constant 0 : index
    %c0_42 = arith.constant 0 : index
    %54 = vector.load %arg10[%c0_40, %c0_41, %c0_42] : memref<6x17x32xf32, #tpu.memory_space<vmem>>, vector<6x17x32xf32>
    tpu.vector_store %arg10[%c0_40, %c0_41, %c0_42], %53 {strides = array<i32>} : memref<6x17x32xf32, #tpu.memory_space<vmem>>, vector<6x17x32xf32>,
    %55 = vector.shape_cast %52 : vector<32x32xf32> to vector<4x8x32xf32>
    %c1_43 = arith.constant 1 : index
    %c8_44 = arith.constant 8 : index
    %c0_45 = arith.constant 0 : index
    %56 = vector.load %arg10[%c1_43, %c8_44, %c0_45] : memref<6x17x32xf32, #tpu.memory_space<vmem>>, vector<4x8x32xf32>
    tpu.vector_store %arg10[%c1_43, %c8_44, %c0_45], %55 {strides = array<i32>} : memref<6x17x32xf32, #tpu.memory_space<vmem>>, vector<4x8x32xf32>,
    %c0_46 = arith.constant 0 : index
    %c7_47 = arith.constant 7 : index
    %c0_48 = arith.constant 0 : index
    %57 = vector.load %arg10[%c0_46, %c7_47, %c0_48] : memref<6x17x32xf32, #tpu.memory_space<vmem>>, vector<4x8x32xf32>
    %58 = vector.shape_cast %57 : vector<4x8x32xf32> to vector<32x32xf32>
    %c0_49 = arith.constant 0 : index
    %c8_50 = arith.constant 8 : index
    %c0_51 = arith.constant 0 : index
    %59 = vector.load %arg10[%c0_49, %c8_50, %c0_51] : memref<6x17x32xf32, #tpu.memory_space<vmem>>, vector<4x8x32xf32>
    %60 = vector.shape_cast %59 : vector<4x8x32xf32> to vector<32x32xf32>
    %c0_52 = arith.constant 0 : index
    %c9_53 = arith.constant 9 : index
    %c0_54 = arith.constant 0 : index
    %61 = vector.load %arg10[%c0_52, %c9_53, %c0_54] : memref<6x17x32xf32, #tpu.memory_space<vmem>>, vector<4x8x32xf32>
    %62 = vector.shape_cast %61 : vector<4x8x32xf32> to vector<32x32xf32>
    %c1_55 = arith.constant 1 : index
    %c7_56 = arith.constant 7 : index
    %c0_57 = arith.constant 0 : index
    %63 = vector.load %arg10[%c1_55, %c7_56, %c0_57] : memref<6x17x32xf32, #tpu.memory_space<vmem>>, vector<4x8x32xf32>
    %64 = vector.shape_cast %63 : vector<4x8x32xf32> to vector<32x32xf32>
    %c1_58 = arith.constant 1 : index
    %c8_59 = arith.constant 8 : index
    %c0_60 = arith.constant 0 : index
    %65 = vector.load %arg10[%c1_58, %c8_59, %c0_60] : memref<6x17x32xf32, #tpu.memory_space<vmem>>, vector<4x8x32xf32>
    %66 = vector.shape_cast %65 : vector<4x8x32xf32> to vector<32x32xf32>
    %c1_61 = arith.constant 1 : index
    %c9_62 = arith.constant 9 : index
    %c0_63 = arith.constant 0 : index
    %67 = vector.load %arg10[%c1_61, %c9_62, %c0_63] : memref<6x17x32xf32, #tpu.memory_space<vmem>>, vector<4x8x32xf32>
    %68 = vector.shape_cast %67 : vector<4x8x32xf32> to vector<32x32xf32>
    %c2_64 = arith.constant 2 : index
    %c7_65 = arith.constant 7 : index
    %c0_66 = arith.constant 0 : index
    %69 = vector.load %arg10[%c2_64, %c7_65, %c0_66] : memref<6x17x32xf32, #tpu.memory_space<vmem>>, vector<4x8x32xf32>
    %70 = vector.shape_cast %69 : vector<4x8x32xf32> to vector<32x32xf32>
    %c2_67 = arith.constant 2 : index
    %c8_68 = arith.constant 8 : index
    %c0_69 = arith.constant 0 : index
    %71 = vector.load %arg10[%c2_67, %c8_68, %c0_69] : memref<6x17x32xf32, #tpu.memory_space<vmem>>, vector<4x8x32xf32>
    %72 = vector.shape_cast %71 : vector<4x8x32xf32> to vector<32x32xf32>
    %c2_70 = arith.constant 2 : index
    %c9_71 = arith.constant 9 : index
    %c0_72 = arith.constant 0 : index
    %73 = vector.load %arg10[%c2_70, %c9_71, %c0_72] : memref<6x17x32xf32, #tpu.memory_space<vmem>>, vector<4x8x32xf32>
    %74 = vector.shape_cast %73 : vector<4x8x32xf32> to vector<32x32xf32>
    %75 = tpu.concatenate %58, %60, %62, %64, %66, %68, %70, %72, %74 in 1 : vector<32x32xf32>, vector<32x32xf32>, vector<32x32xf32>, vector<32x32xf32>, vector<32x32xf32>, vector<32x32xf32>, vector<32x32xf32>, vector<32x32xf32>, vector<32x32xf32> -> vector<32x288xf32>
    %76 = arith.truncf %75 : vector<32x288xf32> to vector<32x288xbf16>
    %c0_73 = arith.constant 0 : index
    %c0_74 = arith.constant 0 : index
    %77 = vector.load %arg5[%c0_73, %c0_74] : memref<288x128xbf16, #tpu.memory_space<vmem>>, vector<288x128xbf16>
    %cst_75 = arith.constant dense<0.000000e+00> : vector<32x128xf32>
    %78 = tpu.matmul %76, %77, %cst_75 {dimension_numbers = #tpu.dot_dimension_numbers<[1], [0], [0], [1], [0, 0, 1, 1], [], []>} : vector<32x288xbf16>, vector<288x128xbf16>, vector<32x128xf32> -> vector<32x128xf32>
    %c0_76 = arith.constant 0 : index
    %c0_77 = arith.constant 0 : index
    %79 = vector.load %arg6[%c0_76, %c0_77] : memref<1x128xf32, #tpu.memory_space<vmem>>, vector<1x128xf32>
    %80 = vector.broadcast %79 : vector<1x128xf32> to vector<32x128xf32>
    %81 = arith.mulf %78, %80 : vector<32x128xf32>
    %c0_78 = arith.constant 0 : index
    %c0_79 = arith.constant 0 : index
    %82 = vector.load %arg7[%c0_78, %c0_79] : memref<1x128xf32, #tpu.memory_space<vmem>>, vector<1x128xf32>
    %83 = vector.broadcast %82 : vector<1x128xf32> to vector<32x128xf32>
    %84 = arith.addf %81, %83 : vector<32x128xf32>
    %85 = vector.extract_strided_slice %84 {offsets = [0, 20], sizes = [32, 1], strides = [1, 1]} : vector<32x128xf32> to vector<32x1xf32>
    %86 = vector.extract_strided_slice %84 {offsets = [0, 19], sizes = [32, 1], strides = [1, 1]} : vector<32x128xf32> to vector<32x1xf32>
    %87 = arith.subf %85, %86 : vector<32x1xf32>
    %88 = math.exp %87 : vector<32x1xf32>
    %cst_80 = arith.constant 1.000000e+00 : f32
    %89 = vector.broadcast %cst_80 : f32 to vector<32x1xf32>
    %90 = arith.addf %89, %88 : vector<32x1xf32>
    %cst_81 = arith.constant 1.000000e+00 : f32
    %91 = vector.broadcast %cst_81 : f32 to vector<32x1xf32>
    %92 = arith.divf %91, %90 : vector<32x1xf32>
    %cst_82 = arith.constant 1.000000e+00 : f32
    %93 = vector.broadcast %cst_82 : f32 to vector<32x1xf32>
    %94 = arith.subf %93, %92 : vector<32x1xf32>
    %95 = tpu.iota {dimensions = array<i32: 1>} : vector<32x128xi32>
    %c19_i32 = arith.constant 19 : i32
    %96 = vector.broadcast %c19_i32 : i32 to vector<32x128xi32>
    %97 = arith.cmpi slt, %95, %96 : vector<32x128xi32>
    %cst_83 = arith.constant 0.000000e+00 : f32
    %98 = vector.broadcast %cst_83 : f32 to vector<32x128xf32>
    %99 = arith.maximumf %84, %98 : vector<32x128xf32>
    %cst_84 = arith.constant 0.000000e+00 : f32
    %100 = vector.broadcast %cst_84 : f32 to vector<32x128xf32>
    %101 = arith.select %97, %99, %100 : vector<32x128xi1>, vector<32x128xf32>
    %c19_i32_85 = arith.constant 19 : i32
    %102 = vector.broadcast %c19_i32_85 : i32 to vector<32x128xi32>
    %103 = arith.cmpi eq, %95, %102 : vector<32x128xi32>
    %104 = vector.shape_cast %92 : vector<32x1xf32> to vector<32x1xf32>
    %105 = vector.broadcast %104 : vector<32x1xf32> to vector<32x128xf32>
    %106 = arith.select %103, %105, %101 : vector<32x128xi1>, vector<32x128xf32>
    %c20_i32 = arith.constant 20 : i32
    %107 = vector.broadcast %c20_i32 : i32 to vector<32x128xi32>
    %108 = arith.cmpi eq, %95, %107 : vector<32x128xi32>
    %109 = vector.shape_cast %94 : vector<32x1xf32> to vector<32x1xf32>
    %110 = vector.broadcast %109 : vector<32x1xf32> to vector<32x128xf32>
    %111 = arith.select %108, %110, %106 : vector<32x128xi1>, vector<32x128xf32>
    %112 = arith.truncf %111 : vector<32x128xf32> to vector<32x128xbf16>
    %c0_86 = arith.constant 0 : index
    %c0_87 = arith.constant 0 : index
    %c0_88 = arith.constant 0 : index
    %113 = vector.load %arg8[%c0_86, %c0_87, %c0_88] : memref<1x32x128xbf16, #tpu.memory_space<vmem>>, vector<1x32x128xbf16>
    %114 = vector.shape_cast %113 : vector<1x32x128xbf16> to vector<32x128xbf16>
    %115 = vector.shape_cast %112 : vector<32x128xbf16> to vector<1x32x128xbf16>
    tpu.vector_store %arg8[%c0_86, %c0_87, %c0_88], %115 {strides = array<i32>} : memref<1x32x128xbf16, #tpu.memory_space<vmem>>, vector<1x32x128xbf16>,
    return
  }
  func.func @transform_0(%arg0: i32) -> (i32, i32, i32) {
    %c0_i32 = arith.constant 0 : i32
    %c0_i32_0 = arith.constant 0 : i32
    %c0_i32_1 = arith.constant 0 : i32
    return %arg0, %c0_i32, %c0_i32_0 : i32, i32, i32
  }
  func.func @transform_1(%arg0: i32) -> (i32, i32) {
    %c0_i32 = arith.constant 0 : i32
    %c0_i32_0 = arith.constant 0 : i32
    %c0_i32_1 = arith.constant 0 : i32
    return %c0_i32, %c0_i32_0 : i32, i32
  }
  func.func @transform_2(%arg0: i32) -> (i32, i32) {
    %c0_i32 = arith.constant 0 : i32
    %c0_i32_0 = arith.constant 0 : i32
    %c0_i32_1 = arith.constant 0 : i32
    return %c0_i32, %c0_i32_0 : i32, i32
  }
  func.func @transform_3(%arg0: i32) -> (i32, i32) {
    %c0_i32 = arith.constant 0 : i32
    %c0_i32_0 = arith.constant 0 : i32
    %c0_i32_1 = arith.constant 0 : i32
    return %c0_i32, %c0_i32_0 : i32, i32
  }
  func.func @transform_4(%arg0: i32) -> (i32, i32) {
    %c0_i32 = arith.constant 0 : i32
    %c0_i32_0 = arith.constant 0 : i32
    %c0_i32_1 = arith.constant 0 : i32
    return %c0_i32, %c0_i32_0 : i32, i32
  }
  func.func @transform_5(%arg0: i32) -> (i32, i32) {
    %c0_i32 = arith.constant 0 : i32
    %c0_i32_0 = arith.constant 0 : i32
    %c0_i32_1 = arith.constant 0 : i32
    return %c0_i32, %c0_i32_0 : i32, i32
  }
  func.func @transform_6(%arg0: i32) -> (i32, i32) {
    %c0_i32 = arith.constant 0 : i32
    %c0_i32_0 = arith.constant 0 : i32
    %c0_i32_1 = arith.constant 0 : i32
    return %c0_i32, %c0_i32_0 : i32, i32
  }
  func.func @transform_7(%arg0: i32) -> (i32, i32, i32) {
    %c0_i32 = arith.constant 0 : i32
    %c0_i32_0 = arith.constant 0 : i32
    %c0_i32_1 = arith.constant 0 : i32
    return %arg0, %c0_i32, %c0_i32_0 : i32, i32, i32
  }
}

</mosaic_0001>

<llo_original>
// kernel: scnn_forward.1
$region0: #{scnn_forward.1}
  #allocation0 [shape = 'u32[]', space=smem, size = 0x4, offset = 0x4, fixed_abs, tag = 'smem constant byte address 0x4 - core index']
  #allocation1 [shape = 'u32[72,128]{1,0:T(1,128)}', space=vmem, size = 0x9000, scoped, tag = 'internal scratch']
  #allocation2 [shape = 'f32[6,17,384]{2,1,0:T(8,128)}', space=vmem, size = 0x36000, scoped, tag = 'scratch operand']
  #allocation3 [shape = 'f32[6,17,32]{2,1,0:T(8,128)}', space=vmem, size = 0x12000, scoped, tag = 'scratch operand']
  %s0 = inlined_call_operand.vmem [shape: bf16[2,32,2048], index: 0, kind: input, shape index: {}]
  %s1 = inlined_call_operand.vmem [shape: bf16[2048,384], index: 1, kind: input, shape index: {}]
  %s2 = inlined_call_operand.vmem [shape: f32[1,32], index: 2, kind: input, shape index: {}]
  %s3 = inlined_call_operand.vmem [shape: f32[1,32], index: 3, kind: input, shape index: {}]
  %s4 = inlined_call_operand.vmem [shape: bf16[288,128], index: 4, kind: input, shape index: {}]
  %s5 = inlined_call_operand.vmem [shape: f32[1,128], index: 5, kind: input, shape index: {}]
  %s6 = inlined_call_operand.vmem [shape: f32[1,128], index: 6, kind: input, shape index: {}]
  %s7 = inlined_call_operand.vmem [shape: bf16[2,32,128], index: 7, kind: output, shape index: {}]
  %s8 = sld [smem:[#allocation0]]
  $region61: #{scnn_forward.1} parent=0
    _
  %s10 = ssub.s32 1, %s8
  %s11 = scalar_select 0, %s10, %s8
  loop: start=0, step=1, limit=4
  $region2: #{scnn_forward.1} parent=0 // loop_pre_header
    _
  $region3: #{scnn_forward.1} parent=0 // loop_header
    %s13 = sphi 0, %s17
    %p14 = scmp.ge.s32.totalorder %s13, 4
    %s23 = sphi 0, %s25
    %s26 = sphi 0, %s23
    %s27 = sphi 0, %s26
    %s43 = sphi 0, %s27
    %s47 = sphi 0, %s47
    %s49 = sphi 0, %s47
    %s50 = sphi 0, %s49
    %s64 = sphi 0, %s50
    %s68 = sphi 0, %s68
    %s70 = sphi 0, %s68
    %s71 = sphi 0, %s70
    %s85 = sphi 0, %s71
    %s89 = sphi 0, %s89
    %s91 = sphi 0, %s89
    %s92 = sphi 0, %s91
    %s106 = sphi 0, %s92
    %s110 = sphi 0, %s110
    %s112 = sphi 0, %s110
    %s113 = sphi 0, %s112
    %s127 = sphi 0, %s113
    %s131 = sphi 0, %s131
    %s133 = sphi 0, %s131
    %s134 = sphi 0, %s133
    %s148 = sphi 0, %s134
    %s152 = sphi 0, %s152
    %s154 = sphi 0, %s152
    %s155 = sphi 0, %s154
    %s169 = sphi 0, %s155
    %s175 = sphi 0, %s177
    %s178 = sphi 0, %s175
    %s179 = sphi 0, %s178
    %s195 = sphi 0, %s179
  $region4: #{scnn_forward.1} parent=0 // loop_header_branch
    %16 = sbr.rel (%p14) target = $region8
  $region5: #{scnn_forward.1} parent=0 // loop_body
    %s18 = ssub.s32 %s13, 1
    %s19 = ssub.s32 %s13, 2
    %s20 = sadd.s32 %s13, 1
    %s21 = ssub.s32 %s13, %s20
    %p22 = scmp.eq.s32.totalorder %s21, 0
    %s24 = sadd.s32 %s23, 1
    %s25 = scalar_select %p22, %s23, %s24
    %p28 = pneg %p22
    %p29 = scmp.eq.s32.totalorder %s13, 1
    %p30 = por %p28, %p29
    %p31 = scmp.ne.s32.totalorder %s23, %s26
    %p32 = scmp.eq.s32.totalorder %s13, 0
    %p33 = por %p31, %p32
    %p34 = scmp.ne.s32.totalorder %s23, %s26
    %p35 = scmp.eq.s32.totalorder %s18, 1
    %p36 = por %p34, %p35
    %p37 = scmp.ne.s32.totalorder %s26, %s27
    %p38 = scmp.eq.s32.totalorder %s18, 0
    %p39 = por %p37, %p38
    %p40 = scmp.ne.s32.totalorder %s26, %s27
    %p41 = scmp.eq.s32.totalorder %s19, 1
    %p42 = por %p40, %p41
    %p44 = scmp.ne.s32.totalorder %s27, %s43
    %p45 = scmp.eq.s32.totalorder %s19, 0
    %p46 = por %p44, %p45
    %s48 = sadd.s32 %s47, 1
    %p51 = scmp.eq.s32.totalorder %s13, 1
    %p52 = scmp.ne.s32.totalorder %s47, %s49
    %p53 = scmp.eq.s32.totalorder %s13, 0
    %p54 = por %p52, %p53
    %p55 = scmp.ne.s32.totalorder %s47, %s49
    %p56 = scmp.eq.s32.totalorder %s18, 1
    %p57 = por %p55, %p56
    %p58 = scmp.ne.s32.totalorder %s49, %s50
    %p59 = scmp.eq.s32.totalorder %s18, 0
    %p60 = por %p58, %p59
    %p61 = scmp.ne.s32.totalorder %s49, %s50
    %p62 = scmp.eq.s32.totalorder %s19, 1
    %p63 = por %p61, %p62
    %p65 = scmp.ne.s32.totalorder %s50, %s64
    %p66 = scmp.eq.s32.totalorder %s19, 0
    %p67 = por %p65, %p66
    %s69 = sadd.s32 %s68, 1
    %p72 = scmp.eq.s32.totalorder %s13, 1
    %p73 = scmp.ne.s32.totalorder %s68, %s70
    %p74 = scmp.eq.s32.totalorder %s13, 0
    %p75 = por %p73, %p74
    %p76 = scmp.ne.s32.totalorder %s68, %s70
    %p77 = scmp.eq.s32.totalorder %s18, 1
    %p78 = por %p76, %p77
    %p79 = scmp.ne.s32.totalorder %s70, %s71
    %p80 = scmp.eq.s32.totalorder %s18, 0
    %p81 = por %p79, %p80
    %p82 = scmp.ne.s32.totalorder %s70, %s71
    %p83 = scmp.eq.s32.totalorder %s19, 1
    %p84 = por %p82, %p83
    %p86 = scmp.ne.s32.totalorder %s71, %s85
    %p87 = scmp.eq.s32.totalorder %s19, 0
    %p88 = por %p86, %p87
    %s90 = sadd.s32 %s89, 1
    %p93 = scmp.eq.s32.totalorder %s13, 1
    %p94 = scmp.ne.s32.totalorder %s89, %s91
    %p95 = scmp.eq.s32.totalorder %s13, 0
    %p96 = por %p94, %p95
    %p97 = scmp.ne.s32.totalorder %s89, %s91
    %p98 = scmp.eq.s32.totalorder %s18, 1
    %p99 = por %p97, %p98
    %p100 = scmp.ne.s32.totalorder %s91, %s92
    %p101 = scmp.eq.s32.totalorder %s18, 0
    %p102 = por %p100, %p101
    %p103 = scmp.ne.s32.totalorder %s91, %s92
    %p104 = scmp.eq.s32.totalorder %s19, 1
    %p105 = por %p103, %p104
    %p107 = scmp.ne.s32.totalorder %s92, %s106
    %p108 = scmp.eq.s32.totalorder %s19, 0
    %p109 = por %p107, %p108
    %s111 = sadd.s32 %s110, 1
    %p114 = scmp.eq.s32.totalorder %s13, 1
    %p115 = scmp.ne.s32.totalorder %s110, %s112
    %p116 = scmp.eq.s32.totalorder %s13, 0
    %p117 = por %p115, %p116
    %p118 = scmp.ne.s32.totalorder %s110, %s112
    %p119 = scmp.eq.s32.totalorder %s18, 1
    %p120 = por %p118, %p119
    %p121 = scmp.ne.s32.totalorder %s112, %s113
    %p122 = scmp.eq.s32.totalorder %s18, 0
    %p123 = por %p121, %p122
    %p124 = scmp.ne.s32.totalorder %s112, %s113
    %p125 = scmp.eq.s32.totalorder %s19, 1
    %p126 = por %p124, %p125
    %p128 = scmp.ne.s32.totalorder %s113, %s127
    %p129 = scmp.eq.s32.totalorder %s19, 0
    %p130 = por %p128, %p129
    %s132 = sadd.s32 %s131, 1
    %p135 = scmp.eq.s32.totalorder %s13, 1
    %p136 = scmp.ne.s32.totalorder %s131, %s133
    %p137 = scmp.eq.s32.totalorder %s13, 0
    %p138 = por %p136, %p137
    %p139 = scmp.ne.s32.totalorder %s131, %s133
    %p140 = scmp.eq.s32.totalorder %s18, 1
    %p141 = por %p139, %p140
    %p142 = scmp.ne.s32.totalorder %s133, %s134
    %p143 = scmp.eq.s32.totalorder %s18, 0
    %p144 = por %p142, %p143
    %p145 = scmp.ne.s32.totalorder %s133, %s134
    %p146 = scmp.eq.s32.totalorder %s19, 1
    %p147 = por %p145, %p146
    %p149 = scmp.ne.s32.totalorder %s134, %s148
    %p150 = scmp.eq.s32.totalorder %s19, 0
    %p151 = por %p149, %p150
    %s153 = sadd.s32 %s152, 1
    %p156 = scmp.eq.s32.totalorder %s13, 1
    %p157 = scmp.ne.s32.totalorder %s152, %s154
    %p158 = scmp.eq.s32.totalorder %s13, 0
    %p159 = por %p157, %p158
    %p160 = scmp.ne.s32.totalorder %s152, %s154
    %p161 = scmp.eq.s32.totalorder %s18, 1
    %p162 = por %p160, %p161
    %p163 = scmp.ne.s32.totalorder %s154, %s155
    %p164 = scmp.eq.s32.totalorder %s18, 0
    %p165 = por %p163, %p164
    %p166 = scmp.ne.s32.totalorder %s154, %s155
    %p167 = scmp.eq.s32.totalorder %s19, 1
    %p168 = por %p166, %p167
    %p170 = scmp.ne.s32.totalorder %s155, %s169
    %p171 = scmp.eq.s32.totalorder %s19, 0
    %p172 = por %p170, %p171
    %s173 = ssub.s32 %s13, %s20
    %p174 = scmp.eq.s32.totalorder %s173, 0
    %s176 = sadd.s32 %s175, 1
    %s177 = scalar_select %p174, %s175, %s176
    %p180 = pneg %p174
    %p181 = scmp.eq.s32.totalorder %s13, 1
    %p182 = por %p180, %p181
    %p183 = scmp.ne.s32.totalorder %s175, %s178
    %p184 = scmp.eq.s32.totalorder %s13, 0
    %p185 = por %p183, %p184
    %p186 = scmp.ne.s32.totalorder %s175, %s178
    %p187 = scmp.eq.s32.totalorder %s18, 1
    %p188 = por %p186, %p187
    %p189 = scmp.ne.s32.totalorder %s178, %s179
    %p190 = scmp.eq.s32.totalorder %s18, 0
    %p191 = por %p189, %p190
    %p192 = scmp.ne.s32.totalorder %s178, %s179
    %p193 = scmp.eq.s32.totalorder %s19, 1
    %p194 = por %p192, %p193
    %p196 = scmp.ne.s32.totalorder %s179, %s195
    %p197 = scmp.eq.s32.totalorder %s19, 0
    %p198 = por %p196, %p197
    %p199 = scmp.le.s32.totalorder 1, %s13
    %p200 = scmp.lt.s32.totalorder %s13, 3
    %p201 = pnand %p199, %p200
    %p202 = pneg %p201
    // Predicated region
    $region9: #{scnn_forward.1} parent=5 // pred_check
      _
    $region10: #{scnn_forward.1} parent=5 // pred_check_branch
      %204 = sbr.rel (%p201) target = $region12
    $region11: #{scnn_forward.1} parent=5 // pred_region
      %s205 = ssub.s32 %s13, 1
      // Predicated region
      $region13: #{scnn_forward.1} parent=11 // pred_check
        %p206 = pneg %p60
      $region14: #{scnn_forward.1} parent=11 // pred_check_branch
        %208 = sbr.rel (%p206) target = $region16
      $region15: #{scnn_forward.1} parent=11 // pred_region
        _
      $region16: #{scnn_forward.1} parent=11 // pred_fallthru
        _
      // Predicated region
      $region17: #{scnn_forward.1} parent=11 // pred_check
        %p209 = pneg %p81
      $region18: #{scnn_forward.1} parent=11 // pred_check_branch
        %211 = sbr.rel (%p209) target = $region20
      $region19: #{scnn_forward.1} parent=11 // pred_region
        _
      $region20: #{scnn_forward.1} parent=11 // pred_fallthru
        _
      // Predicated region
      $region21: #{scnn_forward.1} parent=11 // pred_check
        %p212 = pneg %p102
      $region22: #{scnn_forward.1} parent=11 // pred_check_branch
        %214 = sbr.rel (%p212) target = $region24
      $region23: #{scnn_forward.1} parent=11 // pred_region
        _
      $region24: #{scnn_forward.1} parent=11 // pred_fallthru
        _
      // Predicated region
      $region25: #{scnn_forward.1} parent=11 // pred_check
        %p215 = pneg %p123
      $region26: #{scnn_forward.1} parent=11 // pred_check_branch
        %217 = sbr.rel (%p215) target = $region28
      $region27: #{scnn_forward.1} parent=11 // pred_region
        _
      $region28: #{scnn_forward.1} parent=11 // pred_fallthru
        _
      // Predicated region
      $region29: #{scnn_forward.1} parent=11 // pred_check
        %p218 = pneg %p144
      $region30: #{scnn_forward.1} parent=11 // pred_check_branch
        %220 = sbr.rel (%p218) target = $region32
      $region31: #{scnn_forward.1} parent=11 // pred_region
        _
      $region32: #{scnn_forward.1} parent=11 // pred_fallthru
        _
      // Predicated region
      $region33: #{scnn_forward.1} parent=11 // pred_check
        %p221 = pneg %p165
      $region34: #{scnn_forward.1} parent=11 // pred_check_branch
        %223 = sbr.rel (%p221) target = $region36
      $region35: #{scnn_forward.1} parent=11 // pred_region
        _
      $region36: #{scnn_forward.1} parent=11 // pred_fallthru
        _
    $region12: #{scnn_forward.1} parent=5 // pred_fallthru
      _
    %p224 = scmp.lt.s32.totalorder %s13, 2
    // Predicated region
    $region37: #{scnn_forward.1} parent=5 // pred_check
      %p225 = pneg %p224
    $region38: #{scnn_forward.1} parent=5 // pred_check_branch
      %227 = sbr.rel (%p225) target = $region40
    $region39: #{scnn_forward.1} parent=5 // pred_region
      // Predicated region
      $region41: #{scnn_forward.1} parent=39 // pred_check
        %p228 = pneg %p33
      $region42: #{scnn_forward.1} parent=39 // pred_check_branch
        %230 = sbr.rel (%p228) target = $region44
      $region43: #{scnn_forward.1} parent=39 // pred_region
        %p231 = scmp.lt.s32.totalorder %s13, 1
        %s232 = scalar_select %p231, %s13, 1
        %s233 = smul.addr %s232, 64
        %s234 = smul.addr %s233, 4
        %s235 = scalar_lea.vmem %s0, %s234
      $region44: #{scnn_forward.1} parent=39 // pred_fallthru
        _
    $region40: #{scnn_forward.1} parent=5 // pred_fallthru
      _
    %p236 = scmp.le.s32.totalorder 1, %s13
    %p237 = scmp.lt.s32.totalorder %s13, 3
    %p238 = pnand %p236, %p237
    %p239 = pneg %p238
    // Predicated region
    $region45: #{scnn_forward.1} parent=5 // pred_check
      _
    $region46: #{scnn_forward.1} parent=5 // pred_check_branch
      %241 = sbr.rel (%p238) target = $region48
    $region47: #{scnn_forward.1} parent=5 // pred_region
      %s242 = ssub.s32 %s13, 1
      %p243 = scmp.lt.s32.totalorder %s18, 1
      %s244 = scalar_select %p243, %s18, 1
      %s245 = smul.addr %s244, 64
      %s246 = smul.addr %s245, 4
      %s247 = scalar_lea.vmem %s0, %s246
      %p248 = pneg %p39
      %p249 = pneg %p36
      %p250 = pneg %p60
      %p251 = pneg %p57
      %p252 = pneg %p81
      %p253 = pneg %p78
      %p254 = pneg %p102
      %p255 = pneg %p99
      %p256 = pneg %p123
      %p257 = pneg %p120
      %p258 = pneg %p144
      %p259 = pneg %p141
      %p260 = pneg %p165
      %p261 = pneg %p162
      %p262 = pneg %p191
      %p263 = pneg %p188
      %p264 = scmp.lt.s32.totalorder %s18, 1
      %s265 = scalar_select %p264, %s18, 1
      %s266 = smul.addr %s265, 4
      %s267 = smul.addr %s266, 4
      %s268 = scalar_lea.vmem %s7, %s267
      %p269 = scmp.lt.s32.totalorder %s18, 1
      %s270 = scalar_select %p269, %s18, 1
      %s271 = smul.addr %s270, 64
      %s272 = smul.addr %s271, 4
      %s273 = scalar_lea.vmem %s0, %s272
      %p274 = scmp.lt.s32.totalorder %s18, 1
      %s275 = scalar_select %p274, %s18, 1
      %s276 = smul.addr %s275, 4
      %s277 = smul.addr %s276, 4
      %s278 = scalar_lea.vmem %s7, %s277
      %v280 = vld [vmem:[%s273] sm:$0xff]
      %v281 = vld [vmem:[%s273 + $0x8] sm:$0xff]
      %v282 = vld [vmem:[%s273 + $0x10] sm:$0xff]
      %v283 = vld [vmem:[%s273 + $0x18] sm:$0xff]
      %v284 = vld [vmem:[%s273 + $0x20] sm:$0xff]
      %v285 = vld [vmem:[%s273 + $0x28] sm:$0xff]
      %v286 = vld [vmem:[%s273 + $0x30] sm:$0xff]
      %v287 = vld [vmem:[%s273 + $0x38] sm:$0xff]
      %v288 = vld [vmem:[%s273 + $0x40] sm:$0xff]
      %v289 = vld [vmem:[%s273 + $0x48] sm:$0xff]
      %v290 = vld [vmem:[%s273 + $0x50] sm:$0xff]
      %v291 = vld [vmem:[%s273 + $0x58] sm:$0xff]
      %v292 = vld [vmem:[%s273 + $0x60] sm:$0xff]
      %v293 = vld [vmem:[%s273 + $0x68] sm:$0xff]
      %v294 = vld [vmem:[%s273 + $0x70] sm:$0xff]
      %v295 = vld [vmem:[%s273 + $0x78] sm:$0xff]
      %v296 = vld [vmem:[%s273 + $0x80] sm:$0xff]
      %v297 = vld [vmem:[%s273 + $0x88] sm:$0xff]
      %v298 = vld [vmem:[%s273 + $0x90] sm:$0xff]
      %v299 = vld [vmem:[%s273 + $0x98] sm:$0xff]
      %v300 = vld [vmem:[%s273 + $0xa0] sm:$0xff]
      %v301 = vld [vmem:[%s273 + $0xa8] sm:$0xff]
      %v302 = vld [vmem:[%s273 + $0xb0] sm:$0xff]
      %v303 = vld [vmem:[%s273 + $0xb8] sm:$0xff]
      %v304 = vld [vmem:[%s273 + $0xc0] sm:$0xff]
      %v305 = vld [vmem:[%s273 + $0xc8] sm:$0xff]
      %v306 = vld [vmem:[%s273 + $0xd0] sm:$0xff]
      %v307 = vld [vmem:[%s273 + $0xd8] sm:$0xff]
      %v308 = vld [vmem:[%s273 + $0xe0] sm:$0xff]
      %v309 = vld [vmem:[%s273 + $0xe8] sm:$0xff]
      %v310 = vld [vmem:[%s273 + $0xf0] sm:$0xff]
      %v311 = vld [vmem:[%s273 + $0xf8] sm:$0xff]
      %v312 = vld [vmem:[%s1] sm:$0xff]
      %v313 = vld [vmem:[%s1 + $0x8] sm:$0xf]
      %v314 = vld [vmem:[%s1 + $0xc] sm:$0xff]
      %v315 = vld [vmem:[%s1 + $0x14] sm:$0xf]
      %v316 = vld [vmem:[%s1 + $0x18] sm:$0xff]
      %v317 = vld [vmem:[%s1 + $0x20] sm:$0xf]
      %v318 = vld [vmem:[%s1 + $0x24] sm:$0xff]
      %v319 = vld [vmem:[%s1 + $0x2c] sm:$0xf]
      %v320 = vld [vmem:[%s1 + $0x30] sm:$0xff]
      %v321 = vld [vmem:[%s1 + $0x38] sm:$0xf]
      %v322 = vld [vmem:[%s1 + $0x3c] sm:$0xff]
      %v323 = vld [vmem:[%s1 + $0x44] sm:$0xf]
      %v324 = vld [vmem:[%s1 + $0x48] sm:$0xff]
      %v325 = vld [vmem:[%s1 + $0x50] sm:$0xf]
      %v326 = vld [vmem:[%s1 + $0x54] sm:$0xff]
      %v327 = vld [vmem:[%s1 + $0x5c] sm:$0xf]
      %v328 = vld [vmem:[%s1 + $0x60] sm:$0xff]
      %v329 = vld [vmem:[%s1 + $0x68] sm:$0xf]
      %v330 = vld [vmem:[%s1 + $0x6c] sm:$0xff]
      %v331 = vld [vmem:[%s1 + $0x74] sm:$0xf]
      %v332 = vld [vmem:[%s1 + $0x78] sm:$0xff]
      %v333 = vld [vmem:[%s1 + $0x80] sm:$0xf]
      %v334 = vld [vmem:[%s1 + $0x84] sm:$0xff]
      %v335 = vld [vmem:[%s1 + $0x8c] sm:$0xf]
      %v336 = vld [vmem:[%s1 + $0x90] sm:$0xff]
      %v337 = vld [vmem:[%s1 + $0x98] sm:$0xf]
      %v338 = vld [vmem:[%s1 + $0x9c] sm:$0xff]
      %v339 = vld [vmem:[%s1 + $0xa4] sm:$0xf]
      %v340 = vld [vmem:[%s1 + $0xa8] sm:$0xff]
      %v341 = vld [vmem:[%s1 + $0xb0] sm:$0xf]
      %v342 = vld [vmem:[%s1 + $0xb4] sm:$0xff]
      %v343 = vld [vmem:[%s1 + $0xbc] sm:$0xf]
      %v344 = vld [vmem:[%s1 + $0xc0] sm:$0xff]
      %v345 = vld [vmem:[%s1 + $0xc8] sm:$0xf]
      %v346 = vld [vmem:[%s1 + $0xcc] sm:$0xff]
      %v347 = vld [vmem:[%s1 + $0xd4] sm:$0xf]
      %v348 = vld [vmem:[%s1 + $0xd8] sm:$0xff]
      %v349 = vld [vmem:[%s1 + $0xe0] sm:$0xf]
      %v350 = vld [vmem:[%s1 + $0xe4] sm:$0xff]
      %v351 = vld [vmem:[%s1 + $0xec] sm:$0xf]
      %v352 = vld [vmem:[%s1 + $0xf0] sm:$0xff]
      %v353 = vld [vmem:[%s1 + $0xf8] sm:$0xf]
      %v354 = vld [vmem:[%s1 + $0xfc] sm:$0xff]
      %v355 = vld [vmem:[%s1 + $0x104] sm:$0xf]
      %v356 = vld [vmem:[%s1 + $0x108] sm:$0xff]
      %v357 = vld [vmem:[%s1 + $0x110] sm:$0xf]
      %v358 = vld [vmem:[%s1 + $0x114] sm:$0xff]
      %v359 = vld [vmem:[%s1 + $0x11c] sm:$0xf]
      %v360 = vld [vmem:[%s1 + $0x120] sm:$0xff]
      %v361 = vld [vmem:[%s1 + $0x128] sm:$0xf]
      %v362 = vld [vmem:[%s1 + $0x12c] sm:$0xff]
      %v363 = vld [vmem:[%s1 + $0x134] sm:$0xf]
      %v364 = vld [vmem:[%s1 + $0x138] sm:$0xff]
      %v365 = vld [vmem:[%s1 + $0x140] sm:$0xf]
      %v366 = vld [vmem:[%s1 + $0x144] sm:$0xff]
      %v367 = vld [vmem:[%s1 + $0x14c] sm:$0xf]
      %v368 = vld [vmem:[%s1 + $0x150] sm:$0xff]
      %v369 = vld [vmem:[%s1 + $0x158] sm:$0xf]
      %v370 = vld [vmem:[%s1 + $0x15c] sm:$0xff]
      %v371 = vld [vmem:[%s1 + $0x164] sm:$0xf]
      %v372 = vld [vmem:[%s1 + $0x168] sm:$0xff]
      %v373 = vld [vmem:[%s1 + $0x170] sm:$0xf]
      %v374 = vld [vmem:[%s1 + $0x174] sm:$0xff]
      %v375 = vld [vmem:[%s1 + $0x17c] sm:$0xf]
      %v376 = vld [vmem:[%s1 + $0x180] sm:$0xff]
      %v377 = vld [vmem:[%s1 + $0x188] sm:$0xf]
      %v378 = vld [vmem:[%s1 + $0x18c] sm:$0xff]
      %v379 = vld [vmem:[%s1 + $0x194] sm:$0xf]
      %v380 = vld [vmem:[%s1 + $0x198] sm:$0xff]
      %v381 = vld [vmem:[%s1 + $0x1a0] sm:$0xf]
      %v382 = vld [vmem:[%s1 + $0x1a4] sm:$0xff]
      %v383 = vld [vmem:[%s1 + $0x1ac] sm:$0xf]
      %v384 = vld [vmem:[%s1 + $0x1b0] sm:$0xff]
      %v385 = vld [vmem:[%s1 + $0x1b8] sm:$0xf]
      %v386 = vld [vmem:[%s1 + $0x1bc] sm:$0xff]
      %v387 = vld [vmem:[%s1 + $0x1c4] sm:$0xf]
      %v388 = vld [vmem:[%s1 + $0x1c8] sm:$0xff]
      %v389 = vld [vmem:[%s1 + $0x1d0] sm:$0xf]
      %v390 = vld [vmem:[%s1 + $0x1d4] sm:$0xff]
      %v391 = vld [vmem:[%s1 + $0x1dc] sm:$0xf]
      %v392 = vld [vmem:[%s1 + $0x1e0] sm:$0xff]
      %v393 = vld [vmem:[%s1 + $0x1e8] sm:$0xf]
      %v394 = vld [vmem:[%s1 + $0x1ec] sm:$0xff]
      %v395 = vld [vmem:[%s1 + $0x1f4] sm:$0xf]
      %v396 = vld [vmem:[%s1 + $0x1f8] sm:$0xff]
      %v397 = vld [vmem:[%s1 + $0x200] sm:$0xf]
      %v398 = vld [vmem:[%s1 + $0x204] sm:$0xff]
      %v399 = vld [vmem:[%s1 + $0x20c] sm:$0xf]
      %v400 = vld [vmem:[%s1 + $0x210] sm:$0xff]
      %v401 = vld [vmem:[%s1 + $0x218] sm:$0xf]
      %v402 = vld [vmem:[%s1 + $0x21c] sm:$0xff]
      %v403 = vld [vmem:[%s1 + $0x224] sm:$0xf]
      %v404 = vld [vmem:[%s1 + $0x228] sm:$0xff]
      %v405 = vld [vmem:[%s1 + $0x230] sm:$0xf]
      %v406 = vld [vmem:[%s1 + $0x234] sm:$0xff]
      %v407 = vld [vmem:[%s1 + $0x23c] sm:$0xf]
      %v408 = vld [vmem:[%s1 + $0x240] sm:$0xff]
      %v409 = vld [vmem:[%s1 + $0x248] sm:$0xf]
      %v410 = vld [vmem:[%s1 + $0x24c] sm:$0xff]
      %v411 = vld [vmem:[%s1 + $0x254] sm:$0xf]
      %v412 = vld [vmem:[%s1 + $0x258] sm:$0xff]
      %v413 = vld [vmem:[%s1 + $0x260] sm:$0xf]
      %v414 = vld [vmem:[%s1 + $0x264] sm:$0xff]
      %v415 = vld [vmem:[%s1 + $0x26c] sm:$0xf]
      %v416 = vld [vmem:[%s1 + $0x270] sm:$0xff]
      %v417 = vld [vmem:[%s1 + $0x278] sm:$0xf]
      %v418 = vld [vmem:[%s1 + $0x27c] sm:$0xff]
      %v419 = vld [vmem:[%s1 + $0x284] sm:$0xf]
      %v420 = vld [vmem:[%s1 + $0x288] sm:$0xff]
      %v421 = vld [vmem:[%s1 + $0x290] sm:$0xf]
      %v422 = vld [vmem:[%s1 + $0x294] sm:$0xff]
      %v423 = vld [vmem:[%s1 + $0x29c] sm:$0xf]
      %v424 = vld [vmem:[%s1 + $0x2a0] sm:$0xff]
      %v425 = vld [vmem:[%s1 + $0x2a8] sm:$0xf]
      %v426 = vld [vmem:[%s1 + $0x2ac] sm:$0xff]
      %v427 = vld [vmem:[%s1 + $0x2b4] sm:$0xf]
      %v428 = vld [vmem:[%s1 + $0x2b8] sm:$0xff]
      %v429 = vld [vmem:[%s1 + $0x2c0] sm:$0xf]
      %v430 = vld [vmem:[%s1 + $0x2c4] sm:$0xff]
      %v431 = vld [vmem:[%s1 + $0x2cc] sm:$0xf]
      %v432 = vld [vmem:[%s1 + $0x2d0] sm:$0xff]
      %v433 = vld [vmem:[%s1 + $0x2d8] sm:$0xf]
      %v434 = vld [vmem:[%s1 + $0x2dc] sm:$0xff]
      %v435 = vld [vmem:[%s1 + $0x2e4] sm:$0xf]
      %v436 = vld [vmem:[%s1 + $0x2e8] sm:$0xff]
      %v437 = vld [vmem:[%s1 + $0x2f0] sm:$0xf]
      %v438 = vld [vmem:[%s1 + $0x2f4] sm:$0xff]
      %v439 = vld [vmem:[%s1 + $0x2fc] sm:$0xf]
      %v440 = vld [vmem:[%s1 + $0x300] sm:$0xff]
      %v441 = vld [vmem:[%s1 + $0x308] sm:$0xf]
      %v442 = vld [vmem:[%s1 + $0x30c] sm:$0xff]
      %v443 = vld [vmem:[%s1 + $0x314] sm:$0xf]
      %v444 = vld [vmem:[%s1 + $0x318] sm:$0xff]
      %v445 = vld [vmem:[%s1 + $0x320] sm:$0xf]
      %v446 = vld [vmem:[%s1 + $0x324] sm:$0xff]
      %v447 = vld [vmem:[%s1 + $0x32c] sm:$0xf]
      %v448 = vld [vmem:[%s1 + $0x330] sm:$0xff]
      %v449 = vld [vmem:[%s1 + $0x338] sm:$0xf]
      %v450 = vld [vmem:[%s1 + $0x33c] sm:$0xff]
      %v451 = vld [vmem:[%s1 + $0x344] sm:$0xf]
      %v452 = vld [vmem:[%s1 + $0x348] sm:$0xff]
      %v453 = vld [vmem:[%s1 + $0x350] sm:$0xf]
      %v454 = vld [vmem:[%s1 + $0x354] sm:$0xff]
      %v455 = vld [vmem:[%s1 + $0x35c] sm:$0xf]
      %v456 = vld [vmem:[%s1 + $0x360] sm:$0xff]
      %v457 = vld [vmem:[%s1 + $0x368] sm:$0xf]
      %v458 = vld [vmem:[%s1 + $0x36c] sm:$0xff]
      %v459 = vld [vmem:[%s1 + $0x374] sm:$0xf]
      %v460 = vld [vmem:[%s1 + $0x378] sm:$0xff]
      %v461 = vld [vmem:[%s1 + $0x380] sm:$0xf]
      %v462 = vld [vmem:[%s1 + $0x384] sm:$0xff]
      %v463 = vld [vmem:[%s1 + $0x38c] sm:$0xf]
      %v464 = vld [vmem:[%s1 + $0x390] sm:$0xff]
      %v465 = vld [vmem:[%s1 + $0x398] sm:$0xf]
      %v466 = vld [vmem:[%s1 + $0x39c] sm:$0xff]
      %v467 = vld [vmem:[%s1 + $0x3a4] sm:$0xf]
      %v468 = vld [vmem:[%s1 + $0x3a8] sm:$0xff]
      %v469 = vld [vmem:[%s1 + $0x3b0] sm:$0xf]
      %v470 = vld [vmem:[%s1 + $0x3b4] sm:$0xff]
      %v471 = vld [vmem:[%s1 + $0x3bc] sm:$0xf]
      %v472 = vld [vmem:[%s1 + $0x3c0] sm:$0xff]
      %v473 = vld [vmem:[%s1 + $0x3c8] sm:$0xf]
      %v474 = vld [vmem:[%s1 + $0x3cc] sm:$0xff]
      %v475 = vld [vmem:[%s1 + $0x3d4] sm:$0xf]
      %v476 = vld [vmem:[%s1 + $0x3d8] sm:$0xff]
      %v477 = vld [vmem:[%s1 + $0x3e0] sm:$0xf]
      %v478 = vld [vmem:[%s1 + $0x3e4] sm:$0xff]
      %v479 = vld [vmem:[%s1 + $0x3ec] sm:$0xf]
      %v480 = vld [vmem:[%s1 + $0x3f0] sm:$0xff]
      %v481 = vld [vmem:[%s1 + $0x3f8] sm:$0xf]
      %v482 = vld [vmem:[%s1 + $0x3fc] sm:$0xff]
      %v483 = vld [vmem:[%s1 + $0x404] sm:$0xf]
      %v484 = vld [vmem:[%s1 + $0x408] sm:$0xff]
      %v485 = vld [vmem:[%s1 + $0x410] sm:$0xf]
      %v486 = vld [vmem:[%s1 + $0x414] sm:$0xff]
      %v487 = vld [vmem:[%s1 + $0x41c] sm:$0xf]
      %v488 = vld [vmem:[%s1 + $0x420] sm:$0xff]
      %v489 = vld [vmem:[%s1 + $0x428] sm:$0xf]
      %v490 = vld [vmem:[%s1 + $0x42c] sm:$0xff]
      %v491 = vld [vmem:[%s1 + $0x434] sm:$0xf]
      %v492 = vld [vmem:[%s1 + $0x438] sm:$0xff]
      %v493 = vld [vmem:[%s1 + $0x440] sm:$0xf]
      %v494 = vld [vmem:[%s1 + $0x444] sm:$0xff]
      %v495 = vld [vmem:[%s1 + $0x44c] sm:$0xf]
      %v496 = vld [vmem:[%s1 + $0x450] sm:$0xff]
      %v497 = vld [vmem:[%s1 + $0x458] sm:$0xf]
      %v498 = vld [vmem:[%s1 + $0x45c] sm:$0xff]
      %v499 = vld [vmem:[%s1 + $0x464] sm:$0xf]
      %v500 = vld [vmem:[%s1 + $0x468] sm:$0xff]
      %v501 = vld [vmem:[%s1 + $0x470] sm:$0xf]
      %v502 = vld [vmem:[%s1 + $0x474] sm:$0xff]
      %v503 = vld [vmem:[%s1 + $0x47c] sm:$0xf]
      %v504 = vld [vmem:[%s1 + $0x480] sm:$0xff]
      %v505 = vld [vmem:[%s1 + $0x488] sm:$0xf]
      %v506 = vld [vmem:[%s1 + $0x48c] sm:$0xff]
      %v507 = vld [vmem:[%s1 + $0x494] sm:$0xf]
      %v508 = vld [vmem:[%s1 + $0x498] sm:$0xff]
      %v509 = vld [vmem:[%s1 + $0x4a0] sm:$0xf]
      %v510 = vld [vmem:[%s1 + $0x4a4] sm:$0xff]
      %v511 = vld [vmem:[%s1 + $0x4ac] sm:$0xf]
      %v512 = vld [vmem:[%s1 + $0x4b0] sm:$0xff]
      %v513 = vld [vmem:[%s1 + $0x4b8] sm:$0xf]
      %v514 = vld [vmem:[%s1 + $0x4bc] sm:$0xff]
      %v515 = vld [vmem:[%s1 + $0x4c4] sm:$0xf]
      %v516 = vld [vmem:[%s1 + $0x4c8] sm:$0xff]
      %v517 = vld [vmem:[%s1 + $0x4d0] sm:$0xf]
      %v518 = vld [vmem:[%s1 + $0x4d4] sm:$0xff]
      %v519 = vld [vmem:[%s1 + $0x4dc] sm:$0xf]
      %v520 = vld [vmem:[%s1 + $0x4e0] sm:$0xff]
      %v521 = vld [vmem:[%s1 + $0x4e8] sm:$0xf]
      %v522 = vld [vmem:[%s1 + $0x4ec] sm:$0xff]
      %v523 = vld [vmem:[%s1 + $0x4f4] sm:$0xf]
      %v524 = vld [vmem:[%s1 + $0x4f8] sm:$0xff]
      %v525 = vld [vmem:[%s1 + $0x500] sm:$0xf]
      %v526 = vld [vmem:[%s1 + $0x504] sm:$0xff]
      %v527 = vld [vmem:[%s1 + $0x50c] sm:$0xf]
      %v528 = vld [vmem:[%s1 + $0x510] sm:$0xff]
      %v529 = vld [vmem:[%s1 + $0x518] sm:$0xf]
      %v530 = vld [vmem:[%s1 + $0x51c] sm:$0xff]
      %v531 = vld [vmem:[%s1 + $0x524] sm:$0xf]
      %v532 = vld [vmem:[%s1 + $0x528] sm:$0xff]
      %v533 = vld [vmem:[%s1 + $0x530] sm:$0xf]
      %v534 = vld [vmem:[%s1 + $0x534] sm:$0xff]
      %v535 = vld [vmem:[%s1 + $0x53c] sm:$0xf]
      %v536 = vld [vmem:[%s1 + $0x540] sm:$0xff]
      %v537 = vld [vmem:[%s1 + $0x548] sm:$0xf]
      %v538 = vld [vmem:[%s1 + $0x54c] sm:$0xff]
      %v539 = vld [vmem:[%s1 + $0x554] sm:$0xf]
      %v540 = vld [vmem:[%s1 + $0x558] sm:$0xff]
      %v541 = vld [vmem:[%s1 + $0x560] sm:$0xf]
      %v542 = vld [vmem:[%s1 + $0x564] sm:$0xff]
      %v543 = vld [vmem:[%s1 + $0x56c] sm:$0xf]
      %v544 = vld [vmem:[%s1 + $0x570] sm:$0xff]
      %v545 = vld [vmem:[%s1 + $0x578] sm:$0xf]
      %v546 = vld [vmem:[%s1 + $0x57c] sm:$0xff]
      %v547 = vld [vmem:[%s1 + $0x584] sm:$0xf]
      %v548 = vld [vmem:[%s1 + $0x588] sm:$0xff]
      %v549 = vld [vmem:[%s1 + $0x590] sm:$0xf]
      %v550 = vld [vmem:[%s1 + $0x594] sm:$0xff]
      %v551 = vld [vmem:[%s1 + $0x59c] sm:$0xf]
      %v552 = vld [vmem:[%s1 + $0x5a0] sm:$0xff]
      %v553 = vld [vmem:[%s1 + $0x5a8] sm:$0xf]
      %v554 = vld [vmem:[%s1 + $0x5ac] sm:$0xff]
      %v555 = vld [vmem:[%s1 + $0x5b4] sm:$0xf]
      %v556 = vld [vmem:[%s1 + $0x5b8] sm:$0xff]
      %v557 = vld [vmem:[%s1 + $0x5c0] sm:$0xf]
      %v558 = vld [vmem:[%s1 + $0x5c4] sm:$0xff]
      %v559 = vld [vmem:[%s1 + $0x5cc] sm:$0xf]
      %v560 = vld [vmem:[%s1 + $0x5d0] sm:$0xff]
      %v561 = vld [vmem:[%s1 + $0x5d8] sm:$0xf]
      %v562 = vld [vmem:[%s1 + $0x5dc] sm:$0xff]
      %v563 = vld [vmem:[%s1 + $0x5e4] sm:$0xf]
      %v564 = vld [vmem:[%s1 + $0x5e8] sm:$0xff]
      %v565 = vld [vmem:[%s1 + $0x5f0] sm:$0xf]
      %v566 = vld [vmem:[%s1 + $0x5f4] sm:$0xff]
      %v567 = vld [vmem:[%s1 + $0x5fc] sm:$0xf]
      %v568 = vld [vmem:[%s1 + $0x600] sm:$0xff]
      %v569 = vld [vmem:[%s1 + $0x608] sm:$0xf]
      %v570 = vld [vmem:[%s1 + $0x60c] sm:$0xff]
      %v571 = vld [vmem:[%s1 + $0x614] sm:$0xf]
      %v572 = vld [vmem:[%s1 + $0x618] sm:$0xff]
      %v573 = vld [vmem:[%s1 + $0x620] sm:$0xf]
      %v574 = vld [vmem:[%s1 + $0x624] sm:$0xff]
      %v575 = vld [vmem:[%s1 + $0x62c] sm:$0xf]
      %v576 = vld [vmem:[%s1 + $0x630] sm:$0xff]
      %v577 = vld [vmem:[%s1 + $0x638] sm:$0xf]
      %v578 = vld [vmem:[%s1 + $0x63c] sm:$0xff]
      %v579 = vld [vmem:[%s1 + $0x644] sm:$0xf]
      %v580 = vld [vmem:[%s1 + $0x648] sm:$0xff]
      %v581 = vld [vmem:[%s1 + $0x650] sm:$0xf]
      %v582 = vld [vmem:[%s1 + $0x654] sm:$0xff]
      %v583 = vld [vmem:[%s1 + $0x65c] sm:$0xf]
      %v584 = vld [vmem:[%s1 + $0x660] sm:$0xff]
      %v585 = vld [vmem:[%s1 + $0x668] sm:$0xf]
      %v586 = vld [vmem:[%s1 + $0x66c] sm:$0xff]
      %v587 = vld [vmem:[%s1 + $0x674] sm:$0xf]
      %v588 = vld [vmem:[%s1 + $0x678] sm:$0xff]
      %v589 = vld [vmem:[%s1 + $0x680] sm:$0xf]
      %v590 = vld [vmem:[%s1 + $0x684] sm:$0xff]
      %v591 = vld [vmem:[%s1 + $0x68c] sm:$0xf]
      %v592 = vld [vmem:[%s1 + $0x690] sm:$0xff]
      %v593 = vld [vmem:[%s1 + $0x698] sm:$0xf]
      %v594 = vld [vmem:[%s1 + $0x69c] sm:$0xff]
      %v595 = vld [vmem:[%s1 + $0x6a4] sm:$0xf]
      %v596 = vld [vmem:[%s1 + $0x6a8] sm:$0xff]
      %v597 = vld [vmem:[%s1 + $0x6b0] sm:$0xf]
      %v598 = vld [vmem:[%s1 + $0x6b4] sm:$0xff]
      %v599 = vld [vmem:[%s1 + $0x6bc] sm:$0xf]
      %v600 = vld [vmem:[%s1 + $0x6c0] sm:$0xff]
      %v601 = vld [vmem:[%s1 + $0x6c8] sm:$0xf]
      %v602 = vld [vmem:[%s1 + $0x6cc] sm:$0xff]
      %v603 = vld [vmem:[%s1 + $0x6d4] sm:$0xf]
      %v604 = vld [vmem:[%s1 + $0x6d8] sm:$0xff]
      %v605 = vld [vmem:[%s1 + $0x6e0] sm:$0xf]
      %v606 = vld [vmem:[%s1 + $0x6e4] sm:$0xff]
      %v607 = vld [vmem:[%s1 + $0x6ec] sm:$0xf]
      %v608 = vld [vmem:[%s1 + $0x6f0] sm:$0xff]
      %v609 = vld [vmem:[%s1 + $0x6f8] sm:$0xf]
      %v610 = vld [vmem:[%s1 + $0x6fc] sm:$0xff]
      %v611 = vld [vmem:[%s1 + $0x704] sm:$0xf]
      %v612 = vld [vmem:[%s1 + $0x708] sm:$0xff]
      %v613 = vld [vmem:[%s1 + $0x710] sm:$0xf]
      %v614 = vld [vmem:[%s1 + $0x714] sm:$0xff]
      %v615 = vld [vmem:[%s1 + $0x71c] sm:$0xf]
      %v616 = vld [vmem:[%s1 + $0x720] sm:$0xff]
      %v617 = vld [vmem:[%s1 + $0x728] sm:$0xf]
      %v618 = vld [vmem:[%s1 + $0x72c] sm:$0xff]
      %v619 = vld [vmem:[%s1 + $0x734] sm:$0xf]
      %v620 = vld [vmem:[%s1 + $0x738] sm:$0xff]
      %v621 = vld [vmem:[%s1 + $0x740] sm:$0xf]
      %v622 = vld [vmem:[%s1 + $0x744] sm:$0xff]
      %v623 = vld [vmem:[%s1 + $0x74c] sm:$0xf]
      %v624 = vld [vmem:[%s1 + $0x750] sm:$0xff]
      %v625 = vld [vmem:[%s1 + $0x758] sm:$0xf]
      %v626 = vld [vmem:[%s1 + $0x75c] sm:$0xff]
      %v627 = vld [vmem:[%s1 + $0x764] sm:$0xf]
      %v628 = vld [vmem:[%s1 + $0x768] sm:$0xff]
      %v629 = vld [vmem:[%s1 + $0x770] sm:$0xf]
      %v630 = vld [vmem:[%s1 + $0x774] sm:$0xff]
      %v631 = vld [vmem:[%s1 + $0x77c] sm:$0xf]
      %v632 = vld [vmem:[%s1 + $0x780] sm:$0xff]
      %v633 = vld [vmem:[%s1 + $0x788] sm:$0xf]
      %v634 = vld [vmem:[%s1 + $0x78c] sm:$0xff]
      %v635 = vld [vmem:[%s1 + $0x794] sm:$0xf]
      %v636 = vld [vmem:[%s1 + $0x798] sm:$0xff]
      %v637 = vld [vmem:[%s1 + $0x7a0] sm:$0xf]
      %v638 = vld [vmem:[%s1 + $0x7a4] sm:$0xff]
      %v639 = vld [vmem:[%s1 + $0x7ac] sm:$0xf]
      %v640 = vld [vmem:[%s1 + $0x7b0] sm:$0xff]
      %v641 = vld [vmem:[%s1 + $0x7b8] sm:$0xf]
      %v642 = vld [vmem:[%s1 + $0x7bc] sm:$0xff]
      %v643 = vld [vmem:[%s1 + $0x7c4] sm:$0xf]
      %v644 = vld [vmem:[%s1 + $0x7c8] sm:$0xff]
      %v645 = vld [vmem:[%s1 + $0x7d0] sm:$0xf]
      %v646 = vld [vmem:[%s1 + $0x7d4] sm:$0xff]
      %v647 = vld [vmem:[%s1 + $0x7dc] sm:$0xf]
      %v648 = vld [vmem:[%s1 + $0x7e0] sm:$0xff]
      %v649 = vld [vmem:[%s1 + $0x7e8] sm:$0xf]
      %v650 = vld [vmem:[%s1 + $0x7ec] sm:$0xff]
      %v651 = vld [vmem:[%s1 + $0x7f4] sm:$0xf]
      %v652 = vld [vmem:[%s1 + $0x7f8] sm:$0xff]
      %v653 = vld [vmem:[%s1 + $0x800] sm:$0xf]
      %v654 = vld [vmem:[%s1 + $0x804] sm:$0xff]
      %v655 = vld [vmem:[%s1 + $0x80c] sm:$0xf]
      %v656 = vld [vmem:[%s1 + $0x810] sm:$0xff]
      %v657 = vld [vmem:[%s1 + $0x818] sm:$0xf]
      %v658 = vld [vmem:[%s1 + $0x81c] sm:$0xff]
      %v659 = vld [vmem:[%s1 + $0x824] sm:$0xf]
      %v660 = vld [vmem:[%s1 + $0x828] sm:$0xff]
      %v661 = vld [vmem:[%s1 + $0x830] sm:$0xf]
      %v662 = vld [vmem:[%s1 + $0x834] sm:$0xff]
      %v663 = vld [vmem:[%s1 + $0x83c] sm:$0xf]
      %v664 = vld [vmem:[%s1 + $0x840] sm:$0xff]
      %v665 = vld [vmem:[%s1 + $0x848] sm:$0xf]
      %v666 = vld [vmem:[%s1 + $0x84c] sm:$0xff]
      %v667 = vld [vmem:[%s1 + $0x854] sm:$0xf]
      %v668 = vld [vmem:[%s1 + $0x858] sm:$0xff]
      %v669 = vld [vmem:[%s1 + $0x860] sm:$0xf]
      %v670 = vld [vmem:[%s1 + $0x864] sm:$0xff]
      %v671 = vld [vmem:[%s1 + $0x86c] sm:$0xf]
      %v672 = vld [vmem:[%s1 + $0x870] sm:$0xff]
      %v673 = vld [vmem:[%s1 + $0x878] sm:$0xf]
      %v674 = vld [vmem:[%s1 + $0x87c] sm:$0xff]
      %v675 = vld [vmem:[%s1 + $0x884] sm:$0xf]
      %v676 = vld [vmem:[%s1 + $0x888] sm:$0xff]
      %v677 = vld [vmem:[%s1 + $0x890] sm:$0xf]
      %v678 = vld [vmem:[%s1 + $0x894] sm:$0xff]
      %v679 = vld [vmem:[%s1 + $0x89c] sm:$0xf]
      %v680 = vld [vmem:[%s1 + $0x8a0] sm:$0xff]
      %v681 = vld [vmem:[%s1 + $0x8a8] sm:$0xf]
      %v682 = vld [vmem:[%s1 + $0x8ac] sm:$0xff]
      %v683 = vld [vmem:[%s1 + $0x8b4] sm:$0xf]
      %v684 = vld [vmem:[%s1 + $0x8b8] sm:$0xff]
      %v685 = vld [vmem:[%s1 + $0x8c0] sm:$0xf]
      %v686 = vld [vmem:[%s1 + $0x8c4] sm:$0xff]
      %v687 = vld [vmem:[%s1 + $0x8cc] sm:$0xf]
      %v688 = vld [vmem:[%s1 + $0x8d0] sm:$0xff]
      %v689 = vld [vmem:[%s1 + $0x8d8] sm:$0xf]
      %v690 = vld [vmem:[%s1 + $0x8dc] sm:$0xff]
      %v691 = vld [vmem:[%s1 + $0x8e4] sm:$0xf]
      %v692 = vld [vmem:[%s1 + $0x8e8] sm:$0xff]
      %v693 = vld [vmem:[%s1 + $0x8f0] sm:$0xf]
      %v694 = vld [vmem:[%s1 + $0x8f4] sm:$0xff]
      %v695 = vld [vmem:[%s1 + $0x8fc] sm:$0xf]
      %v696 = vld [vmem:[%s1 + $0x900] sm:$0xff]
      %v697 = vld [vmem:[%s1 + $0x908] sm:$0xf]
      %v698 = vld [vmem:[%s1 + $0x90c] sm:$0xff]
      %v699 = vld [vmem:[%s1 + $0x914] sm:$0xf]
      %v700 = vld [vmem:[%s1 + $0x918] sm:$0xff]
      %v701 = vld [vmem:[%s1 + $0x920] sm:$0xf]
      %v702 = vld [vmem:[%s1 + $0x924] sm:$0xff]
      %v703 = vld [vmem:[%s1 + $0x92c] sm:$0xf]
      %v704 = vld [vmem:[%s1 + $0x930] sm:$0xff]
      %v705 = vld [vmem:[%s1 + $0x938] sm:$0xf]
      %v706 = vld [vmem:[%s1 + $0x93c] sm:$0xff]
      %v707 = vld [vmem:[%s1 + $0x944] sm:$0xf]
      %v708 = vld [vmem:[%s1 + $0x948] sm:$0xff]
      %v709 = vld [vmem:[%s1 + $0x950] sm:$0xf]
      %v710 = vld [vmem:[%s1 + $0x954] sm:$0xff]
      %v711 = vld [vmem:[%s1 + $0x95c] sm:$0xf]
      %v712 = vld [vmem:[%s1 + $0x960] sm:$0xff]
      %v713 = vld [vmem:[%s1 + $0x968] sm:$0xf]
      %v714 = vld [vmem:[%s1 + $0x96c] sm:$0xff]
      %v715 = vld [vmem:[%s1 + $0x974] sm:$0xf]
      %v716 = vld [vmem:[%s1 + $0x978] sm:$0xff]
      %v717 = vld [vmem:[%s1 + $0x980] sm:$0xf]
      %v718 = vld [vmem:[%s1 + $0x984] sm:$0xff]
      %v719 = vld [vmem:[%s1 + $0x98c] sm:$0xf]
      %v720 = vld [vmem:[%s1 + $0x990] sm:$0xff]
      %v721 = vld [vmem:[%s1 + $0x998] sm:$0xf]
      %v722 = vld [vmem:[%s1 + $0x99c] sm:$0xff]
      %v723 = vld [vmem:[%s1 + $0x9a4] sm:$0xf]
      %v724 = vld [vmem:[%s1 + $0x9a8] sm:$0xff]
      %v725 = vld [vmem:[%s1 + $0x9b0] sm:$0xf]
      %v726 = vld [vmem:[%s1 + $0x9b4] sm:$0xff]
      %v727 = vld [vmem:[%s1 + $0x9bc] sm:$0xf]
      %v728 = vld [vmem:[%s1 + $0x9c0] sm:$0xff]
      %v729 = vld [vmem:[%s1 + $0x9c8] sm:$0xf]
      %v730 = vld [vmem:[%s1 + $0x9cc] sm:$0xff]
      %v731 = vld [vmem:[%s1 + $0x9d4] sm:$0xf]
      %v732 = vld [vmem:[%s1 + $0x9d8] sm:$0xff]
      %v733 = vld [vmem:[%s1 + $0x9e0] sm:$0xf]
      %v734 = vld [vmem:[%s1 + $0x9e4] sm:$0xff]
      %v735 = vld [vmem:[%s1 + $0x9ec] sm:$0xf]
      %v736 = vld [vmem:[%s1 + $0x9f0] sm:$0xff]
      %v737 = vld [vmem:[%s1 + $0x9f8] sm:$0xf]
      %v738 = vld [vmem:[%s1 + $0x9fc] sm:$0xff]
      %v739 = vld [vmem:[%s1 + $0xa04] sm:$0xf]
      %v740 = vld [vmem:[%s1 + $0xa08] sm:$0xff]
      %v741 = vld [vmem:[%s1 + $0xa10] sm:$0xf]
      %v742 = vld [vmem:[%s1 + $0xa14] sm:$0xff]
      %v743 = vld [vmem:[%s1 + $0xa1c] sm:$0xf]
      %v744 = vld [vmem:[%s1 + $0xa20] sm:$0xff]
      %v745 = vld [vmem:[%s1 + $0xa28] sm:$0xf]
      %v746 = vld [vmem:[%s1 + $0xa2c] sm:$0xff]
      %v747 = vld [vmem:[%s1 + $0xa34] sm:$0xf]
      %v748 = vld [vmem:[%s1 + $0xa38] sm:$0xff]
      %v749 = vld [vmem:[%s1 + $0xa40] sm:$0xf]
      %v750 = vld [vmem:[%s1 + $0xa44] sm:$0xff]
      %v751 = vld [vmem:[%s1 + $0xa4c] sm:$0xf]
      %v752 = vld [vmem:[%s1 + $0xa50] sm:$0xff]
      %v753 = vld [vmem:[%s1 + $0xa58] sm:$0xf]
      %v754 = vld [vmem:[%s1 + $0xa5c] sm:$0xff]
      %v755 = vld [vmem:[%s1 + $0xa64] sm:$0xf]
      %v756 = vld [vmem:[%s1 + $0xa68] sm:$0xff]
      %v757 = vld [vmem:[%s1 + $0xa70] sm:$0xf]
      %v758 = vld [vmem:[%s1 + $0xa74] sm:$0xff]
      %v759 = vld [vmem:[%s1 + $0xa7c] sm:$0xf]
      %v760 = vld [vmem:[%s1 + $0xa80] sm:$0xff]
      %v761 = vld [vmem:[%s1 + $0xa88] sm:$0xf]
      %v762 = vld [vmem:[%s1 + $0xa8c] sm:$0xff]
      %v763 = vld [vmem:[%s1 + $0xa94] sm:$0xf]
      %v764 = vld [vmem:[%s1 + $0xa98] sm:$0xff]
      %v765 = vld [vmem:[%s1 + $0xaa0] sm:$0xf]
      %v766 = vld [vmem:[%s1 + $0xaa4] sm:$0xff]
      %v767 = vld [vmem:[%s1 + $0xaac] sm:$0xf]
      %v768 = vld [vmem:[%s1 + $0xab0] sm:$0xff]
      %v769 = vld [vmem:[%s1 + $0xab8] sm:$0xf]
      %v770 = vld [vmem:[%s1 + $0xabc] sm:$0xff]
      %v771 = vld [vmem:[%s1 + $0xac4] sm:$0xf]
      %v772 = vld [vmem:[%s1 + $0xac8] sm:$0xff]
      %v773 = vld [vmem:[%s1 + $0xad0] sm:$0xf]
      %v774 = vld [vmem:[%s1 + $0xad4] sm:$0xff]
      %v775 = vld [vmem:[%s1 + $0xadc] sm:$0xf]
      %v776 = vld [vmem:[%s1 + $0xae0] sm:$0xff]
      %v777 = vld [vmem:[%s1 + $0xae8] sm:$0xf]
      %v778 = vld [vmem:[%s1 + $0xaec] sm:$0xff]
      %v779 = vld [vmem:[%s1 + $0xaf4] sm:$0xf]
      %v780 = vld [vmem:[%s1 + $0xaf8] sm:$0xff]
      %v781 = vld [vmem:[%s1 + $0xb00] sm:$0xf]
      %v782 = vld [vmem:[%s1 + $0xb04] sm:$0xff]
      %v783 = vld [vmem:[%s1 + $0xb0c] sm:$0xf]
      %v784 = vld [vmem:[%s1 + $0xb10] sm:$0xff]
      %v785 = vld [vmem:[%s1 + $0xb18] sm:$0xf]
      %v786 = vld [vmem:[%s1 + $0xb1c] sm:$0xff]
      %v787 = vld [vmem:[%s1 + $0xb24] sm:$0xf]
      %v788 = vld [vmem:[%s1 + $0xb28] sm:$0xff]
      %v789 = vld [vmem:[%s1 + $0xb30] sm:$0xf]
      %v790 = vld [vmem:[%s1 + $0xb34] sm:$0xff]
      %v791 = vld [vmem:[%s1 + $0xb3c] sm:$0xf]
      %v792 = vld [vmem:[%s1 + $0xb40] sm:$0xff]
      %v793 = vld [vmem:[%s1 + $0xb48] sm:$0xf]
      %v794 = vld [vmem:[%s1 + $0xb4c] sm:$0xff]
      %v795 = vld [vmem:[%s1 + $0xb54] sm:$0xf]
      %v796 = vld [vmem:[%s1 + $0xb58] sm:$0xff]
      %v797 = vld [vmem:[%s1 + $0xb60] sm:$0xf]
      %v798 = vld [vmem:[%s1 + $0xb64] sm:$0xff]
      %v799 = vld [vmem:[%s1 + $0xb6c] sm:$0xf]
      %v800 = vld [vmem:[%s1 + $0xb70] sm:$0xff]
      %v801 = vld [vmem:[%s1 + $0xb78] sm:$0xf]
      %v802 = vld [vmem:[%s1 + $0xb7c] sm:$0xff]
      %v803 = vld [vmem:[%s1 + $0xb84] sm:$0xf]
      %v804 = vld [vmem:[%s1 + $0xb88] sm:$0xff]
      %v805 = vld [vmem:[%s1 + $0xb90] sm:$0xf]
      %v806 = vld [vmem:[%s1 + $0xb94] sm:$0xff]
      %v807 = vld [vmem:[%s1 + $0xb9c] sm:$0xf]
      %v808 = vld [vmem:[%s1 + $0xba0] sm:$0xff]
      %v809 = vld [vmem:[%s1 + $0xba8] sm:$0xf]
      %v810 = vld [vmem:[%s1 + $0xbac] sm:$0xff]
      %v811 = vld [vmem:[%s1 + $0xbb4] sm:$0xf]
      %v812 = vld [vmem:[%s1 + $0xbb8] sm:$0xff]
      %v813 = vld [vmem:[%s1 + $0xbc0] sm:$0xf]
      %v814 = vld [vmem:[%s1 + $0xbc4] sm:$0xff]
      %v815 = vld [vmem:[%s1 + $0xbcc] sm:$0xf]
      %v816 = vld [vmem:[%s1 + $0xbd0] sm:$0xff]
      %v817 = vld [vmem:[%s1 + $0xbd8] sm:$0xf]
      %v818 = vld [vmem:[%s1 + $0xbdc] sm:$0xff]
      %v819 = vld [vmem:[%s1 + $0xbe4] sm:$0xf]
      %v820 = vld [vmem:[%s1 + $0xbe8] sm:$0xff]
      %v821 = vld [vmem:[%s1 + $0xbf0] sm:$0xf]
      %v822 = vld [vmem:[%s1 + $0xbf4] sm:$0xff]
      %v823 = vld [vmem:[%s1 + $0xbfc] sm:$0xf]
      %v856 = vunpack.c.l.b16 %v280
      %v857 = vunpack.c.h.b16 %v280
      %v858 = vunpack.c.l.b16 %v281
      %v859 = vunpack.c.h.b16 %v281
      %v860 = vunpack.c.l.b16 %v282
      %v861 = vunpack.c.h.b16 %v282
      %v862 = vunpack.c.l.b16 %v283
      %v863 = vunpack.c.h.b16 %v283
      %v864 = vunpack.c.l.b16 %v284
      %v865 = vunpack.c.h.b16 %v284
      %v866 = vunpack.c.l.b16 %v285
      %v867 = vunpack.c.h.b16 %v285
      %v868 = vunpack.c.l.b16 %v286
      %v869 = vunpack.c.h.b16 %v286
      %v870 = vunpack.c.l.b16 %v287
      %v871 = vunpack.c.h.b16 %v287
      %v872 = vunpack.c.l.b16 %v288
      %v873 = vunpack.c.h.b16 %v288
      %v874 = vunpack.c.l.b16 %v289
      %v875 = vunpack.c.h.b16 %v289
      %v876 = vunpack.c.l.b16 %v290
      %v877 = vunpack.c.h.b16 %v290
      %v878 = vunpack.c.l.b16 %v291
      %v879 = vunpack.c.h.b16 %v291
      %v880 = vunpack.c.l.b16 %v292
      %v881 = vunpack.c.h.b16 %v292
      %v882 = vunpack.c.l.b16 %v293
      %v883 = vunpack.c.h.b16 %v293
      %v884 = vunpack.c.l.b16 %v294
      %v885 = vunpack.c.h.b16 %v294
      %v886 = vunpack.c.l.b16 %v295
      %v887 = vunpack.c.h.b16 %v295
      %v888 = vunpack.c.l.b16 %v296
      %v889 = vunpack.c.h.b16 %v296
      %v890 = vunpack.c.l.b16 %v297
      %v891 = vunpack.c.h.b16 %v297
      %v892 = vunpack.c.l.b16 %v298
      %v893 = vunpack.c.h.b16 %v298
      %v894 = vunpack.c.l.b16 %v299
      %v895 = vunpack.c.h.b16 %v299
      %v896 = vunpack.c.l.b16 %v300
      %v897 = vunpack.c.h.b16 %v300
      %v898 = vunpack.c.l.b16 %v301
      %v899 = vunpack.c.h.b16 %v301
      %v900 = vunpack.c.l.b16 %v302
      %v901 = vunpack.c.h.b16 %v302
      %v902 = vunpack.c.l.b16 %v303
      %v903 = vunpack.c.h.b16 %v303
      %v904 = vunpack.c.l.b16 %v304
      %v905 = vunpack.c.h.b16 %v304
      %v906 = vunpack.c.l.b16 %v305
      %v907 = vunpack.c.h.b16 %v305
      %v908 = vunpack.c.l.b16 %v306
      %v909 = vunpack.c.h.b16 %v306
      %v910 = vunpack.c.l.b16 %v307
      %v911 = vunpack.c.h.b16 %v307
      %v912 = vunpack.c.l.b16 %v308
      %v913 = vunpack.c.h.b16 %v308
      %v914 = vunpack.c.l.b16 %v309
      %v915 = vunpack.c.h.b16 %v309
      %v916 = vunpack.c.l.b16 %v310
      %v917 = vunpack.c.h.b16 %v310
      %v918 = vunpack.c.l.b16 %v311
      %v919 = vunpack.c.h.b16 %v311
      %v920 = vpack.c.b16 %v872, %v856
      %v921 = vpack.c.b16 %v873, %v857
      %v922 = vpack.c.b16 %v874, %v858
      %v923 = vpack.c.b16 %v875, %v859
      %v924 = vpack.c.b16 %v876, %v860
      %v925 = vpack.c.b16 %v877, %v861
      %v926 = vpack.c.b16 %v878, %v862
      %v927 = vpack.c.b16 %v879, %v863
      %v928 = vpack.c.b16 %v880, %v864
      %v929 = vpack.c.b16 %v881, %v865
      %v930 = vpack.c.b16 %v882, %v866
      %v931 = vpack.c.b16 %v883, %v867
      %v932 = vpack.c.b16 %v884, %v868
      %v933 = vpack.c.b16 %v885, %v869
      %v934 = vpack.c.b16 %v886, %v870
      %v935 = vpack.c.b16 %v887, %v871
      %v936 = vpack.c.b16 %v904, %v888
      %v937 = vpack.c.b16 %v905, %v889
      %v938 = vpack.c.b16 %v906, %v890
      %v939 = vpack.c.b16 %v907, %v891
      %v940 = vpack.c.b16 %v908, %v892
      %v941 = vpack.c.b16 %v909, %v893
      %v942 = vpack.c.b16 %v910, %v894
      %v943 = vpack.c.b16 %v911, %v895
      %v944 = vpack.c.b16 %v912, %v896
      %v945 = vpack.c.b16 %v913, %v897
      %v946 = vpack.c.b16 %v914, %v898
      %v947 = vpack.c.b16 %v915, %v899
      %v948 = vpack.c.b16 %v916, %v900
      %v949 = vpack.c.b16 %v917, %v901
      %v950 = vpack.c.b16 %v918, %v902
      %v951 = vpack.c.b16 %v919, %v903
      %v1496 = vunpack.c.l.b16 %v312
      %v1497 = vunpack.c.h.b16 %v312
      %v1498 = vunpack.c.l.b16 %v313
      %v1499 = vunpack.c.l.b16 %v314
      %v1500 = vunpack.c.h.b16 %v314
      %v1501 = vunpack.c.l.b16 %v315
      %v1502 = vunpack.c.l.b16 %v316
      %v1503 = vunpack.c.h.b16 %v316
      %v1504 = vunpack.c.l.b16 %v317
      %v1505 = vunpack.c.l.b16 %v318
      %v1506 = vunpack.c.h.b16 %v318
      %v1507 = vunpack.c.l.b16 %v319
      %v1508 = vunpack.c.l.b16 %v320
      %v1509 = vunpack.c.h.b16 %v320
      %v1510 = vunpack.c.l.b16 %v321
      %v1511 = vunpack.c.l.b16 %v322
      %v1512 = vunpack.c.h.b16 %v322
      %v1513 = vunpack.c.l.b16 %v323
      %v1514 = vunpack.c.l.b16 %v324
      %v1515 = vunpack.c.h.b16 %v324
      %v1516 = vunpack.c.l.b16 %v325
      %v1517 = vunpack.c.l.b16 %v326
      %v1518 = vunpack.c.h.b16 %v326
      %v1519 = vunpack.c.l.b16 %v327
      %v1520 = vunpack.c.l.b16 %v328
      %v1521 = vunpack.c.h.b16 %v328
      %v1522 = vunpack.c.l.b16 %v329
      %v1523 = vunpack.c.l.b16 %v330
      %v1524 = vunpack.c.h.b16 %v330
      %v1525 = vunpack.c.l.b16 %v331
      %v1526 = vunpack.c.l.b16 %v332
      %v1527 = vunpack.c.h.b16 %v332
      %v1528 = vunpack.c.l.b16 %v333
      %v1529 = vunpack.c.l.b16 %v334
      %v1530 = vunpack.c.h.b16 %v334
      %v1531 = vunpack.c.l.b16 %v335
      %v1532 = vunpack.c.l.b16 %v336
      %v1533 = vunpack.c.h.b16 %v336
      %v1534 = vunpack.c.l.b16 %v337
      %v1535 = vunpack.c.l.b16 %v338
      %v1536 = vunpack.c.h.b16 %v338
      %v1537 = vunpack.c.l.b16 %v339
      %v1538 = vunpack.c.l.b16 %v340
      %v1539 = vunpack.c.h.b16 %v340
      %v1540 = vunpack.c.l.b16 %v341
      %v1541 = vunpack.c.l.b16 %v342
      %v1542 = vunpack.c.h.b16 %v342
      %v1543 = vunpack.c.l.b16 %v343
      %v1544 = vunpack.c.l.b16 %v344
      %v1545 = vunpack.c.h.b16 %v344
      %v1546 = vunpack.c.l.b16 %v345
      %v1547 = vunpack.c.l.b16 %v346
      %v1548 = vunpack.c.h.b16 %v346
      %v1549 = vunpack.c.l.b16 %v347
      %v1550 = vunpack.c.l.b16 %v348
      %v1551 = vunpack.c.h.b16 %v348
      %v1552 = vunpack.c.l.b16 %v349
      %v1553 = vunpack.c.l.b16 %v350
      %v1554 = vunpack.c.h.b16 %v350
      %v1555 = vunpack.c.l.b16 %v351
      %v1556 = vunpack.c.l.b16 %v352
      %v1557 = vunpack.c.h.b16 %v352
      %v1558 = vunpack.c.l.b16 %v353
      %v1559 = vunpack.c.l.b16 %v354
      %v1560 = vunpack.c.h.b16 %v354
      %v1561 = vunpack.c.l.b16 %v355
      %v1562 = vunpack.c.l.b16 %v356
      %v1563 = vunpack.c.h.b16 %v356
      %v1564 = vunpack.c.l.b16 %v357
      %v1565 = vunpack.c.l.b16 %v358
      %v1566 = vunpack.c.h.b16 %v358
      %v1567 = vunpack.c.l.b16 %v359
      %v1568 = vunpack.c.l.b16 %v360
      %v1569 = vunpack.c.h.b16 %v360
      %v1570 = vunpack.c.l.b16 %v361
      %v1571 = vunpack.c.l.b16 %v362
      %v1572 = vunpack.c.h.b16 %v362
      %v1573 = vunpack.c.l.b16 %v363
      %v1574 = vunpack.c.l.b16 %v364
      %v1575 = vunpack.c.h.b16 %v364
      %v1576 = vunpack.c.l.b16 %v365
      %v1577 = vunpack.c.l.b16 %v366
      %v1578 = vunpack.c.h.b16 %v366
      %v1579 = vunpack.c.l.b16 %v367
      %v1580 = vunpack.c.l.b16 %v368
      %v1581 = vunpack.c.h.b16 %v368
      %v1582 = vunpack.c.l.b16 %v369
      %v1583 = vunpack.c.l.b16 %v370
      %v1584 = vunpack.c.h.b16 %v370
      %v1585 = vunpack.c.l.b16 %v371
      %v1586 = vunpack.c.l.b16 %v372
      %v1587 = vunpack.c.h.b16 %v372
      %v1588 = vunpack.c.l.b16 %v373
      %v1589 = vunpack.c.l.b16 %v374
      %v1590 = vunpack.c.h.b16 %v374
      %v1591 = vunpack.c.l.b16 %v375
      %v1592 = vunpack.c.l.b16 %v376
      %v1593 = vunpack.c.h.b16 %v376
      %v1594 = vunpack.c.l.b16 %v377
      %v1595 = vunpack.c.l.b16 %v378
      %v1596 = vunpack.c.h.b16 %v378
      %v1597 = vunpack.c.l.b16 %v379
      %v1598 = vunpack.c.l.b16 %v380
      %v1599 = vunpack.c.h.b16 %v380
      %v1600 = vunpack.c.l.b16 %v381
      %v1601 = vunpack.c.l.b16 %v382
      %v1602 = vunpack.c.h.b16 %v382
      %v1603 = vunpack.c.l.b16 %v383
      %v1604 = vunpack.c.l.b16 %v384
      %v1605 = vunpack.c.h.b16 %v384
      %v1606 = vunpack.c.l.b16 %v385
      %v1607 = vunpack.c.l.b16 %v386
      %v1608 = vunpack.c.h.b16 %v386
      %v1609 = vunpack.c.l.b16 %v387
      %v1610 = vunpack.c.l.b16 %v388
      %v1611 = vunpack.c.h.b16 %v388
      %v1612 = vunpack.c.l.b16 %v389
      %v1613 = vunpack.c.l.b16 %v390
      %v1614 = vunpack.c.h.b16 %v390
      %v1615 = vunpack.c.l.b16 %v391
      %v1616 = vunpack.c.l.b16 %v392
      %v1617 = vunpack.c.h.b16 %v392
      %v1618 = vunpack.c.l.b16 %v393
      %v1619 = vunpack.c.l.b16 %v394
      %v1620 = vunpack.c.h.b16 %v394
      %v1621 = vunpack.c.l.b16 %v395
      %v1622 = vunpack.c.l.b16 %v396
      %v1623 = vunpack.c.h.b16 %v396
      %v1624 = vunpack.c.l.b16 %v397
      %v1625 = vunpack.c.l.b16 %v398
      %v1626 = vunpack.c.h.b16 %v398
      %v1627 = vunpack.c.l.b16 %v399
      %v1628 = vunpack.c.l.b16 %v400
      %v1629 = vunpack.c.h.b16 %v400
      %v1630 = vunpack.c.l.b16 %v401
      %v1631 = vunpack.c.l.b16 %v402
      %v1632 = vunpack.c.h.b16 %v402
      %v1633 = vunpack.c.l.b16 %v403
      %v1634 = vunpack.c.l.b16 %v404
      %v1635 = vunpack.c.h.b16 %v404
      %v1636 = vunpack.c.l.b16 %v405
      %v1637 = vunpack.c.l.b16 %v406
      %v1638 = vunpack.c.h.b16 %v406
      %v1639 = vunpack.c.l.b16 %v407
      %v1640 = vunpack.c.l.b16 %v408
      %v1641 = vunpack.c.h.b16 %v408
      %v1642 = vunpack.c.l.b16 %v409
      %v1643 = vunpack.c.l.b16 %v410
      %v1644 = vunpack.c.h.b16 %v410
      %v1645 = vunpack.c.l.b16 %v411
      %v1646 = vunpack.c.l.b16 %v412
      %v1647 = vunpack.c.h.b16 %v412
      %v1648 = vunpack.c.l.b16 %v413
      %v1649 = vunpack.c.l.b16 %v414
      %v1650 = vunpack.c.h.b16 %v414
      %v1651 = vunpack.c.l.b16 %v415
      %v1652 = vunpack.c.l.b16 %v416
      %v1653 = vunpack.c.h.b16 %v416
      %v1654 = vunpack.c.l.b16 %v417
      %v1655 = vunpack.c.l.b16 %v418
      %v1656 = vunpack.c.h.b16 %v418
      %v1657 = vunpack.c.l.b16 %v419
      %v1658 = vunpack.c.l.b16 %v420
      %v1659 = vunpack.c.h.b16 %v420
      %v1660 = vunpack.c.l.b16 %v421
      %v1661 = vunpack.c.l.b16 %v422
      %v1662 = vunpack.c.h.b16 %v422
      %v1663 = vunpack.c.l.b16 %v423
      %v1664 = vunpack.c.l.b16 %v424
      %v1665 = vunpack.c.h.b16 %v424
      %v1666 = vunpack.c.l.b16 %v425
      %v1667 = vunpack.c.l.b16 %v426
      %v1668 = vunpack.c.h.b16 %v426
      %v1669 = vunpack.c.l.b16 %v427
      %v1670 = vunpack.c.l.b16 %v428
      %v1671 = vunpack.c.h.b16 %v428
      %v1672 = vunpack.c.l.b16 %v429
      %v1673 = vunpack.c.l.b16 %v430
      %v1674 = vunpack.c.h.b16 %v430
      %v1675 = vunpack.c.l.b16 %v431
      %v1676 = vunpack.c.l.b16 %v432
      %v1677 = vunpack.c.h.b16 %v432
      %v1678 = vunpack.c.l.b16 %v433
      %v1679 = vunpack.c.l.b16 %v434
      %v1680 = vunpack.c.h.b16 %v434
      %v1681 = vunpack.c.l.b16 %v435
      %v1682 = vunpack.c.l.b16 %v436
      %v1683 = vunpack.c.h.b16 %v436
      %v1684 = vunpack.c.l.b16 %v437
      %v1685 = vunpack.c.l.b16 %v438
      %v1686 = vunpack.c.h.b16 %v438
      %v1687 = vunpack.c.l.b16 %v439
      %v1688 = vunpack.c.l.b16 %v440
      %v1689 = vunpack.c.h.b16 %v440
      %v1690 = vunpack.c.l.b16 %v441
      %v1691 = vunpack.c.l.b16 %v442
      %v1692 = vunpack.c.h.b16 %v442
      %v1693 = vunpack.c.l.b16 %v443
      %v1694 = vunpack.c.l.b16 %v444
      %v1695 = vunpack.c.h.b16 %v444
      %v1696 = vunpack.c.l.b16 %v445
      %v1697 = vunpack.c.l.b16 %v446
      %v1698 = vunpack.c.h.b16 %v446
      %v1699 = vunpack.c.l.b16 %v447
      %v1700 = vunpack.c.l.b16 %v448
      %v1701 = vunpack.c.h.b16 %v448
      %v1702 = vunpack.c.l.b16 %v449
      %v1703 = vunpack.c.l.b16 %v450
      %v1704 = vunpack.c.h.b16 %v450
      %v1705 = vunpack.c.l.b16 %v451
      %v1706 = vunpack.c.l.b16 %v452
      %v1707 = vunpack.c.h.b16 %v452
      %v1708 = vunpack.c.l.b16 %v453
      %v1709 = vunpack.c.l.b16 %v454
      %v1710 = vunpack.c.h.b16 %v454
      %v1711 = vunpack.c.l.b16 %v455
      %v1712 = vunpack.c.l.b16 %v456
      %v1713 = vunpack.c.h.b16 %v456
      %v1714 = vunpack.c.l.b16 %v457
      %v1715 = vunpack.c.l.b16 %v458
      %v1716 = vunpack.c.h.b16 %v458
      %v1717 = vunpack.c.l.b16 %v459
      %v1718 = vunpack.c.l.b16 %v460
      %v1719 = vunpack.c.h.b16 %v460
      %v1720 = vunpack.c.l.b16 %v461
      %v1721 = vunpack.c.l.b16 %v462
      %v1722 = vunpack.c.h.b16 %v462
      %v1723 = vunpack.c.l.b16 %v463
      %v1724 = vunpack.c.l.b16 %v464
      %v1725 = vunpack.c.h.b16 %v464
      %v1726 = vunpack.c.l.b16 %v465
      %v1727 = vunpack.c.l.b16 %v466
      %v1728 = vunpack.c.h.b16 %v466
      %v1729 = vunpack.c.l.b16 %v467
      %v1730 = vunpack.c.l.b16 %v468
      %v1731 = vunpack.c.h.b16 %v468
      %v1732 = vunpack.c.l.b16 %v469
      %v1733 = vunpack.c.l.b16 %v470
      %v1734 = vunpack.c.h.b16 %v470
      %v1735 = vunpack.c.l.b16 %v471
      %v1736 = vunpack.c.l.b16 %v472
      %v1737 = vunpack.c.h.b16 %v472
      %v1738 = vunpack.c.l.b16 %v473
      %v1739 = vunpack.c.l.b16 %v474
      %v1740 = vunpack.c.h.b16 %v474
      %v1741 = vunpack.c.l.b16 %v475
      %v1742 = vunpack.c.l.b16 %v476
      %v1743 = vunpack.c.h.b16 %v476
      %v1744 = vunpack.c.l.b16 %v477
      %v1745 = vunpack.c.l.b16 %v478
      %v1746 = vunpack.c.h.b16 %v478
      %v1747 = vunpack.c.l.b16 %v479
      %v1748 = vunpack.c.l.b16 %v480
      %v1749 = vunpack.c.h.b16 %v480
      %v1750 = vunpack.c.l.b16 %v481
      %v1751 = vunpack.c.l.b16 %v482
      %v1752 = vunpack.c.h.b16 %v482
      %v1753 = vunpack.c.l.b16 %v483
      %v1754 = vunpack.c.l.b16 %v484
      %v1755 = vunpack.c.h.b16 %v484
      %v1756 = vunpack.c.l.b16 %v485
      %v1757 = vunpack.c.l.b16 %v486
      %v1758 = vunpack.c.h.b16 %v486
      %v1759 = vunpack.c.l.b16 %v487
      %v1760 = vunpack.c.l.b16 %v488
      %v1761 = vunpack.c.h.b16 %v488
      %v1762 = vunpack.c.l.b16 %v489
      %v1763 = vunpack.c.l.b16 %v490
      %v1764 = vunpack.c.h.b16 %v490
      %v1765 = vunpack.c.l.b16 %v491
      %v1766 = vunpack.c.l.b16 %v492
      %v1767 = vunpack.c.h.b16 %v492
      %v1768 = vunpack.c.l.b16 %v493
      %v1769 = vunpack.c.l.b16 %v494
      %v1770 = vunpack.c.h.b16 %v494
      %v1771 = vunpack.c.l.b16 %v495
      %v1772 = vunpack.c.l.b16 %v496
      %v1773 = vunpack.c.h.b16 %v496
      %v1774 = vunpack.c.l.b16 %v497
      %v1775 = vunpack.c.l.b16 %v498
      %v1776 = vunpack.c.h.b16 %v498
      %v1777 = vunpack.c.l.b16 %v499
      %v1778 = vunpack.c.l.b16 %v500
      %v1779 = vunpack.c.h.b16 %v500
      %v1780 = vunpack.c.l.b16 %v501
      %v1781 = vunpack.c.l.b16 %v502
      %v1782 = vunpack.c.h.b16 %v502
      %v1783 = vunpack.c.l.b16 %v503
      %v1784 = vunpack.c.l.b16 %v504
      %v1785 = vunpack.c.h.b16 %v504
      %v1786 = vunpack.c.l.b16 %v505
      %v1787 = vunpack.c.l.b16 %v506
      %v1788 = vunpack.c.h.b16 %v506
      %v1789 = vunpack.c.l.b16 %v507
      %v1790 = vunpack.c.l.b16 %v508
      %v1791 = vunpack.c.h.b16 %v508
      %v1792 = vunpack.c.l.b16 %v509
      %v1793 = vunpack.c.l.b16 %v510
      %v1794 = vunpack.c.h.b16 %v510
      %v1795 = vunpack.c.l.b16 %v511
      %v1796 = vunpack.c.l.b16 %v512
      %v1797 = vunpack.c.h.b16 %v512
      %v1798 = vunpack.c.l.b16 %v513
      %v1799 = vunpack.c.l.b16 %v514
      %v1800 = vunpack.c.h.b16 %v514
      %v1801 = vunpack.c.l.b16 %v515
      %v1802 = vunpack.c.l.b16 %v516
      %v1803 = vunpack.c.h.b16 %v516
      %v1804 = vunpack.c.l.b16 %v517
      %v1805 = vunpack.c.l.b16 %v518
      %v1806 = vunpack.c.h.b16 %v518
      %v1807 = vunpack.c.l.b16 %v519
      %v1808 = vunpack.c.l.b16 %v520
      %v1809 = vunpack.c.h.b16 %v520
      %v1810 = vunpack.c.l.b16 %v521
      %v1811 = vunpack.c.l.b16 %v522
      %v1812 = vunpack.c.h.b16 %v522
      %v1813 = vunpack.c.l.b16 %v523
      %v1814 = vunpack.c.l.b16 %v524
      %v1815 = vunpack.c.h.b16 %v524
      %v1816 = vunpack.c.l.b16 %v525
      %v1817 = vunpack.c.l.b16 %v526
      %v1818 = vunpack.c.h.b16 %v526
      %v1819 = vunpack.c.l.b16 %v527
      %v1820 = vunpack.c.l.b16 %v528
      %v1821 = vunpack.c.h.b16 %v528
      %v1822 = vunpack.c.l.b16 %v529
      %v1823 = vunpack.c.l.b16 %v530
      %v1824 = vunpack.c.h.b16 %v530
      %v1825 = vunpack.c.l.b16 %v531
      %v1826 = vunpack.c.l.b16 %v532
      %v1827 = vunpack.c.h.b16 %v532
      %v1828 = vunpack.c.l.b16 %v533
      %v1829 = vunpack.c.l.b16 %v534
      %v1830 = vunpack.c.h.b16 %v534
      %v1831 = vunpack.c.l.b16 %v535
      %v1832 = vunpack.c.l.b16 %v536
      %v1833 = vunpack.c.h.b16 %v536
      %v1834 = vunpack.c.l.b16 %v537
      %v1835 = vunpack.c.l.b16 %v538
      %v1836 = vunpack.c.h.b16 %v538
      %v1837 = vunpack.c.l.b16 %v539
      %v1838 = vunpack.c.l.b16 %v540
      %v1839 = vunpack.c.h.b16 %v540
      %v1840 = vunpack.c.l.b16 %v541
      %v1841 = vunpack.c.l.b16 %v542
      %v1842 = vunpack.c.h.b16 %v542
      %v1843 = vunpack.c.l.b16 %v543
      %v1844 = vunpack.c.l.b16 %v544
      %v1845 = vunpack.c.h.b16 %v544
      %v1846 = vunpack.c.l.b16 %v545
      %v1847 = vunpack.c.l.b16 %v546
      %v1848 = vunpack.c.h.b16 %v546
      %v1849 = vunpack.c.l.b16 %v547
      %v1850 = vunpack.c.l.b16 %v548
      %v1851 = vunpack.c.h.b16 %v548
      %v1852 = vunpack.c.l.b16 %v549
      %v1853 = vunpack.c.l.b16 %v550
      %v1854 = vunpack.c.h.b16 %v550
      %v1855 = vunpack.c.l.b16 %v551
      %v1856 = vunpack.c.l.b16 %v552
      %v1857 = vunpack.c.h.b16 %v552
      %v1858 = vunpack.c.l.b16 %v553
      %v1859 = vunpack.c.l.b16 %v554
      %v1860 = vunpack.c.h.b16 %v554
      %v1861 = vunpack.c.l.b16 %v555
      %v1862 = vunpack.c.l.b16 %v556
      %v1863 = vunpack.c.h.b16 %v556
      %v1864 = vunpack.c.l.b16 %v557
      %v1865 = vunpack.c.l.b16 %v558
      %v1866 = vunpack.c.h.b16 %v558
      %v1867 = vunpack.c.l.b16 %v559
      %v1868 = vunpack.c.l.b16 %v560
      %v1869 = vunpack.c.h.b16 %v560
      %v1870 = vunpack.c.l.b16 %v561
      %v1871 = vunpack.c.l.b16 %v562
      %v1872 = vunpack.c.h.b16 %v562
      %v1873 = vunpack.c.l.b16 %v563
      %v1874 = vunpack.c.l.b16 %v564
      %v1875 = vunpack.c.h.b16 %v564
      %v1876 = vunpack.c.l.b16 %v565
      %v1877 = vunpack.c.l.b16 %v566
      %v1878 = vunpack.c.h.b16 %v566
      %v1879 = vunpack.c.l.b16 %v567
      %v1880 = vunpack.c.l.b16 %v568
      %v1881 = vunpack.c.h.b16 %v568
      %v1882 = vunpack.c.l.b16 %v569
      %v1883 = vunpack.c.l.b16 %v570
      %v1884 = vunpack.c.h.b16 %v570
      %v1885 = vunpack.c.l.b16 %v571
      %v1886 = vunpack.c.l.b16 %v572
      %v1887 = vunpack.c.h.b16 %v572
      %v1888 = vunpack.c.l.b16 %v573
      %v1889 = vunpack.c.l.b16 %v574
      %v1890 = vunpack.c.h.b16 %v574
      %v1891 = vunpack.c.l.b16 %v575
      %v1892 = vunpack.c.l.b16 %v576
      %v1893 = vunpack.c.h.b16 %v576
      %v1894 = vunpack.c.l.b16 %v577
      %v1895 = vunpack.c.l.b16 %v578
      %v1896 = vunpack.c.h.b16 %v578
      %v1897 = vunpack.c.l.b16 %v579
      %v1898 = vunpack.c.l.b16 %v580
      %v1899 = vunpack.c.h.b16 %v580
      %v1900 = vunpack.c.l.b16 %v581
      %v1901 = vunpack.c.l.b16 %v582
      %v1902 = vunpack.c.h.b16 %v582
      %v1903 = vunpack.c.l.b16 %v583
      %v1904 = vunpack.c.l.b16 %v584
      %v1905 = vunpack.c.h.b16 %v584
      %v1906 = vunpack.c.l.b16 %v585
      %v1907 = vunpack.c.l.b16 %v586
      %v1908 = vunpack.c.h.b16 %v586
      %v1909 = vunpack.c.l.b16 %v587
      %v1910 = vunpack.c.l.b16 %v588
      %v1911 = vunpack.c.h.b16 %v588
      %v1912 = vunpack.c.l.b16 %v589
      %v1913 = vunpack.c.l.b16 %v590
      %v1914 = vunpack.c.h.b16 %v590
      %v1915 = vunpack.c.l.b16 %v591
      %v1916 = vunpack.c.l.b16 %v592
      %v1917 = vunpack.c.h.b16 %v592
      %v1918 = vunpack.c.l.b16 %v593
      %v1919 = vunpack.c.l.b16 %v594
      %v1920 = vunpack.c.h.b16 %v594
      %v1921 = vunpack.c.l.b16 %v595
      %v1922 = vunpack.c.l.b16 %v596
      %v1923 = vunpack.c.h.b16 %v596
      %v1924 = vunpack.c.l.b16 %v597
      %v1925 = vunpack.c.l.b16 %v598
      %v1926 = vunpack.c.h.b16 %v598
      %v1927 = vunpack.c.l.b16 %v599
      %v1928 = vunpack.c.l.b16 %v600
      %v1929 = vunpack.c.h.b16 %v600
      %v1930 = vunpack.c.l.b16 %v601
      %v1931 = vunpack.c.l.b16 %v602
      %v1932 = vunpack.c.h.b16 %v602
      %v1933 = vunpack.c.l.b16 %v603
      %v1934 = vunpack.c.l.b16 %v604
      %v1935 = vunpack.c.h.b16 %v604
      %v1936 = vunpack.c.l.b16 %v605
      %v1937 = vunpack.c.l.b16 %v606
      %v1938 = vunpack.c.h.b16 %v606
      %v1939 = vunpack.c.l.b16 %v607
      %v1940 = vunpack.c.l.b16 %v608
      %v1941 = vunpack.c.h.b16 %v608
      %v1942 = vunpack.c.l.b16 %v609
      %v1943 = vunpack.c.l.b16 %v610
      %v1944 = vunpack.c.h.b16 %v610
      %v1945 = vunpack.c.l.b16 %v611
      %v1946 = vunpack.c.l.b16 %v612
      %v1947 = vunpack.c.h.b16 %v612
      %v1948 = vunpack.c.l.b16 %v613
      %v1949 = vunpack.c.l.b16 %v614
      %v1950 = vunpack.c.h.b16 %v614
      %v1951 = vunpack.c.l.b16 %v615
      %v1952 = vunpack.c.l.b16 %v616
      %v1953 = vunpack.c.h.b16 %v616
      %v1954 = vunpack.c.l.b16 %v617
      %v1955 = vunpack.c.l.b16 %v618
      %v1956 = vunpack.c.h.b16 %v618
      %v1957 = vunpack.c.l.b16 %v619
      %v1958 = vunpack.c.l.b16 %v620
      %v1959 = vunpack.c.h.b16 %v620
      %v1960 = vunpack.c.l.b16 %v621
      %v1961 = vunpack.c.l.b16 %v622
      %v1962 = vunpack.c.h.b16 %v622
      %v1963 = vunpack.c.l.b16 %v623
      %v1964 = vunpack.c.l.b16 %v624
      %v1965 = vunpack.c.h.b16 %v624
      %v1966 = vunpack.c.l.b16 %v625
      %v1967 = vunpack.c.l.b16 %v626
      %v1968 = vunpack.c.h.b16 %v626
      %v1969 = vunpack.c.l.b16 %v627
      %v1970 = vunpack.c.l.b16 %v628
      %v1971 = vunpack.c.h.b16 %v628
      %v1972 = vunpack.c.l.b16 %v629
      %v1973 = vunpack.c.l.b16 %v630
      %v1974 = vunpack.c.h.b16 %v630
      %v1975 = vunpack.c.l.b16 %v631
      %v1976 = vunpack.c.l.b16 %v632
      %v1977 = vunpack.c.h.b16 %v632
      %v1978 = vunpack.c.l.b16 %v633
      %v1979 = vunpack.c.l.b16 %v634
      %v1980 = vunpack.c.h.b16 %v634
      %v1981 = vunpack.c.l.b16 %v635
      %v1982 = vunpack.c.l.b16 %v636
      %v1983 = vunpack.c.h.b16 %v636
      %v1984 = vunpack.c.l.b16 %v637
      %v1985 = vunpack.c.l.b16 %v638
      %v1986 = vunpack.c.h.b16 %v638
      %v1987 = vunpack.c.l.b16 %v639
      %v1988 = vunpack.c.l.b16 %v640
      %v1989 = vunpack.c.h.b16 %v640
      %v1990 = vunpack.c.l.b16 %v641
      %v1991 = vunpack.c.l.b16 %v642
      %v1992 = vunpack.c.h.b16 %v642
      %v1993 = vunpack.c.l.b16 %v643
      %v1994 = vunpack.c.l.b16 %v644
      %v1995 = vunpack.c.h.b16 %v644
      %v1996 = vunpack.c.l.b16 %v645
      %v1997 = vunpack.c.l.b16 %v646
      %v1998 = vunpack.c.h.b16 %v646
      %v1999 = vunpack.c.l.b16 %v647
      %v2000 = vunpack.c.l.b16 %v648
      %v2001 = vunpack.c.h.b16 %v648
      %v2002 = vunpack.c.l.b16 %v649
      %v2003 = vunpack.c.l.b16 %v650
      %v2004 = vunpack.c.h.b16 %v650
      %v2005 = vunpack.c.l.b16 %v651
      %v2006 = vunpack.c.l.b16 %v652
      %v2007 = vunpack.c.h.b16 %v652
      %v2008 = vunpack.c.l.b16 %v653
      %v2009 = vunpack.c.l.b16 %v654
      %v2010 = vunpack.c.h.b16 %v654
      %v2011 = vunpack.c.l.b16 %v655
      %v2012 = vunpack.c.l.b16 %v656
      %v2013 = vunpack.c.h.b16 %v656
      %v2014 = vunpack.c.l.b16 %v657
      %v2015 = vunpack.c.l.b16 %v658
      %v2016 = vunpack.c.h.b16 %v658
      %v2017 = vunpack.c.l.b16 %v659
      %v2018 = vunpack.c.l.b16 %v660
      %v2019 = vunpack.c.h.b16 %v660
      %v2020 = vunpack.c.l.b16 %v661
      %v2021 = vunpack.c.l.b16 %v662
      %v2022 = vunpack.c.h.b16 %v662
      %v2023 = vunpack.c.l.b16 %v663
      %v2024 = vunpack.c.l.b16 %v664
      %v2025 = vunpack.c.h.b16 %v664
      %v2026 = vunpack.c.l.b16 %v665
      %v2027 = vunpack.c.l.b16 %v666
      %v2028 = vunpack.c.h.b16 %v666
      %v2029 = vunpack.c.l.b16 %v667
      %v2030 = vunpack.c.l.b16 %v668
      %v2031 = vunpack.c.h.b16 %v668
      %v2032 = vunpack.c.l.b16 %v669
      %v2033 = vunpack.c.l.b16 %v670
      %v2034 = vunpack.c.h.b16 %v670
      %v2035 = vunpack.c.l.b16 %v671
      %v2036 = vunpack.c.l.b16 %v672
      %v2037 = vunpack.c.h.b16 %v672
      %v2038 = vunpack.c.l.b16 %v673
      %v2039 = vunpack.c.l.b16 %v674
      %v2040 = vunpack.c.h.b16 %v674
      %v2041 = vunpack.c.l.b16 %v675
      %v2042 = vunpack.c.l.b16 %v676
      %v2043 = vunpack.c.h.b16 %v676
      %v2044 = vunpack.c.l.b16 %v677
      %v2045 = vunpack.c.l.b16 %v678
      %v2046 = vunpack.c.h.b16 %v678
      %v2047 = vunpack.c.l.b16 %v679
      %v2048 = vunpack.c.l.b16 %v680
      %v2049 = vunpack.c.h.b16 %v680
      %v2050 = vunpack.c.l.b16 %v681
      %v2051 = vunpack.c.l.b16 %v682
      %v2052 = vunpack.c.h.b16 %v682
      %v2053 = vunpack.c.l.b16 %v683
      %v2054 = vunpack.c.l.b16 %v684
      %v2055 = vunpack.c.h.b16 %v684
      %v2056 = vunpack.c.l.b16 %v685
      %v2057 = vunpack.c.l.b16 %v686
      %v2058 = vunpack.c.h.b16 %v686
      %v2059 = vunpack.c.l.b16 %v687
      %v2060 = vunpack.c.l.b16 %v688
      %v2061 = vunpack.c.h.b16 %v688
      %v2062 = vunpack.c.l.b16 %v689
      %v2063 = vunpack.c.l.b16 %v690
      %v2064 = vunpack.c.h.b16 %v690
      %v2065 = vunpack.c.l.b16 %v691
      %v2066 = vunpack.c.l.b16 %v692
      %v2067 = vunpack.c.h.b16 %v692
      %v2068 = vunpack.c.l.b16 %v693
      %v2069 = vunpack.c.l.b16 %v694
      %v2070 = vunpack.c.h.b16 %v694
      %v2071 = vunpack.c.l.b16 %v695
      %v2072 = vunpack.c.l.b16 %v696
      %v2073 = vunpack.c.h.b16 %v696
      %v2074 = vunpack.c.l.b16 %v697
      %v2075 = vunpack.c.l.b16 %v698
      %v2076 = vunpack.c.h.b16 %v698
      %v2077 = vunpack.c.l.b16 %v699
      %v2078 = vunpack.c.l.b16 %v700
      %v2079 = vunpack.c.h.b16 %v700
      %v2080 = vunpack.c.l.b16 %v701
      %v2081 = vunpack.c.l.b16 %v702
      %v2082 = vunpack.c.h.b16 %v702
      %v2083 = vunpack.c.l.b16 %v703
      %v2084 = vunpack.c.l.b16 %v704
      %v2085 = vunpack.c.h.b16 %v704
      %v2086 = vunpack.c.l.b16 %v705
      %v2087 = vunpack.c.l.b16 %v706
      %v2088 = vunpack.c.h.b16 %v706
      %v2089 = vunpack.c.l.b16 %v707
      %v2090 = vunpack.c.l.b16 %v708
      %v2091 = vunpack.c.h.b16 %v708
      %v2092 = vunpack.c.l.b16 %v709
      %v2093 = vunpack.c.l.b16 %v710
      %v2094 = vunpack.c.h.b16 %v710
      %v2095 = vunpack.c.l.b16 %v711
      %v2096 = vunpack.c.l.b16 %v712
      %v2097 = vunpack.c.h.b16 %v712
      %v2098 = vunpack.c.l.b16 %v713
      %v2099 = vunpack.c.l.b16 %v714
      %v2100 = vunpack.c.h.b16 %v714
      %v2101 = vunpack.c.l.b16 %v715
      %v2102 = vunpack.c.l.b16 %v716
      %v2103 = vunpack.c.h.b16 %v716
      %v2104 = vunpack.c.l.b16 %v717
      %v2105 = vunpack.c.l.b16 %v718
      %v2106 = vunpack.c.h.b16 %v718
      %v2107 = vunpack.c.l.b16 %v719
      %v2108 = vunpack.c.l.b16 %v720
      %v2109 = vunpack.c.h.b16 %v720
      %v2110 = vunpack.c.l.b16 %v721
      %v2111 = vunpack.c.l.b16 %v722
      %v2112 = vunpack.c.h.b16 %v722
      %v2113 = vunpack.c.l.b16 %v723
      %v2114 = vunpack.c.l.b16 %v724
      %v2115 = vunpack.c.h.b16 %v724
      %v2116 = vunpack.c.l.b16 %v725
      %v2117 = vunpack.c.l.b16 %v726
      %v2118 = vunpack.c.h.b16 %v726
      %v2119 = vunpack.c.l.b16 %v727
      %v2120 = vunpack.c.l.b16 %v728
      %v2121 = vunpack.c.h.b16 %v728
      %v2122 = vunpack.c.l.b16 %v729
      %v2123 = vunpack.c.l.b16 %v730
      %v2124 = vunpack.c.h.b16 %v730
      %v2125 = vunpack.c.l.b16 %v731
      %v2126 = vunpack.c.l.b16 %v732
      %v2127 = vunpack.c.h.b16 %v732
      %v2128 = vunpack.c.l.b16 %v733
      %v2129 = vunpack.c.l.b16 %v734
      %v2130 = vunpack.c.h.b16 %v734
      %v2131 = vunpack.c.l.b16 %v735
      %v2132 = vunpack.c.l.b16 %v736
      %v2133 = vunpack.c.h.b16 %v736
      %v2134 = vunpack.c.l.b16 %v737
      %v2135 = vunpack.c.l.b16 %v738
      %v2136 = vunpack.c.h.b16 %v738
      %v2137 = vunpack.c.l.b16 %v739
      %v2138 = vunpack.c.l.b16 %v740
      %v2139 = vunpack.c.h.b16 %v740
      %v2140 = vunpack.c.l.b16 %v741
      %v2141 = vunpack.c.l.b16 %v742
      %v2142 = vunpack.c.h.b16 %v742
      %v2143 = vunpack.c.l.b16 %v743
      %v2144 = vunpack.c.l.b16 %v744
      %v2145 = vunpack.c.h.b16 %v744
      %v2146 = vunpack.c.l.b16 %v745
      %v2147 = vunpack.c.l.b16 %v746
      %v2148 = vunpack.c.h.b16 %v746
      %v2149 = vunpack.c.l.b16 %v747
      %v2150 = vunpack.c.l.b16 %v748
      %v2151 = vunpack.c.h.b16 %v748
      %v2152 = vunpack.c.l.b16 %v749
      %v2153 = vunpack.c.l.b16 %v750
      %v2154 = vunpack.c.h.b16 %v750
      %v2155 = vunpack.c.l.b16 %v751
      %v2156 = vunpack.c.l.b16 %v752
      %v2157 = vunpack.c.h.b16 %v752
      %v2158 = vunpack.c.l.b16 %v753
      %v2159 = vunpack.c.l.b16 %v754
      %v2160 = vunpack.c.h.b16 %v754
      %v2161 = vunpack.c.l.b16 %v755
      %v2162 = vunpack.c.l.b16 %v756
      %v2163 = vunpack.c.h.b16 %v756
      %v2164 = vunpack.c.l.b16 %v757
      %v2165 = vunpack.c.l.b16 %v758
      %v2166 = vunpack.c.h.b16 %v758
      %v2167 = vunpack.c.l.b16 %v759
      %v2168 = vunpack.c.l.b16 %v760
      %v2169 = vunpack.c.h.b16 %v760
      %v2170 = vunpack.c.l.b16 %v761
      %v2171 = vunpack.c.l.b16 %v762
      %v2172 = vunpack.c.h.b16 %v762
      %v2173 = vunpack.c.l.b16 %v763
      %v2174 = vunpack.c.l.b16 %v764
      %v2175 = vunpack.c.h.b16 %v764
      %v2176 = vunpack.c.l.b16 %v765
      %v2177 = vunpack.c.l.b16 %v766
      %v2178 = vunpack.c.h.b16 %v766
      %v2179 = vunpack.c.l.b16 %v767
      %v2180 = vunpack.c.l.b16 %v768
      %v2181 = vunpack.c.h.b16 %v768
      %v2182 = vunpack.c.l.b16 %v769
      %v2183 = vunpack.c.l.b16 %v770
      %v2184 = vunpack.c.h.b16 %v770
      %v2185 = vunpack.c.l.b16 %v771
      %v2186 = vunpack.c.l.b16 %v772
      %v2187 = vunpack.c.h.b16 %v772
      %v2188 = vunpack.c.l.b16 %v773
      %v2189 = vunpack.c.l.b16 %v774
      %v2190 = vunpack.c.h.b16 %v774
      %v2191 = vunpack.c.l.b16 %v775
      %v2192 = vunpack.c.l.b16 %v776
      %v2193 = vunpack.c.h.b16 %v776
      %v2194 = vunpack.c.l.b16 %v777
      %v2195 = vunpack.c.l.b16 %v778
      %v2196 = vunpack.c.h.b16 %v778
      %v2197 = vunpack.c.l.b16 %v779
      %v2198 = vunpack.c.l.b16 %v780
      %v2199 = vunpack.c.h.b16 %v780
      %v2200 = vunpack.c.l.b16 %v781
      %v2201 = vunpack.c.l.b16 %v782
      %v2202 = vunpack.c.h.b16 %v782
      %v2203 = vunpack.c.l.b16 %v783
      %v2204 = vunpack.c.l.b16 %v784
      %v2205 = vunpack.c.h.b16 %v784
      %v2206 = vunpack.c.l.b16 %v785
      %v2207 = vunpack.c.l.b16 %v786
      %v2208 = vunpack.c.h.b16 %v786
      %v2209 = vunpack.c.l.b16 %v787
      %v2210 = vunpack.c.l.b16 %v788
      %v2211 = vunpack.c.h.b16 %v788
      %v2212 = vunpack.c.l.b16 %v789
      %v2213 = vunpack.c.l.b16 %v790
      %v2214 = vunpack.c.h.b16 %v790
      %v2215 = vunpack.c.l.b16 %v791
      %v2216 = vunpack.c.l.b16 %v792
      %v2217 = vunpack.c.h.b16 %v792
      %v2218 = vunpack.c.l.b16 %v793
      %v2219 = vunpack.c.l.b16 %v794
      %v2220 = vunpack.c.h.b16 %v794
      %v2221 = vunpack.c.l.b16 %v795
      %v2222 = vunpack.c.l.b16 %v796
      %v2223 = vunpack.c.h.b16 %v796
      %v2224 = vunpack.c.l.b16 %v797
      %v2225 = vunpack.c.l.b16 %v798
      %v2226 = vunpack.c.h.b16 %v798
      %v2227 = vunpack.c.l.b16 %v799
      %v2228 = vunpack.c.l.b16 %v800
      %v2229 = vunpack.c.h.b16 %v800
      %v2230 = vunpack.c.l.b16 %v801
      %v2231 = vunpack.c.l.b16 %v802
      %v2232 = vunpack.c.h.b16 %v802
      %v2233 = vunpack.c.l.b16 %v803
      %v2234 = vunpack.c.l.b16 %v804
      %v2235 = vunpack.c.h.b16 %v804
      %v2236 = vunpack.c.l.b16 %v805
      %v2237 = vunpack.c.l.b16 %v806
      %v2238 = vunpack.c.h.b16 %v806
      %v2239 = vunpack.c.l.b16 %v807
      %v2240 = vunpack.c.l.b16 %v808
      %v2241 = vunpack.c.h.b16 %v808
      %v2242 = vunpack.c.l.b16 %v809
      %v2243 = vunpack.c.l.b16 %v810
      %v2244 = vunpack.c.h.b16 %v810
      %v2245 = vunpack.c.l.b16 %v811
      %v2246 = vunpack.c.l.b16 %v812
      %v2247 = vunpack.c.h.b16 %v812
      %v2248 = vunpack.c.l.b16 %v813
      %v2249 = vunpack.c.l.b16 %v814
      %v2250 = vunpack.c.h.b16 %v814
      %v2251 = vunpack.c.l.b16 %v815
      %v2252 = vunpack.c.l.b16 %v816
      %v2253 = vunpack.c.h.b16 %v816
      %v2254 = vunpack.c.l.b16 %v817
      %v2255 = vunpack.c.l.b16 %v818
      %v2256 = vunpack.c.h.b16 %v818
      %v2257 = vunpack.c.l.b16 %v819
      %v2258 = vunpack.c.l.b16 %v820
      %v2259 = vunpack.c.h.b16 %v820
      %v2260 = vunpack.c.l.b16 %v821
      %v2261 = vunpack.c.l.b16 %v822
      %v2262 = vunpack.c.h.b16 %v822
      %v2263 = vunpack.c.l.b16 %v823
      %v2264 = vpack.c.b16 %v1499, %v1496
      %v2265 = vpack.c.b16 %v1500, %v1497
      %v2266 = vpack.c.b16 %v1501, %v1498
      %v2267 = vpack.c.b16 %v1505, %v1502
      %v2268 = vpack.c.b16 %v1506, %v1503
      %v2269 = vpack.c.b16 %v1507, %v1504
      %v2270 = vpack.c.b16 %v1511, %v1508
      %v2271 = vpack.c.b16 %v1512, %v1509
      %v2272 = vpack.c.b16 %v1513, %v1510
      %v2273 = vpack.c.b16 %v1517, %v1514
      %v2274 = vpack.c.b16 %v1518, %v1515
      %v2275 = vpack.c.b16 %v1519, %v1516
      %v2276 = vpack.c.b16 %v1523, %v1520
      %v2277 = vpack.c.b16 %v1524, %v1521
      %v2278 = vpack.c.b16 %v1525, %v1522
      %v2279 = vpack.c.b16 %v1529, %v1526
      %v2280 = vpack.c.b16 %v1530, %v1527
      %v2281 = vpack.c.b16 %v1531, %v1528
      %v2282 = vpack.c.b16 %v1535, %v1532
      %v2283 = vpack.c.b16 %v1536, %v1533
      %v2284 = vpack.c.b16 %v1537, %v1534
      %v2285 = vpack.c.b16 %v1541, %v1538
      %v2286 = vpack.c.b16 %v1542, %v1539
      %v2287 = vpack.c.b16 %v1543, %v1540
      %v2288 = vpack.c.b16 %v1547, %v1544
      %v2289 = vpack.c.b16 %v1548, %v1545
      %v2290 = vpack.c.b16 %v1549, %v1546
      %v2291 = vpack.c.b16 %v1553, %v1550
      %v2292 = vpack.c.b16 %v1554, %v1551
      %v2293 = vpack.c.b16 %v1555, %v1552
      %v2294 = vpack.c.b16 %v1559, %v1556
      %v2295 = vpack.c.b16 %v1560, %v1557
      %v2296 = vpack.c.b16 %v1561, %v1558
      %v2297 = vpack.c.b16 %v1565, %v1562
      %v2298 = vpack.c.b16 %v1566, %v1563
      %v2299 = vpack.c.b16 %v1567, %v1564
      %v2300 = vpack.c.b16 %v1571, %v1568
      %v2301 = vpack.c.b16 %v1572, %v1569
      %v2302 = vpack.c.b16 %v1573, %v1570
      %v2303 = vpack.c.b16 %v1577, %v1574
      %v2304 = vpack.c.b16 %v1578, %v1575
      %v2305 = vpack.c.b16 %v1579, %v1576
      %v2306 = vpack.c.b16 %v1583, %v1580
      %v2307 = vpack.c.b16 %v1584, %v1581
      %v2308 = vpack.c.b16 %v1585, %v1582
      %v2309 = vpack.c.b16 %v1589, %v1586
      %v2310 = vpack.c.b16 %v1590, %v1587
      %v2311 = vpack.c.b16 %v1591, %v1588
      %v2312 = vpack.c.b16 %v1595, %v1592
      %v2313 = vpack.c.b16 %v1596, %v1593
      %v2314 = vpack.c.b16 %v1597, %v1594
      %v2315 = vpack.c.b16 %v1601, %v1598
      %v2316 = vpack.c.b16 %v1602, %v1599
      %v2317 = vpack.c.b16 %v1603, %v1600
      %v2318 = vpack.c.b16 %v1607, %v1604
      %v2319 = vpack.c.b16 %v1608, %v1605
      %v2320 = vpack.c.b16 %v1609, %v1606
      %v2321 = vpack.c.b16 %v1613, %v1610
      %v2322 = vpack.c.b16 %v1614, %v1611
      %v2323 = vpack.c.b16 %v1615, %v1612
      %v2324 = vpack.c.b16 %v1619, %v1616
      %v2325 = vpack.c.b16 %v1620, %v1617
      %v2326 = vpack.c.b16 %v1621, %v1618
      %v2327 = vpack.c.b16 %v1625, %v1622
      %v2328 = vpack.c.b16 %v1626, %v1623
      %v2329 = vpack.c.b16 %v1627, %v1624
      %v2330 = vpack.c.b16 %v1631, %v1628
      %v2331 = vpack.c.b16 %v1632, %v1629
      %v2332 = vpack.c.b16 %v1633, %v1630
      %v2333 = vpack.c.b16 %v1637, %v1634
      %v2334 = vpack.c.b16 %v1638, %v1635
      %v2335 = vpack.c.b16 %v1639, %v1636
      %v2336 = vpack.c.b16 %v1643, %v1640
      %v2337 = vpack.c.b16 %v1644, %v1641
      %v2338 = vpack.c.b16 %v1645, %v1642
      %v2339 = vpack.c.b16 %v1649, %v1646
      %v2340 = vpack.c.b16 %v1650, %v1647
      %v2341 = vpack.c.b16 %v1651, %v1648
      %v2342 = vpack.c.b16 %v1655, %v1652
      %v2343 = vpack.c.b16 %v1656, %v1653
      %v2344 = vpack.c.b16 %v1657, %v1654
      %v2345 = vpack.c.b16 %v1661, %v1658
      %v2346 = vpack.c.b16 %v1662, %v1659
      %v2347 = vpack.c.b16 %v1663, %v1660
      %v2348 = vpack.c.b16 %v1667, %v1664
      %v2349 = vpack.c.b16 %v1668, %v1665
      %v2350 = vpack.c.b16 %v1669, %v1666
      %v2351 = vpack.c.b16 %v1673, %v1670
      %v2352 = vpack.c.b16 %v1674, %v1671
      %v2353 = vpack.c.b16 %v1675, %v1672
      %v2354 = vpack.c.b16 %v1679, %v1676
      %v2355 = vpack.c.b16 %v1680, %v1677
      %v2356 = vpack.c.b16 %v1681, %v1678
      %v2357 = vpack.c.b16 %v1685, %v1682
      %v2358 = vpack.c.b16 %v1686, %v1683
      %v2359 = vpack.c.b16 %v1687, %v1684
      %v2360 = vpack.c.b16 %v1691, %v1688
      %v2361 = vpack.c.b16 %v1692, %v1689
      %v2362 = vpack.c.b16 %v1693, %v1690
      %v2363 = vpack.c.b16 %v1697, %v1694
      %v2364 = vpack.c.b16 %v1698, %v1695
      %v2365 = vpack.c.b16 %v1699, %v1696
      %v2366 = vpack.c.b16 %v1703, %v1700
      %v2367 = vpack.c.b16 %v1704, %v1701
      %v2368 = vpack.c.b16 %v1705, %v1702
      %v2369 = vpack.c.b16 %v1709, %v1706
      %v2370 = vpack.c.b16 %v1710, %v1707
      %v2371 = vpack.c.b16 %v1711, %v1708
      %v2372 = vpack.c.b16 %v1715, %v1712
      %v2373 = vpack.c.b16 %v1716, %v1713
      %v2374 = vpack.c.b16 %v1717, %v1714
      %v2375 = vpack.c.b16 %v1721, %v1718
      %v2376 = vpack.c.b16 %v1722, %v1719
      %v2377 = vpack.c.b16 %v1723, %v1720
      %v2378 = vpack.c.b16 %v1727, %v1724
      %v2379 = vpack.c.b16 %v1728, %v1725
      %v2380 = vpack.c.b16 %v1729, %v1726
      %v2381 = vpack.c.b16 %v1733, %v1730
      %v2382 = vpack.c.b16 %v1734, %v1731
      %v2383 = vpack.c.b16 %v1735, %v1732
      %v2384 = vpack.c.b16 %v1739, %v1736
      %v2385 = vpack.c.b16 %v1740, %v1737
      %v2386 = vpack.c.b16 %v1741, %v1738
      %v2387 = vpack.c.b16 %v1745, %v1742
      %v2388 = vpack.c.b16 %v1746, %v1743
      %v2389 = vpack.c.b16 %v1747, %v1744
      %v2390 = vpack.c.b16 %v1751, %v1748
      %v2391 = vpack.c.b16 %v1752, %v1749
      %v2392 = vpack.c.b16 %v1753, %v1750
      %v2393 = vpack.c.b16 %v1757, %v1754
      %v2394 = vpack.c.b16 %v1758, %v1755
      %v2395 = vpack.c.b16 %v1759, %v1756
      %v2396 = vpack.c.b16 %v1763, %v1760
      %v2397 = vpack.c.b16 %v1764, %v1761
      %v2398 = vpack.c.b16 %v1765, %v1762
      %v2399 = vpack.c.b16 %v1769, %v1766
      %v2400 = vpack.c.b16 %v1770, %v1767
      %v2401 = vpack.c.b16 %v1771, %v1768
      %v2402 = vpack.c.b16 %v1775, %v1772
      %v2403 = vpack.c.b16 %v1776, %v1773
      %v2404 = vpack.c.b16 %v1777, %v1774
      %v2405 = vpack.c.b16 %v1781, %v1778
      %v2406 = vpack.c.b16 %v1782, %v1779
      %v2407 = vpack.c.b16 %v1783, %v1780
      %v2408 = vpack.c.b16 %v1787, %v1784
      %v2409 = vpack.c.b16 %v1788, %v1785
      %v2410 = vpack.c.b16 %v1789, %v1786
      %v2411 = vpack.c.b16 %v1793, %v1790
      %v2412 = vpack.c.b16 %v1794, %v1791
      %v2413 = vpack.c.b16 %v1795, %v1792
      %v2414 = vpack.c.b16 %v1799, %v1796
      %v2415 = vpack.c.b16 %v1800, %v1797
      %v2416 = vpack.c.b16 %v1801, %v1798
      %v2417 = vpack.c.b16 %v1805, %v1802
      %v2418 = vpack.c.b16 %v1806, %v1803
      %v2419 = vpack.c.b16 %v1807, %v1804
      %v2420 = vpack.c.b16 %v1811, %v1808
      %v2421 = vpack.c.b16 %v1812, %v1809
      %v2422 = vpack.c.b16 %v1813, %v1810
      %v2423 = vpack.c.b16 %v1817, %v1814
      %v2424 = vpack.c.b16 %v1818, %v1815
      %v2425 = vpack.c.b16 %v1819, %v1816
      %v2426 = vpack.c.b16 %v1823, %v1820
      %v2427 = vpack.c.b16 %v1824, %v1821
      %v2428 = vpack.c.b16 %v1825, %v1822
      %v2429 = vpack.c.b16 %v1829, %v1826
      %v2430 = vpack.c.b16 %v1830, %v1827
      %v2431 = vpack.c.b16 %v1831, %v1828
      %v2432 = vpack.c.b16 %v1835, %v1832
      %v2433 = vpack.c.b16 %v1836, %v1833
      %v2434 = vpack.c.b16 %v1837, %v1834
      %v2435 = vpack.c.b16 %v1841, %v1838
      %v2436 = vpack.c.b16 %v1842, %v1839
      %v2437 = vpack.c.b16 %v1843, %v1840
      %v2438 = vpack.c.b16 %v1847, %v1844
      %v2439 = vpack.c.b16 %v1848, %v1845
      %v2440 = vpack.c.b16 %v1849, %v1846
      %v2441 = vpack.c.b16 %v1853, %v1850
      %v2442 = vpack.c.b16 %v1854, %v1851
      %v2443 = vpack.c.b16 %v1855, %v1852
      %v2444 = vpack.c.b16 %v1859, %v1856
      %v2445 = vpack.c.b16 %v1860, %v1857
      %v2446 = vpack.c.b16 %v1861, %v1858
      %v2447 = vpack.c.b16 %v1865, %v1862
      %v2448 = vpack.c.b16 %v1866, %v1863
      %v2449 = vpack.c.b16 %v1867, %v1864
      %v2450 = vpack.c.b16 %v1871, %v1868
      %v2451 = vpack.c.b16 %v1872, %v1869
      %v2452 = vpack.c.b16 %v1873, %v1870
      %v2453 = vpack.c.b16 %v1877, %v1874
      %v2454 = vpack.c.b16 %v1878, %v1875
      %v2455 = vpack.c.b16 %v1879, %v1876
      %v2456 = vpack.c.b16 %v1883, %v1880
      %v2457 = vpack.c.b16 %v1884, %v1881
      %v2458 = vpack.c.b16 %v1885, %v1882
      %v2459 = vpack.c.b16 %v1889, %v1886
      %v2460 = vpack.c.b16 %v1890, %v1887
      %v2461 = vpack.c.b16 %v1891, %v1888
      %v2462 = vpack.c.b16 %v1895, %v1892
      %v2463 = vpack.c.b16 %v1896, %v1893
      %v2464 = vpack.c.b16 %v1897, %v1894
      %v2465 = vpack.c.b16 %v1901, %v1898
      %v2466 = vpack.c.b16 %v1902, %v1899
      %v2467 = vpack.c.b16 %v1903, %v1900
      %v2468 = vpack.c.b16 %v1907, %v1904
      %v2469 = vpack.c.b16 %v1908, %v1905
      %v2470 = vpack.c.b16 %v1909, %v1906
      %v2471 = vpack.c.b16 %v1913, %v1910
      %v2472 = vpack.c.b16 %v1914, %v1911
      %v2473 = vpack.c.b16 %v1915, %v1912
      %v2474 = vpack.c.b16 %v1919, %v1916
      %v2475 = vpack.c.b16 %v1920, %v1917
      %v2476 = vpack.c.b16 %v1921, %v1918
      %v2477 = vpack.c.b16 %v1925, %v1922
      %v2478 = vpack.c.b16 %v1926, %v1923
      %v2479 = vpack.c.b16 %v1927, %v1924
      %v2480 = vpack.c.b16 %v1931, %v1928
      %v2481 = vpack.c.b16 %v1932, %v1929
      %v2482 = vpack.c.b16 %v1933, %v1930
      %v2483 = vpack.c.b16 %v1937, %v1934
      %v2484 = vpack.c.b16 %v1938, %v1935
      %v2485 = vpack.c.b16 %v1939, %v1936
      %v2486 = vpack.c.b16 %v1943, %v1940
      %v2487 = vpack.c.b16 %v1944, %v1941
      %v2488 = vpack.c.b16 %v1945, %v1942
      %v2489 = vpack.c.b16 %v1949, %v1946
      %v2490 = vpack.c.b16 %v1950, %v1947
      %v2491 = vpack.c.b16 %v1951, %v1948
      %v2492 = vpack.c.b16 %v1955, %v1952
      %v2493 = vpack.c.b16 %v1956, %v1953
      %v2494 = vpack.c.b16 %v1957, %v1954
      %v2495 = vpack.c.b16 %v1961, %v1958
      %v2496 = vpack.c.b16 %v1962, %v1959
      %v2497 = vpack.c.b16 %v1963, %v1960
      %v2498 = vpack.c.b16 %v1967, %v1964
      %v2499 = vpack.c.b16 %v1968, %v1965
      %v2500 = vpack.c.b16 %v1969, %v1966
      %v2501 = vpack.c.b16 %v1973, %v1970
      %v2502 = vpack.c.b16 %v1974, %v1971
      %v2503 = vpack.c.b16 %v1975, %v1972
      %v2504 = vpack.c.b16 %v1979, %v1976
      %v2505 = vpack.c.b16 %v1980, %v1977
      %v2506 = vpack.c.b16 %v1981, %v1978
      %v2507 = vpack.c.b16 %v1985, %v1982
      %v2508 = vpack.c.b16 %v1986, %v1983
      %v2509 = vpack.c.b16 %v1987, %v1984
      %v2510 = vpack.c.b16 %v1991, %v1988
      %v2511 = vpack.c.b16 %v1992, %v1989
      %v2512 = vpack.c.b16 %v1993, %v1990
      %v2513 = vpack.c.b16 %v1997, %v1994
      %v2514 = vpack.c.b16 %v1998, %v1995
      %v2515 = vpack.c.b16 %v1999, %v1996
      %v2516 = vpack.c.b16 %v2003, %v2000
      %v2517 = vpack.c.b16 %v2004, %v2001
      %v2518 = vpack.c.b16 %v2005, %v2002
      %v2519 = vpack.c.b16 %v2009, %v2006
      %v2520 = vpack.c.b16 %v2010, %v2007
      %v2521 = vpack.c.b16 %v2011, %v2008
      %v2522 = vpack.c.b16 %v2015, %v2012
      %v2523 = vpack.c.b16 %v2016, %v2013
      %v2524 = vpack.c.b16 %v2017, %v2014
      %v2525 = vpack.c.b16 %v2021, %v2018
      %v2526 = vpack.c.b16 %v2022, %v2019
      %v2527 = vpack.c.b16 %v2023, %v2020
      %v2528 = vpack.c.b16 %v2027, %v2024
      %v2529 = vpack.c.b16 %v2028, %v2025
      %v2530 = vpack.c.b16 %v2029, %v2026
      %v2531 = vpack.c.b16 %v2033, %v2030
      %v2532 = vpack.c.b16 %v2034, %v2031
      %v2533 = vpack.c.b16 %v2035, %v2032
      %v2534 = vpack.c.b16 %v2039, %v2036
      %v2535 = vpack.c.b16 %v2040, %v2037
      %v2536 = vpack.c.b16 %v2041, %v2038
      %v2537 = vpack.c.b16 %v2045, %v2042
      %v2538 = vpack.c.b16 %v2046, %v2043
      %v2539 = vpack.c.b16 %v2047, %v2044
      %v2540 = vpack.c.b16 %v2051, %v2048
      %v2541 = vpack.c.b16 %v2052, %v2049
      %v2542 = vpack.c.b16 %v2053, %v2050
      %v2543 = vpack.c.b16 %v2057, %v2054
      %v2544 = vpack.c.b16 %v2058, %v2055
      %v2545 = vpack.c.b16 %v2059, %v2056
      %v2546 = vpack.c.b16 %v2063, %v2060
      %v2547 = vpack.c.b16 %v2064, %v2061
      %v2548 = vpack.c.b16 %v2065, %v2062
      %v2549 = vpack.c.b16 %v2069, %v2066
      %v2550 = vpack.c.b16 %v2070, %v2067
      %v2551 = vpack.c.b16 %v2071, %v2068
      %v2552 = vpack.c.b16 %v2075, %v2072
      %v2553 = vpack.c.b16 %v2076, %v2073
      %v2554 = vpack.c.b16 %v2077, %v2074
      %v2555 = vpack.c.b16 %v2081, %v2078
      %v2556 = vpack.c.b16 %v2082, %v2079
      %v2557 = vpack.c.b16 %v2083, %v2080
      %v2558 = vpack.c.b16 %v2087, %v2084
      %v2559 = vpack.c.b16 %v2088, %v2085
      %v2560 = vpack.c.b16 %v2089, %v2086
      %v2561 = vpack.c.b16 %v2093, %v2090
      %v2562 = vpack.c.b16 %v2094, %v2091
      %v2563 = vpack.c.b16 %v2095, %v2092
      %v2564 = vpack.c.b16 %v2099, %v2096
      %v2565 = vpack.c.b16 %v2100, %v2097
      %v2566 = vpack.c.b16 %v2101, %v2098
      %v2567 = vpack.c.b16 %v2105, %v2102
      %v2568 = vpack.c.b16 %v2106, %v2103
      %v2569 = vpack.c.b16 %v2107, %v2104
      %v2570 = vpack.c.b16 %v2111, %v2108
      %v2571 = vpack.c.b16 %v2112, %v2109
      %v2572 = vpack.c.b16 %v2113, %v2110
      %v2573 = vpack.c.b16 %v2117, %v2114
      %v2574 = vpack.c.b16 %v2118, %v2115
      %v2575 = vpack.c.b16 %v2119, %v2116
      %v2576 = vpack.c.b16 %v2123, %v2120
      %v2577 = vpack.c.b16 %v2124, %v2121
      %v2578 = vpack.c.b16 %v2125, %v2122
      %v2579 = vpack.c.b16 %v2129, %v2126
      %v2580 = vpack.c.b16 %v2130, %v2127
      %v2581 = vpack.c.b16 %v2131, %v2128
      %v2582 = vpack.c.b16 %v2135, %v2132
      %v2583 = vpack.c.b16 %v2136, %v2133
      %v2584 = vpack.c.b16 %v2137, %v2134
      %v2585 = vpack.c.b16 %v2141, %v2138
      %v2586 = vpack.c.b16 %v2142, %v2139
      %v2587 = vpack.c.b16 %v2143, %v2140
      %v2588 = vpack.c.b16 %v2147, %v2144
      %v2589 = vpack.c.b16 %v2148, %v2145
      %v2590 = vpack.c.b16 %v2149, %v2146
      %v2591 = vpack.c.b16 %v2153, %v2150
      %v2592 = vpack.c.b16 %v2154, %v2151
      %v2593 = vpack.c.b16 %v2155, %v2152
      %v2594 = vpack.c.b16 %v2159, %v2156
      %v2595 = vpack.c.b16 %v2160, %v2157
      %v2596 = vpack.c.b16 %v2161, %v2158
      %v2597 = vpack.c.b16 %v2165, %v2162
      %v2598 = vpack.c.b16 %v2166, %v2163
      %v2599 = vpack.c.b16 %v2167, %v2164
      %v2600 = vpack.c.b16 %v2171, %v2168
      %v2601 = vpack.c.b16 %v2172, %v2169
      %v2602 = vpack.c.b16 %v2173, %v2170
      %v2603 = vpack.c.b16 %v2177, %v2174
      %v2604 = vpack.c.b16 %v2178, %v2175
      %v2605 = vpack.c.b16 %v2179, %v2176
      %v2606 = vpack.c.b16 %v2183, %v2180
      %v2607 = vpack.c.b16 %v2184, %v2181
      %v2608 = vpack.c.b16 %v2185, %v2182
      %v2609 = vpack.c.b16 %v2189, %v2186
      %v2610 = vpack.c.b16 %v2190, %v2187
      %v2611 = vpack.c.b16 %v2191, %v2188
      %v2612 = vpack.c.b16 %v2195, %v2192
      %v2613 = vpack.c.b16 %v2196, %v2193
      %v2614 = vpack.c.b16 %v2197, %v2194
      %v2615 = vpack.c.b16 %v2201, %v2198
      %v2616 = vpack.c.b16 %v2202, %v2199
      %v2617 = vpack.c.b16 %v2203, %v2200
      %v2618 = vpack.c.b16 %v2207, %v2204
      %v2619 = vpack.c.b16 %v2208, %v2205
      %v2620 = vpack.c.b16 %v2209, %v2206
      %v2621 = vpack.c.b16 %v2213, %v2210
      %v2622 = vpack.c.b16 %v2214, %v2211
      %v2623 = vpack.c.b16 %v2215, %v2212
      %v2624 = vpack.c.b16 %v2219, %v2216
      %v2625 = vpack.c.b16 %v2220, %v2217
      %v2626 = vpack.c.b16 %v2221, %v2218
      %v2627 = vpack.c.b16 %v2225, %v2222
      %v2628 = vpack.c.b16 %v2226, %v2223
      %v2629 = vpack.c.b16 %v2227, %v2224
      %v2630 = vpack.c.b16 %v2231, %v2228
      %v2631 = vpack.c.b16 %v2232, %v2229
      %v2632 = vpack.c.b16 %v2233, %v2230
      %v2633 = vpack.c.b16 %v2237, %v2234
      %v2634 = vpack.c.b16 %v2238, %v2235
      %v2635 = vpack.c.b16 %v2239, %v2236
      %v2636 = vpack.c.b16 %v2243, %v2240
      %v2637 = vpack.c.b16 %v2244, %v2241
      %v2638 = vpack.c.b16 %v2245, %v2242
      %v2639 = vpack.c.b16 %v2249, %v2246
      %v2640 = vpack.c.b16 %v2250, %v2247
      %v2641 = vpack.c.b16 %v2251, %v2248
      %v2642 = vpack.c.b16 %v2255, %v2252
      %v2643 = vpack.c.b16 %v2256, %v2253
      %v2644 = vpack.c.b16 %v2257, %v2254
      %v2645 = vpack.c.b16 %v2261, %v2258
      %v2646 = vpack.c.b16 %v2262, %v2259
      %v2647 = vpack.c.b16 %v2263, %v2260
      %3032 = vmatpush.bf16.msra.mxu0 %v2285
      %3033 = vmatpush.bf16.msra.mxu0 %v2282
      %3034 = vmatpush.bf16.msra.mxu0 %v2279
      %3035 = vmatpush.bf16.msra.mxu0 %v2276
      %3036 = vmatpush.bf16.msra.mxu0 %v2273
      %3037 = vmatpush.bf16.msra.mxu0 %v2270
      %3038 = vmatpush.bf16.msra.mxu0 %v2267
      %3039 = vmatpush.bf16.msra.mxu0 %v2264
      %3040 = vmatmul.bf16.gmra.mxu0 %v920
      %v3041 = vpop.f32.mrf.mxu0
      %v3042 = vadd.f32 0.0, %v3041
      %v3043 = vpop.f32.mrf.mxu0
      %v3044 = vadd.f32 0.0, %v3043
      %3045 = vmatmul.bf16.gmra.mxu0 %v936
      %v3046 = vpop.f32.mrf.mxu0
      %v3047 = vadd.f32 0.0, %v3046
      %v3048 = vpop.f32.mrf.mxu0
      %v3049 = vadd.f32 0.0, %v3048
      %3050 = vdwg.mxu0
      %3051 = vmatpush.bf16.msra.mxu0 %v2309
      %3052 = vmatpush.bf16.msra.mxu0 %v2306
      %3053 = vmatpush.bf16.msra.mxu0 %v2303
      %3054 = vmatpush.bf16.msra.mxu0 %v2300
      %3055 = vmatpush.bf16.msra.mxu0 %v2297
      %3056 = vmatpush.bf16.msra.mxu0 %v2294
      %3057 = vmatpush.bf16.msra.mxu0 %v2291
      %3058 = vmatpush.bf16.msra.mxu0 %v2288
      %3059 = vmatmul.bf16.gmra.mxu0 %v921
      %v3060 = vpop.f32.mrf.mxu0
      %v3061 = vadd.f32 %v3042, %v3060
      %v3062 = vpop.f32.mrf.mxu0
      %v3063 = vadd.f32 %v3044, %v3062
      %3064 = vmatmul.bf16.gmra.mxu0 %v937
      %v3065 = vpop.f32.mrf.mxu0
      %v3066 = vadd.f32 %v3047, %v3065
      %v3067 = vpop.f32.mrf.mxu0
      %v3068 = vadd.f32 %v3049, %v3067
      %3069 = vdwg.mxu0
      %3070 = vmatpush.bf16.msra.mxu0 %v2333
      %3071 = vmatpush.bf16.msra.mxu0 %v2330
      %3072 = vmatpush.bf16.msra.mxu0 %v2327
      %3073 = vmatpush.bf16.msra.mxu0 %v2324
      %3074 = vmatpush.bf16.msra.mxu0 %v2321
      %3075 = vmatpush.bf16.msra.mxu0 %v2318
      %3076 = vmatpush.bf16.msra.mxu0 %v2315
      %3077 = vmatpush.bf16.msra.mxu0 %v2312
      %3078 = vmatmul.bf16.gmra.mxu0 %v922
      %v3079 = vpop.f32.mrf.mxu0
      %v3080 = vadd.f32 %v3061, %v3079
      %v3081 = vpop.f32.mrf.mxu0
      %v3082 = vadd.f32 %v3063, %v3081
      %3083 = vmatmul.bf16.gmra.mxu0 %v938
      %v3084 = vpop.f32.mrf.mxu0
      %v3085 = vadd.f32 %v3066, %v3084
      %v3086 = vpop.f32.mrf.mxu0
      %v3087 = vadd.f32 %v3068, %v3086
      %3088 = vdwg.mxu0
      %3089 = vmatpush.bf16.msra.mxu0 %v2357
      %3090 = vmatpush.bf16.msra.mxu0 %v2354
      %3091 = vmatpush.bf16.msra.mxu0 %v2351
      %3092 = vmatpush.bf16.msra.mxu0 %v2348
      %3093 = vmatpush.bf16.msra.mxu0 %v2345
      %3094 = vmatpush.bf16.msra.mxu0 %v2342
      %3095 = vmatpush.bf16.msra.mxu0 %v2339
      %3096 = vmatpush.bf16.msra.mxu0 %v2336
      %3097 = vmatmul.bf16.gmra.mxu0 %v923
      %v3098 = vpop.f32.mrf.mxu0
      %v3099 = vadd.f32 %v3080, %v3098
      %v3100 = vpop.f32.mrf.mxu0
      %v3101 = vadd.f32 %v3082, %v3100
      %3102 = vmatmul.bf16.gmra.mxu0 %v939
      %v3103 = vpop.f32.mrf.mxu0
      %v3104 = vadd.f32 %v3085, %v3103
      %v3105 = vpop.f32.mrf.mxu0
      %v3106 = vadd.f32 %v3087, %v3105
      %3107 = vdwg.mxu0
      %3108 = vmatpush.bf16.msra.mxu0 %v2381
      %3109 = vmatpush.bf16.msra.mxu0 %v2378
      %3110 = vmatpush.bf16.msra.mxu0 %v2375
      %3111 = vmatpush.bf16.msra.mxu0 %v2372
      %3112 = vmatpush.bf16.msra.mxu0 %v2369
      %3113 = vmatpush.bf16.msra.mxu0 %v2366
      %3114 = vmatpush.bf16.msra.mxu0 %v2363
      %3115 = vmatpush.bf16.msra.mxu0 %v2360
      %3116 = vmatmul.bf16.gmra.mxu0 %v924
      %v3117 = vpop.f32.mrf.mxu0
      %v3118 = vadd.f32 %v3099, %v3117
      %v3119 = vpop.f32.mrf.mxu0
      %v3120 = vadd.f32 %v3101, %v3119
      %3121 = vmatmul.bf16.gmra.mxu0 %v940
      %v3122 = vpop.f32.mrf.mxu0
      %v3123 = vadd.f32 %v3104, %v3122
      %v3124 = vpop.f32.mrf.mxu0
      %v3125 = vadd.f32 %v3106, %v3124
      %3126 = vdwg.mxu0
      %3127 = vmatpush.bf16.msra.mxu0 %v2405
      %3128 = vmatpush.bf16.msra.mxu0 %v2402
      %3129 = vmatpush.bf16.msra.mxu0 %v2399
      %3130 = vmatpush.bf16.msra.mxu0 %v2396
      %3131 = vmatpush.bf16.msra.mxu0 %v2393
      %3132 = vmatpush.bf16.msra.mxu0 %v2390
      %3133 = vmatpush.bf16.msra.mxu0 %v2387
      %3134 = vmatpush.bf16.msra.mxu0 %v2384
      %3135 = vmatmul.bf16.gmra.mxu0 %v925
      %v3136 = vpop.f32.mrf.mxu0
      %v3137 = vadd.f32 %v3118, %v3136
      %v3138 = vpop.f32.mrf.mxu0
      %v3139 = vadd.f32 %v3120, %v3138
      %3140 = vmatmul.bf16.gmra.mxu0 %v941
      %v3141 = vpop.f32.mrf.mxu0
      %v3142 = vadd.f32 %v3123, %v3141
      %v3143 = vpop.f32.mrf.mxu0
      %v3144 = vadd.f32 %v3125, %v3143
      %3145 = vdwg.mxu0
      %3146 = vmatpush.bf16.msra.mxu0 %v2429
      %3147 = vmatpush.bf16.msra.mxu0 %v2426
      %3148 = vmatpush.bf16.msra.mxu0 %v2423
      %3149 = vmatpush.bf16.msra.mxu0 %v2420
      %3150 = vmatpush.bf16.msra.mxu0 %v2417
      %3151 = vmatpush.bf16.msra.mxu0 %v2414
      %3152 = vmatpush.bf16.msra.mxu0 %v2411
      %3153 = vmatpush.bf16.msra.mxu0 %v2408
      %3154 = vmatmul.bf16.gmra.mxu0 %v926
      %v3155 = vpop.f32.mrf.mxu0
      %v3156 = vadd.f32 %v3137, %v3155
      %v3157 = vpop.f32.mrf.mxu0
      %v3158 = vadd.f32 %v3139, %v3157
      %3159 = vmatmul.bf16.gmra.mxu0 %v942
      %v3160 = vpop.f32.mrf.mxu0
      %v3161 = vadd.f32 %v3142, %v3160
      %v3162 = vpop.f32.mrf.mxu0
      %v3163 = vadd.f32 %v3144, %v3162
      %3164 = vdwg.mxu0
      %3165 = vmatpush.bf16.msra.mxu0 %v2453
      %3166 = vmatpush.bf16.msra.mxu0 %v2450
      %3167 = vmatpush.bf16.msra.mxu0 %v2447
      %3168 = vmatpush.bf16.msra.mxu0 %v2444
      %3169 = vmatpush.bf16.msra.mxu0 %v2441
      %3170 = vmatpush.bf16.msra.mxu0 %v2438
      %3171 = vmatpush.bf16.msra.mxu0 %v2435
      %3172 = vmatpush.bf16.msra.mxu0 %v2432
      %3173 = vmatmul.bf16.gmra.mxu0 %v927
      %v3174 = vpop.f32.mrf.mxu0
      %v3175 = vadd.f32 %v3156, %v3174
      %v3176 = vpop.f32.mrf.mxu0
      %v3177 = vadd.f32 %v3158, %v3176
      %3178 = vmatmul.bf16.gmra.mxu0 %v943
      %v3179 = vpop.f32.mrf.mxu0
      %v3180 = vadd.f32 %v3161, %v3179
      %v3181 = vpop.f32.mrf.mxu0
      %v3182 = vadd.f32 %v3163, %v3181
      %3183 = vdwg.mxu0
      %3184 = vmatpush.bf16.msra.mxu0 %v2477
      %3185 = vmatpush.bf16.msra.mxu0 %v2474
      %3186 = vmatpush.bf16.msra.mxu0 %v2471
      %3187 = vmatpush.bf16.msra.mxu0 %v2468
      %3188 = vmatpush.bf16.msra.mxu0 %v2465
      %3189 = vmatpush.bf16.msra.mxu0 %v2462
      %3190 = vmatpush.bf16.msra.mxu0 %v2459
      %3191 = vmatpush.bf16.msra.mxu0 %v2456
      %3192 = vmatmul.bf16.gmra.mxu0 %v928
      %v3193 = vpop.f32.mrf.mxu0
      %v3194 = vadd.f32 %v3175, %v3193
      %v3195 = vpop.f32.mrf.mxu0
      %v3196 = vadd.f32 %v3177, %v3195
      %3197 = vmatmul.bf16.gmra.mxu0 %v944
      %v3198 = vpop.f32.mrf.mxu0
      %v3199 = vadd.f32 %v3180, %v3198
      %v3200 = vpop.f32.mrf.mxu0
      %v3201 = vadd.f32 %v3182, %v3200
      %3202 = vdwg.mxu0
      %3203 = vmatpush.bf16.msra.mxu0 %v2501
      %3204 = vmatpush.bf16.msra.mxu0 %v2498
      %3205 = vmatpush.bf16.msra.mxu0 %v2495
      %3206 = vmatpush.bf16.msra.mxu0 %v2492
      %3207 = vmatpush.bf16.msra.mxu0 %v2489
      %3208 = vmatpush.bf16.msra.mxu0 %v2486
      %3209 = vmatpush.bf16.msra.mxu0 %v2483
      %3210 = vmatpush.bf16.msra.mxu0 %v2480
      %3211 = vmatmul.bf16.gmra.mxu0 %v929
      %v3212 = vpop.f32.mrf.mxu0
      %v3213 = vadd.f32 %v3194, %v3212
      %v3214 = vpop.f32.mrf.mxu0
      %v3215 = vadd.f32 %v3196, %v3214
      %3216 = vmatmul.bf16.gmra.mxu0 %v945
      %v3217 = vpop.f32.mrf.mxu0
      %v3218 = vadd.f32 %v3199, %v3217
      %v3219 = vpop.f32.mrf.mxu0
      %v3220 = vadd.f32 %v3201, %v3219
      %3221 = vdwg.mxu0
      %3222 = vmatpush.bf16.msra.mxu0 %v2525
      %3223 = vmatpush.bf16.msra.mxu0 %v2522
      %3224 = vmatpush.bf16.msra.mxu0 %v2519
      %3225 = vmatpush.bf16.msra.mxu0 %v2516
      %3226 = vmatpush.bf16.msra.mxu0 %v2513
      %3227 = vmatpush.bf16.msra.mxu0 %v2510
      %3228 = vmatpush.bf16.msra.mxu0 %v2507
      %3229 = vmatpush.bf16.msra.mxu0 %v2504
      %3230 = vmatmul.bf16.gmra.mxu0 %v930
      %v3231 = vpop.f32.mrf.mxu0
      %v3232 = vadd.f32 %v3213, %v3231
      %v3233 = vpop.f32.mrf.mxu0
      %v3234 = vadd.f32 %v3215, %v3233
      %3235 = vmatmul.bf16.gmra.mxu0 %v946
      %v3236 = vpop.f32.mrf.mxu0
      %v3237 = vadd.f32 %v3218, %v3236
      %v3238 = vpop.f32.mrf.mxu0
      %v3239 = vadd.f32 %v3220, %v3238
      %3240 = vdwg.mxu0
      %3241 = vmatpush.bf16.msra.mxu0 %v2549
      %3242 = vmatpush.bf16.msra.mxu0 %v2546
      %3243 = vmatpush.bf16.msra.mxu0 %v2543
      %3244 = vmatpush.bf16.msra.mxu0 %v2540
      %3245 = vmatpush.bf16.msra.mxu0 %v2537
      %3246 = vmatpush.bf16.msra.mxu0 %v2534
      %3247 = vmatpush.bf16.msra.mxu0 %v2531
      %3248 = vmatpush.bf16.msra.mxu0 %v2528
      %3249 = vmatmul.bf16.gmra.mxu0 %v931
      %v3250 = vpop.f32.mrf.mxu0
      %v3251 = vadd.f32 %v3232, %v3250
      %v3252 = vpop.f32.mrf.mxu0
      %v3253 = vadd.f32 %v3234, %v3252
      %3254 = vmatmul.bf16.gmra.mxu0 %v947
      %v3255 = vpop.f32.mrf.mxu0
      %v3256 = vadd.f32 %v3237, %v3255
      %v3257 = vpop.f32.mrf.mxu0
      %v3258 = vadd.f32 %v3239, %v3257
      %3259 = vdwg.mxu0
      %3260 = vmatpush.bf16.msra.mxu0 %v2573
      %3261 = vmatpush.bf16.msra.mxu0 %v2570
      %3262 = vmatpush.bf16.msra.mxu0 %v2567
      %3263 = vmatpush.bf16.msra.mxu0 %v2564
      %3264 = vmatpush.bf16.msra.mxu0 %v2561
      %3265 = vmatpush.bf16.msra.mxu0 %v2558
      %3266 = vmatpush.bf16.msra.mxu0 %v2555
      %3267 = vmatpush.bf16.msra.mxu0 %v2552
      %3268 = vmatmul.bf16.gmra.mxu0 %v932
      %v3269 = vpop.f32.mrf.mxu0
      %v3270 = vadd.f32 %v3251, %v3269
      %v3271 = vpop.f32.mrf.mxu0
      %v3272 = vadd.f32 %v3253, %v3271
      %3273 = vmatmul.bf16.gmra.mxu0 %v948
      %v3274 = vpop.f32.mrf.mxu0
      %v3275 = vadd.f32 %v3256, %v3274
      %v3276 = vpop.f32.mrf.mxu0
      %v3277 = vadd.f32 %v3258, %v3276
      %3278 = vdwg.mxu0
      %3279 = vmatpush.bf16.msra.mxu0 %v2597
      %3280 = vmatpush.bf16.msra.mxu0 %v2594
      %3281 = vmatpush.bf16.msra.mxu0 %v2591
      %3282 = vmatpush.bf16.msra.mxu0 %v2588
      %3283 = vmatpush.bf16.msra.mxu0 %v2585
      %3284 = vmatpush.bf16.msra.mxu0 %v2582
      %3285 = vmatpush.bf16.msra.mxu0 %v2579
      %3286 = vmatpush.bf16.msra.mxu0 %v2576
      %3287 = vmatmul.bf16.gmra.mxu0 %v933
      %v3288 = vpop.f32.mrf.mxu0
      %v3289 = vadd.f32 %v3270, %v3288
      %v3290 = vpop.f32.mrf.mxu0
      %v3291 = vadd.f32 %v3272, %v3290
      %3292 = vmatmul.bf16.gmra.mxu0 %v949
      %v3293 = vpop.f32.mrf.mxu0
      %v3294 = vadd.f32 %v3275, %v3293
      %v3295 = vpop.f32.mrf.mxu0
      %v3296 = vadd.f32 %v3277, %v3295
      %3297 = vdwg.mxu0
      %3298 = vmatpush.bf16.msra.mxu0 %v2621
      %3299 = vmatpush.bf16.msra.mxu0 %v2618
      %3300 = vmatpush.bf16.msra.mxu0 %v2615
      %3301 = vmatpush.bf16.msra.mxu0 %v2612
      %3302 = vmatpush.bf16.msra.mxu0 %v2609
      %3303 = vmatpush.bf16.msra.mxu0 %v2606
      %3304 = vmatpush.bf16.msra.mxu0 %v2603
      %3305 = vmatpush.bf16.msra.mxu0 %v2600
      %3306 = vmatmul.bf16.gmra.mxu0 %v934
      %v3307 = vpop.f32.mrf.mxu0
      %v3308 = vadd.f32 %v3289, %v3307
      %v3309 = vpop.f32.mrf.mxu0
      %v3310 = vadd.f32 %v3291, %v3309
      %3311 = vmatmul.bf16.gmra.mxu0 %v950
      %v3312 = vpop.f32.mrf.mxu0
      %v3313 = vadd.f32 %v3294, %v3312
      %v3314 = vpop.f32.mrf.mxu0
      %v3315 = vadd.f32 %v3296, %v3314
      %3316 = vdwg.mxu0
      %3317 = vmatpush.bf16.msra.mxu0 %v2645
      %3318 = vmatpush.bf16.msra.mxu0 %v2642
      %3319 = vmatpush.bf16.msra.mxu0 %v2639
      %3320 = vmatpush.bf16.msra.mxu0 %v2636
      %3321 = vmatpush.bf16.msra.mxu0 %v2633
      %3322 = vmatpush.bf16.msra.mxu0 %v2630
      %3323 = vmatpush.bf16.msra.mxu0 %v2627
      %3324 = vmatpush.bf16.msra.mxu0 %v2624
      %3325 = vmatmul.bf16.gmra.mxu0 %v935
      %v3326 = vpop.f32.mrf.mxu0
      %v3327 = vadd.f32 %v3308, %v3326
      %v3328 = vpop.f32.mrf.mxu0
      %v3329 = vadd.f32 %v3310, %v3328
      %3330 = vmatmul.bf16.gmra.mxu0 %v951
      %v3331 = vpop.f32.mrf.mxu0
      %v3332 = vadd.f32 %v3313, %v3331
      %v3333 = vpop.f32.mrf.mxu0
      %v3334 = vadd.f32 %v3315, %v3333
      %3335 = vdwg.mxu0
      %3336 = vmatpush.bf16.msra.mxu0 %v2286
      %3337 = vmatpush.bf16.msra.mxu0 %v2283
      %3338 = vmatpush.bf16.msra.mxu0 %v2280
      %3339 = vmatpush.bf16.msra.mxu0 %v2277
      %3340 = vmatpush.bf16.msra.mxu0 %v2274
      %3341 = vmatpush.bf16.msra.mxu0 %v2271
      %3342 = vmatpush.bf16.msra.mxu0 %v2268
      %3343 = vmatpush.bf16.msra.mxu0 %v2265
      %3344 = vmatmul.bf16.gmra.mxu0 %v920
      %v3345 = vpop.f32.mrf.mxu0
      %v3346 = vadd.f32 0.0, %v3345
      %v3347 = vpop.f32.mrf.mxu0
      %v3348 = vadd.f32 0.0, %v3347
      %3349 = vmatmul.bf16.gmra.mxu0 %v936
      %v3350 = vpop.f32.mrf.mxu0
      %v3351 = vadd.f32 0.0, %v3350
      %v3352 = vpop.f32.mrf.mxu0
      %v3353 = vadd.f32 0.0, %v3352
      %3354 = vdwg.mxu0
      %3355 = vmatpush.bf16.msra.mxu0 %v2310
      %3356 = vmatpush.bf16.msra.mxu0 %v2307
      %3357 = vmatpush.bf16.msra.mxu0 %v2304
      %3358 = vmatpush.bf16.msra.mxu0 %v2301
      %3359 = vmatpush.bf16.msra.mxu0 %v2298
      %3360 = vmatpush.bf16.msra.mxu0 %v2295
      %3361 = vmatpush.bf16.msra.mxu0 %v2292
      %3362 = vmatpush.bf16.msra.mxu0 %v2289
      %3363 = vmatmul.bf16.gmra.mxu0 %v921
      %v3364 = vpop.f32.mrf.mxu0
      %v3365 = vadd.f32 %v3346, %v3364
      %v3366 = vpop.f32.mrf.mxu0
      %v3367 = vadd.f32 %v3348, %v3366
      %3368 = vmatmul.bf16.gmra.mxu0 %v937
      %v3369 = vpop.f32.mrf.mxu0
      %v3370 = vadd.f32 %v3351, %v3369
      %v3371 = vpop.f32.mrf.mxu0
      %v3372 = vadd.f32 %v3353, %v3371
      %3373 = vdwg.mxu0
      %3374 = vmatpush.bf16.msra.mxu0 %v2334
      %3375 = vmatpush.bf16.msra.mxu0 %v2331
      %3376 = vmatpush.bf16.msra.mxu0 %v2328
      %3377 = vmatpush.bf16.msra.mxu0 %v2325
      %3378 = vmatpush.bf16.msra.mxu0 %v2322
      %3379 = vmatpush.bf16.msra.mxu0 %v2319
      %3380 = vmatpush.bf16.msra.mxu0 %v2316
      %3381 = vmatpush.bf16.msra.mxu0 %v2313
      %3382 = vmatmul.bf16.gmra.mxu0 %v922
      %v3383 = vpop.f32.mrf.mxu0
      %v3384 = vadd.f32 %v3365, %v3383
      %v3385 = vpop.f32.mrf.mxu0
      %v3386 = vadd.f32 %v3367, %v3385
      %3387 = vmatmul.bf16.gmra.mxu0 %v938
      %v3388 = vpop.f32.mrf.mxu0
      %v3389 = vadd.f32 %v3370, %v3388
      %v3390 = vpop.f32.mrf.mxu0
      %v3391 = vadd.f32 %v3372, %v3390
      %3392 = vdwg.mxu0
      %3393 = vmatpush.bf16.msra.mxu0 %v2358
      %3394 = vmatpush.bf16.msra.mxu0 %v2355
      %3395 = vmatpush.bf16.msra.mxu0 %v2352
      %3396 = vmatpush.bf16.msra.mxu0 %v2349
      %3397 = vmatpush.bf16.msra.mxu0 %v2346
      %3398 = vmatpush.bf16.msra.mxu0 %v2343
      %3399 = vmatpush.bf16.msra.mxu0 %v2340
      %3400 = vmatpush.bf16.msra.mxu0 %v2337
      %3401 = vmatmul.bf16.gmra.mxu0 %v923
      %v3402 = vpop.f32.mrf.mxu0
      %v3403 = vadd.f32 %v3384, %v3402
      %v3404 = vpop.f32.mrf.mxu0
      %v3405 = vadd.f32 %v3386, %v3404
      %3406 = vmatmul.bf16.gmra.mxu0 %v939
      %v3407 = vpop.f32.mrf.mxu0
      %v3408 = vadd.f32 %v3389, %v3407
      %v3409 = vpop.f32.mrf.mxu0
      %v3410 = vadd.f32 %v3391, %v3409
      %3411 = vdwg.mxu0
      %3412 = vmatpush.bf16.msra.mxu0 %v2382
      %3413 = vmatpush.bf16.msra.mxu0 %v2379
      %3414 = vmatpush.bf16.msra.mxu0 %v2376
      %3415 = vmatpush.bf16.msra.mxu0 %v2373
      %3416 = vmatpush.bf16.msra.mxu0 %v2370
      %3417 = vmatpush.bf16.msra.mxu0 %v2367
      %3418 = vmatpush.bf16.msra.mxu0 %v2364
      %3419 = vmatpush.bf16.msra.mxu0 %v2361
      %3420 = vmatmul.bf16.gmra.mxu0 %v924
      %v3421 = vpop.f32.mrf.mxu0
      %v3422 = vadd.f32 %v3403, %v3421
      %v3423 = vpop.f32.mrf.mxu0
      %v3424 = vadd.f32 %v3405, %v3423
      %3425 = vmatmul.bf16.gmra.mxu0 %v940
      %v3426 = vpop.f32.mrf.mxu0
      %v3427 = vadd.f32 %v3408, %v3426
      %v3428 = vpop.f32.mrf.mxu0
      %v3429 = vadd.f32 %v3410, %v3428
      %3430 = vdwg.mxu0
      %3431 = vmatpush.bf16.msra.mxu0 %v2406
      %3432 = vmatpush.bf16.msra.mxu0 %v2403
      %3433 = vmatpush.bf16.msra.mxu0 %v2400
      %3434 = vmatpush.bf16.msra.mxu0 %v2397
      %3435 = vmatpush.bf16.msra.mxu0 %v2394
      %3436 = vmatpush.bf16.msra.mxu0 %v2391
      %3437 = vmatpush.bf16.msra.mxu0 %v2388
      %3438 = vmatpush.bf16.msra.mxu0 %v2385
      %3439 = vmatmul.bf16.gmra.mxu0 %v925
      %v3440 = vpop.f32.mrf.mxu0
      %v3441 = vadd.f32 %v3422, %v3440
      %v3442 = vpop.f32.mrf.mxu0
      %v3443 = vadd.f32 %v3424, %v3442
      %3444 = vmatmul.bf16.gmra.mxu0 %v941
      %v3445 = vpop.f32.mrf.mxu0
      %v3446 = vadd.f32 %v3427, %v3445
      %v3447 = vpop.f32.mrf.mxu0
      %v3448 = vadd.f32 %v3429, %v3447
      %3449 = vdwg.mxu0
      %3450 = vmatpush.bf16.msra.mxu0 %v2430
      %3451 = vmatpush.bf16.msra.mxu0 %v2427
      %3452 = vmatpush.bf16.msra.mxu0 %v2424
      %3453 = vmatpush.bf16.msra.mxu0 %v2421
      %3454 = vmatpush.bf16.msra.mxu0 %v2418
      %3455 = vmatpush.bf16.msra.mxu0 %v2415
      %3456 = vmatpush.bf16.msra.mxu0 %v2412
      %3457 = vmatpush.bf16.msra.mxu0 %v2409
      %3458 = vmatmul.bf16.gmra.mxu0 %v926
      %v3459 = vpop.f32.mrf.mxu0
      %v3460 = vadd.f32 %v3441, %v3459
      %v3461 = vpop.f32.mrf.mxu0
      %v3462 = vadd.f32 %v3443, %v3461
      %3463 = vmatmul.bf16.gmra.mxu0 %v942
      %v3464 = vpop.f32.mrf.mxu0
      %v3465 = vadd.f32 %v3446, %v3464
      %v3466 = vpop.f32.mrf.mxu0
      %v3467 = vadd.f32 %v3448, %v3466
      %3468 = vdwg.mxu0
      %3469 = vmatpush.bf16.msra.mxu0 %v2454
      %3470 = vmatpush.bf16.msra.mxu0 %v2451
      %3471 = vmatpush.bf16.msra.mxu0 %v2448
      %3472 = vmatpush.bf16.msra.mxu0 %v2445
      %3473 = vmatpush.bf16.msra.mxu0 %v2442
      %3474 = vmatpush.bf16.msra.mxu0 %v2439
      %3475 = vmatpush.bf16.msra.mxu0 %v2436
      %3476 = vmatpush.bf16.msra.mxu0 %v2433
      %3477 = vmatmul.bf16.gmra.mxu0 %v927
      %v3478 = vpop.f32.mrf.mxu0
      %v3479 = vadd.f32 %v3460, %v3478
      %v3480 = vpop.f32.mrf.mxu0
      %v3481 = vadd.f32 %v3462, %v3480
      %3482 = vmatmul.bf16.gmra.mxu0 %v943
      %v3483 = vpop.f32.mrf.mxu0
      %v3484 = vadd.f32 %v3465, %v3483
      %v3485 = vpop.f32.mrf.mxu0
      %v3486 = vadd.f32 %v3467, %v3485
      %3487 = vdwg.mxu0
      %3488 = vmatpush.bf16.msra.mxu0 %v2478
      %3489 = vmatpush.bf16.msra.mxu0 %v2475
      %3490 = vmatpush.bf16.msra.mxu0 %v2472
      %3491 = vmatpush.bf16.msra.mxu0 %v2469
      %3492 = vmatpush.bf16.msra.mxu0 %v2466
      %3493 = vmatpush.bf16.msra.mxu0 %v2463
      %3494 = vmatpush.bf16.msra.mxu0 %v2460
      %3495 = vmatpush.bf16.msra.mxu0 %v2457
      %3496 = vmatmul.bf16.gmra.mxu0 %v928
      %v3497 = vpop.f32.mrf.mxu0
      %v3498 = vadd.f32 %v3479, %v3497
      %v3499 = vpop.f32.mrf.mxu0
      %v3500 = vadd.f32 %v3481, %v3499
      %3501 = vmatmul.bf16.gmra.mxu0 %v944
      %v3502 = vpop.f32.mrf.mxu0
      %v3503 = vadd.f32 %v3484, %v3502
      %v3504 = vpop.f32.mrf.mxu0
      %v3505 = vadd.f32 %v3486, %v3504
      %3506 = vdwg.mxu0
      %3507 = vmatpush.bf16.msra.mxu0 %v2502
      %3508 = vmatpush.bf16.msra.mxu0 %v2499
      %3509 = vmatpush.bf16.msra.mxu0 %v2496
      %3510 = vmatpush.bf16.msra.mxu0 %v2493
      %3511 = vmatpush.bf16.msra.mxu0 %v2490
      %3512 = vmatpush.bf16.msra.mxu0 %v2487
      %3513 = vmatpush.bf16.msra.mxu0 %v2484
      %3514 = vmatpush.bf16.msra.mxu0 %v2481
      %3515 = vmatmul.bf16.gmra.mxu0 %v929
      %v3516 = vpop.f32.mrf.mxu0
      %v3517 = vadd.f32 %v3498, %v3516
      %v3518 = vpop.f32.mrf.mxu0
      %v3519 = vadd.f32 %v3500, %v3518
      %3520 = vmatmul.bf16.gmra.mxu0 %v945
      %v3521 = vpop.f32.mrf.mxu0
      %v3522 = vadd.f32 %v3503, %v3521
      %v3523 = vpop.f32.mrf.mxu0
      %v3524 = vadd.f32 %v3505, %v3523
      %3525 = vdwg.mxu0
      %3526 = vmatpush.bf16.msra.mxu0 %v2526
      %3527 = vmatpush.bf16.msra.mxu0 %v2523
      %3528 = vmatpush.bf16.msra.mxu0 %v2520
      %3529 = vmatpush.bf16.msra.mxu0 %v2517
      %3530 = vmatpush.bf16.msra.mxu0 %v2514
      %3531 = vmatpush.bf16.msra.mxu0 %v2511
      %3532 = vmatpush.bf16.msra.mxu0 %v2508
      %3533 = vmatpush.bf16.msra.mxu0 %v2505
      %3534 = vmatmul.bf16.gmra.mxu0 %v930
      %v3535 = vpop.f32.mrf.mxu0
      %v3536 = vadd.f32 %v3517, %v3535
      %v3537 = vpop.f32.mrf.mxu0
      %v3538 = vadd.f32 %v3519, %v3537
      %3539 = vmatmul.bf16.gmra.mxu0 %v946
      %v3540 = vpop.f32.mrf.mxu0
      %v3541 = vadd.f32 %v3522, %v3540
      %v3542 = vpop.f32.mrf.mxu0
      %v3543 = vadd.f32 %v3524, %v3542
      %3544 = vdwg.mxu0
      %3545 = vmatpush.bf16.msra.mxu0 %v2550
      %3546 = vmatpush.bf16.msra.mxu0 %v2547
      %3547 = vmatpush.bf16.msra.mxu0 %v2544
      %3548 = vmatpush.bf16.msra.mxu0 %v2541
      %3549 = vmatpush.bf16.msra.mxu0 %v2538
      %3550 = vmatpush.bf16.msra.mxu0 %v2535
      %3551 = vmatpush.bf16.msra.mxu0 %v2532
      %3552 = vmatpush.bf16.msra.mxu0 %v2529
      %3553 = vmatmul.bf16.gmra.mxu0 %v931
      %v3554 = vpop.f32.mrf.mxu0
      %v3555 = vadd.f32 %v3536, %v3554
      %v3556 = vpop.f32.mrf.mxu0
      %v3557 = vadd.f32 %v3538, %v3556
      %3558 = vmatmul.bf16.gmra.mxu0 %v947
      %v3559 = vpop.f32.mrf.mxu0
      %v3560 = vadd.f32 %v3541, %v3559
      %v3561 = vpop.f32.mrf.mxu0
      %v3562 = vadd.f32 %v3543, %v3561
      %3563 = vdwg.mxu0
      %3564 = vmatpush.bf16.msra.mxu0 %v2574
      %3565 = vmatpush.bf16.msra.mxu0 %v2571
      %3566 = vmatpush.bf16.msra.mxu0 %v2568
      %3567 = vmatpush.bf16.msra.mxu0 %v2565
      %3568 = vmatpush.bf16.msra.mxu0 %v2562
      %3569 = vmatpush.bf16.msra.mxu0 %v2559
      %3570 = vmatpush.bf16.msra.mxu0 %v2556
      %3571 = vmatpush.bf16.msra.mxu0 %v2553
      %3572 = vmatmul.bf16.gmra.mxu0 %v932
      %v3573 = vpop.f32.mrf.mxu0
      %v3574 = vadd.f32 %v3555, %v3573
      %v3575 = vpop.f32.mrf.mxu0
      %v3576 = vadd.f32 %v3557, %v3575
      %3577 = vmatmul.bf16.gmra.mxu0 %v948
      %v3578 = vpop.f32.mrf.mxu0
      %v3579 = vadd.f32 %v3560, %v3578
      %v3580 = vpop.f32.mrf.mxu0
      %v3581 = vadd.f32 %v3562, %v3580
      %3582 = vdwg.mxu0
      %3583 = vmatpush.bf16.msra.mxu0 %v2598
      %3584 = vmatpush.bf16.msra.mxu0 %v2595
      %3585 = vmatpush.bf16.msra.mxu0 %v2592
      %3586 = vmatpush.bf16.msra.mxu0 %v2589
      %3587 = vmatpush.bf16.msra.mxu0 %v2586
      %3588 = vmatpush.bf16.msra.mxu0 %v2583
      %3589 = vmatpush.bf16.msra.mxu0 %v2580
      %3590 = vmatpush.bf16.msra.mxu0 %v2577
      %3591 = vmatmul.bf16.gmra.mxu0 %v933
      %v3592 = vpop.f32.mrf.mxu0
      %v3593 = vadd.f32 %v3574, %v3592
      %v3594 = vpop.f32.mrf.mxu0
      %v3595 = vadd.f32 %v3576, %v3594
      %3596 = vmatmul.bf16.gmra.mxu0 %v949
      %v3597 = vpop.f32.mrf.mxu0
      %v3598 = vadd.f32 %v3579, %v3597
      %v3599 = vpop.f32.mrf.mxu0
      %v3600 = vadd.f32 %v3581, %v3599
      %3601 = vdwg.mxu0
      %3602 = vmatpush.bf16.msra.mxu0 %v2622
      %3603 = vmatpush.bf16.msra.mxu0 %v2619
      %3604 = vmatpush.bf16.msra.mxu0 %v2616
      %3605 = vmatpush.bf16.msra.mxu0 %v2613
      %3606 = vmatpush.bf16.msra.mxu0 %v2610
      %3607 = vmatpush.bf16.msra.mxu0 %v2607
      %3608 = vmatpush.bf16.msra.mxu0 %v2604
      %3609 = vmatpush.bf16.msra.mxu0 %v2601
      %3610 = vmatmul.bf16.gmra.mxu0 %v934
      %v3611 = vpop.f32.mrf.mxu0
      %v3612 = vadd.f32 %v3593, %v3611
      %v3613 = vpop.f32.mrf.mxu0
      %v3614 = vadd.f32 %v3595, %v3613
      %3615 = vmatmul.bf16.gmra.mxu0 %v950
      %v3616 = vpop.f32.mrf.mxu0
      %v3617 = vadd.f32 %v3598, %v3616
      %v3618 = vpop.f32.mrf.mxu0
      %v3619 = vadd.f32 %v3600, %v3618
      %3620 = vdwg.mxu0
      %3621 = vmatpush.bf16.msra.mxu0 %v2646
      %3622 = vmatpush.bf16.msra.mxu0 %v2643
      %3623 = vmatpush.bf16.msra.mxu0 %v2640
      %3624 = vmatpush.bf16.msra.mxu0 %v2637
      %3625 = vmatpush.bf16.msra.mxu0 %v2634
      %3626 = vmatpush.bf16.msra.mxu0 %v2631
      %3627 = vmatpush.bf16.msra.mxu0 %v2628
      %3628 = vmatpush.bf16.msra.mxu0 %v2625
      %3629 = vmatmul.bf16.gmra.mxu0 %v935
      %v3630 = vpop.f32.mrf.mxu0
      %v3631 = vadd.f32 %v3612, %v3630
      %v3632 = vpop.f32.mrf.mxu0
      %v3633 = vadd.f32 %v3614, %v3632
      %3634 = vmatmul.bf16.gmra.mxu0 %v951
      %v3635 = vpop.f32.mrf.mxu0
      %v3636 = vadd.f32 %v3617, %v3635
      %v3637 = vpop.f32.mrf.mxu0
      %v3638 = vadd.f32 %v3619, %v3637
      %3639 = vdwg.mxu0
      %3640 = vmatpush.bf16.msra.mxu0 %v2287
      %3641 = vmatpush.bf16.msra.mxu0 %v2284
      %3642 = vmatpush.bf16.msra.mxu0 %v2281
      %3643 = vmatpush.bf16.msra.mxu0 %v2278
      %3644 = vmatpush.bf16.msra.mxu0 %v2275
      %3645 = vmatpush.bf16.msra.mxu0 %v2272
      %3646 = vmatpush.bf16.msra.mxu0 %v2269
      %3647 = vmatpush.bf16.msra.mxu0 %v2266
      %3648 = vmatmul.bf16.gmra.mxu0 %v920
      %v3649 = vpop.f32.mrf.mxu0
      %v3650 = vadd.f32 0.0, %v3649
      %v3651 = vpop.f32.mrf.mxu0
      %v3652 = vadd.f32 0.0, %v3651
      %3653 = vmatmul.bf16.gmra.mxu0 %v936
      %v3654 = vpop.f32.mrf.mxu0
      %v3655 = vadd.f32 0.0, %v3654
      %v3656 = vpop.f32.mrf.mxu0
      %v3657 = vadd.f32 0.0, %v3656
      %3658 = vdwg.mxu0
      %3659 = vmatpush.bf16.msra.mxu0 %v2311
      %3660 = vmatpush.bf16.msra.mxu0 %v2308
      %3661 = vmatpush.bf16.msra.mxu0 %v2305
      %3662 = vmatpush.bf16.msra.mxu0 %v2302
      %3663 = vmatpush.bf16.msra.mxu0 %v2299
      %3664 = vmatpush.bf16.msra.mxu0 %v2296
      %3665 = vmatpush.bf16.msra.mxu0 %v2293
      %3666 = vmatpush.bf16.msra.mxu0 %v2290
      %3667 = vmatmul.bf16.gmra.mxu0 %v921
      %v3668 = vpop.f32.mrf.mxu0
      %v3669 = vadd.f32 %v3650, %v3668
      %v3670 = vpop.f32.mrf.mxu0
      %v3671 = vadd.f32 %v3652, %v3670
      %3672 = vmatmul.bf16.gmra.mxu0 %v937
      %v3673 = vpop.f32.mrf.mxu0
      %v3674 = vadd.f32 %v3655, %v3673
      %v3675 = vpop.f32.mrf.mxu0
      %v3676 = vadd.f32 %v3657, %v3675
      %3677 = vdwg.mxu0
      %3678 = vmatpush.bf16.msra.mxu0 %v2335
      %3679 = vmatpush.bf16.msra.mxu0 %v2332
      %3680 = vmatpush.bf16.msra.mxu0 %v2329
      %3681 = vmatpush.bf16.msra.mxu0 %v2326
      %3682 = vmatpush.bf16.msra.mxu0 %v2323
      %3683 = vmatpush.bf16.msra.mxu0 %v2320
      %3684 = vmatpush.bf16.msra.mxu0 %v2317
      %3685 = vmatpush.bf16.msra.mxu0 %v2314
      %3686 = vmatmul.bf16.gmra.mxu0 %v922
      %v3687 = vpop.f32.mrf.mxu0
      %v3688 = vadd.f32 %v3669, %v3687
      %v3689 = vpop.f32.mrf.mxu0
      %v3690 = vadd.f32 %v3671, %v3689
      %3691 = vmatmul.bf16.gmra.mxu0 %v938
      %v3692 = vpop.f32.mrf.mxu0
      %v3693 = vadd.f32 %v3674, %v3692
      %v3694 = vpop.f32.mrf.mxu0
      %v3695 = vadd.f32 %v3676, %v3694
      %3696 = vdwg.mxu0
      %3697 = vmatpush.bf16.msra.mxu0 %v2359
      %3698 = vmatpush.bf16.msra.mxu0 %v2356
      %3699 = vmatpush.bf16.msra.mxu0 %v2353
      %3700 = vmatpush.bf16.msra.mxu0 %v2350
      %3701 = vmatpush.bf16.msra.mxu0 %v2347
      %3702 = vmatpush.bf16.msra.mxu0 %v2344
      %3703 = vmatpush.bf16.msra.mxu0 %v2341
      %3704 = vmatpush.bf16.msra.mxu0 %v2338
      %3705 = vmatmul.bf16.gmra.mxu0 %v923
      %v3706 = vpop.f32.mrf.mxu0
      %v3707 = vadd.f32 %v3688, %v3706
      %v3708 = vpop.f32.mrf.mxu0
      %v3709 = vadd.f32 %v3690, %v3708
      %3710 = vmatmul.bf16.gmra.mxu0 %v939
      %v3711 = vpop.f32.mrf.mxu0
      %v3712 = vadd.f32 %v3693, %v3711
      %v3713 = vpop.f32.mrf.mxu0
      %v3714 = vadd.f32 %v3695, %v3713
      %3715 = vdwg.mxu0
      %3716 = vmatpush.bf16.msra.mxu0 %v2383
      %3717 = vmatpush.bf16.msra.mxu0 %v2380
      %3718 = vmatpush.bf16.msra.mxu0 %v2377
      %3719 = vmatpush.bf16.msra.mxu0 %v2374
      %3720 = vmatpush.bf16.msra.mxu0 %v2371
      %3721 = vmatpush.bf16.msra.mxu0 %v2368
      %3722 = vmatpush.bf16.msra.mxu0 %v2365
      %3723 = vmatpush.bf16.msra.mxu0 %v2362
      %3724 = vmatmul.bf16.gmra.mxu0 %v924
      %v3725 = vpop.f32.mrf.mxu0
      %v3726 = vadd.f32 %v3707, %v3725
      %v3727 = vpop.f32.mrf.mxu0
      %v3728 = vadd.f32 %v3709, %v3727
      %3729 = vmatmul.bf16.gmra.mxu0 %v940
      %v3730 = vpop.f32.mrf.mxu0
      %v3731 = vadd.f32 %v3712, %v3730
      %v3732 = vpop.f32.mrf.mxu0
      %v3733 = vadd.f32 %v3714, %v3732
      %3734 = vdwg.mxu0
      %3735 = vmatpush.bf16.msra.mxu0 %v2407
      %3736 = vmatpush.bf16.msra.mxu0 %v2404
      %3737 = vmatpush.bf16.msra.mxu0 %v2401
      %3738 = vmatpush.bf16.msra.mxu0 %v2398
      %3739 = vmatpush.bf16.msra.mxu0 %v2395
      %3740 = vmatpush.bf16.msra.mxu0 %v2392
      %3741 = vmatpush.bf16.msra.mxu0 %v2389
      %3742 = vmatpush.bf16.msra.mxu0 %v2386
      %3743 = vmatmul.bf16.gmra.mxu0 %v925
      %v3744 = vpop.f32.mrf.mxu0
      %v3745 = vadd.f32 %v3726, %v3744
      %v3746 = vpop.f32.mrf.mxu0
      %v3747 = vadd.f32 %v3728, %v3746
      %3748 = vmatmul.bf16.gmra.mxu0 %v941
      %v3749 = vpop.f32.mrf.mxu0
      %v3750 = vadd.f32 %v3731, %v3749
      %v3751 = vpop.f32.mrf.mxu0
      %v3752 = vadd.f32 %v3733, %v3751
      %3753 = vdwg.mxu0
      %3754 = vmatpush.bf16.msra.mxu0 %v2431
      %3755 = vmatpush.bf16.msra.mxu0 %v2428
      %3756 = vmatpush.bf16.msra.mxu0 %v2425
      %3757 = vmatpush.bf16.msra.mxu0 %v2422
      %3758 = vmatpush.bf16.msra.mxu0 %v2419
      %3759 = vmatpush.bf16.msra.mxu0 %v2416
      %3760 = vmatpush.bf16.msra.mxu0 %v2413
      %3761 = vmatpush.bf16.msra.mxu0 %v2410
      %3762 = vmatmul.bf16.gmra.mxu0 %v926
      %v3763 = vpop.f32.mrf.mxu0
      %v3764 = vadd.f32 %v3745, %v3763
      %v3765 = vpop.f32.mrf.mxu0
      %v3766 = vadd.f32 %v3747, %v3765
      %3767 = vmatmul.bf16.gmra.mxu0 %v942
      %v3768 = vpop.f32.mrf.mxu0
      %v3769 = vadd.f32 %v3750, %v3768
      %v3770 = vpop.f32.mrf.mxu0
      %v3771 = vadd.f32 %v3752, %v3770
      %3772 = vdwg.mxu0
      %3773 = vmatpush.bf16.msra.mxu0 %v2455
      %3774 = vmatpush.bf16.msra.mxu0 %v2452
      %3775 = vmatpush.bf16.msra.mxu0 %v2449
      %3776 = vmatpush.bf16.msra.mxu0 %v2446
      %3777 = vmatpush.bf16.msra.mxu0 %v2443
      %3778 = vmatpush.bf16.msra.mxu0 %v2440
      %3779 = vmatpush.bf16.msra.mxu0 %v2437
      %3780 = vmatpush.bf16.msra.mxu0 %v2434
      %3781 = vmatmul.bf16.gmra.mxu0 %v927
      %v3782 = vpop.f32.mrf.mxu0
      %v3783 = vadd.f32 %v3764, %v3782
      %v3784 = vpop.f32.mrf.mxu0
      %v3785 = vadd.f32 %v3766, %v3784
      %3786 = vmatmul.bf16.gmra.mxu0 %v943
      %v3787 = vpop.f32.mrf.mxu0
      %v3788 = vadd.f32 %v3769, %v3787
      %v3789 = vpop.f32.mrf.mxu0
      %v3790 = vadd.f32 %v3771, %v3789
      %3791 = vdwg.mxu0
      %3792 = vmatpush.bf16.msra.mxu0 %v2479
      %3793 = vmatpush.bf16.msra.mxu0 %v2476
      %3794 = vmatpush.bf16.msra.mxu0 %v2473
      %3795 = vmatpush.bf16.msra.mxu0 %v2470
      %3796 = vmatpush.bf16.msra.mxu0 %v2467
      %3797 = vmatpush.bf16.msra.mxu0 %v2464
      %3798 = vmatpush.bf16.msra.mxu0 %v2461
      %3799 = vmatpush.bf16.msra.mxu0 %v2458
      %3800 = vmatmul.bf16.gmra.mxu0 %v928
      %v3801 = vpop.f32.mrf.mxu0
      %v3802 = vadd.f32 %v3783, %v3801
      %v3803 = vpop.f32.mrf.mxu0
      %v3804 = vadd.f32 %v3785, %v3803
      %3805 = vmatmul.bf16.gmra.mxu0 %v944
      %v3806 = vpop.f32.mrf.mxu0
      %v3807 = vadd.f32 %v3788, %v3806
      %v3808 = vpop.f32.mrf.mxu0
      %v3809 = vadd.f32 %v3790, %v3808
      %3810 = vdwg.mxu0
      %3811 = vmatpush.bf16.msra.mxu0 %v2503
      %3812 = vmatpush.bf16.msra.mxu0 %v2500
      %3813 = vmatpush.bf16.msra.mxu0 %v2497
      %3814 = vmatpush.bf16.msra.mxu0 %v2494
      %3815 = vmatpush.bf16.msra.mxu0 %v2491
      %3816 = vmatpush.bf16.msra.mxu0 %v2488
      %3817 = vmatpush.bf16.msra.mxu0 %v2485
      %3818 = vmatpush.bf16.msra.mxu0 %v2482
      %3819 = vmatmul.bf16.gmra.mxu0 %v929
      %v3820 = vpop.f32.mrf.mxu0
      %v3821 = vadd.f32 %v3802, %v3820
      %v3822 = vpop.f32.mrf.mxu0
      %v3823 = vadd.f32 %v3804, %v3822
      %3824 = vmatmul.bf16.gmra.mxu0 %v945
      %v3825 = vpop.f32.mrf.mxu0
      %v3826 = vadd.f32 %v3807, %v3825
      %v3827 = vpop.f32.mrf.mxu0
      %v3828 = vadd.f32 %v3809, %v3827
      %3829 = vdwg.mxu0
      %3830 = vmatpush.bf16.msra.mxu0 %v2527
      %3831 = vmatpush.bf16.msra.mxu0 %v2524
      %3832 = vmatpush.bf16.msra.mxu0 %v2521
      %3833 = vmatpush.bf16.msra.mxu0 %v2518
      %3834 = vmatpush.bf16.msra.mxu0 %v2515
      %3835 = vmatpush.bf16.msra.mxu0 %v2512
      %3836 = vmatpush.bf16.msra.mxu0 %v2509
      %3837 = vmatpush.bf16.msra.mxu0 %v2506
      %3838 = vmatmul.bf16.gmra.mxu0 %v930
      %v3839 = vpop.f32.mrf.mxu0
      %v3840 = vadd.f32 %v3821, %v3839
      %v3841 = vpop.f32.mrf.mxu0
      %v3842 = vadd.f32 %v3823, %v3841
      %3843 = vmatmul.bf16.gmra.mxu0 %v946
      %v3844 = vpop.f32.mrf.mxu0
      %v3845 = vadd.f32 %v3826, %v3844
      %v3846 = vpop.f32.mrf.mxu0
      %v3847 = vadd.f32 %v3828, %v3846
      %3848 = vdwg.mxu0
      %3849 = vmatpush.bf16.msra.mxu0 %v2551
      %3850 = vmatpush.bf16.msra.mxu0 %v2548
      %3851 = vmatpush.bf16.msra.mxu0 %v2545
      %3852 = vmatpush.bf16.msra.mxu0 %v2542
      %3853 = vmatpush.bf16.msra.mxu0 %v2539
      %3854 = vmatpush.bf16.msra.mxu0 %v2536
      %3855 = vmatpush.bf16.msra.mxu0 %v2533
      %3856 = vmatpush.bf16.msra.mxu0 %v2530
      %3857 = vmatmul.bf16.gmra.mxu0 %v931
      %v3858 = vpop.f32.mrf.mxu0
      %v3859 = vadd.f32 %v3840, %v3858
      %v3860 = vpop.f32.mrf.mxu0
      %v3861 = vadd.f32 %v3842, %v3860
      %3862 = vmatmul.bf16.gmra.mxu0 %v947
      %v3863 = vpop.f32.mrf.mxu0
      %v3864 = vadd.f32 %v3845, %v3863
      %v3865 = vpop.f32.mrf.mxu0
      %v3866 = vadd.f32 %v3847, %v3865
      %3867 = vdwg.mxu0
      %3868 = vmatpush.bf16.msra.mxu0 %v2575
      %3869 = vmatpush.bf16.msra.mxu0 %v2572
      %3870 = vmatpush.bf16.msra.mxu0 %v2569
      %3871 = vmatpush.bf16.msra.mxu0 %v2566
      %3872 = vmatpush.bf16.msra.mxu0 %v2563
      %3873 = vmatpush.bf16.msra.mxu0 %v2560
      %3874 = vmatpush.bf16.msra.mxu0 %v2557
      %3875 = vmatpush.bf16.msra.mxu0 %v2554
      %3876 = vmatmul.bf16.gmra.mxu0 %v932
      %v3877 = vpop.f32.mrf.mxu0
      %v3878 = vadd.f32 %v3859, %v3877
      %v3879 = vpop.f32.mrf.mxu0
      %v3880 = vadd.f32 %v3861, %v3879
      %3881 = vmatmul.bf16.gmra.mxu0 %v948
      %v3882 = vpop.f32.mrf.mxu0
      %v3883 = vadd.f32 %v3864, %v3882
      %v3884 = vpop.f32.mrf.mxu0
      %v3885 = vadd.f32 %v3866, %v3884
      %3886 = vdwg.mxu0
      %3887 = vmatpush.bf16.msra.mxu0 %v2599
      %3888 = vmatpush.bf16.msra.mxu0 %v2596
      %3889 = vmatpush.bf16.msra.mxu0 %v2593
      %3890 = vmatpush.bf16.msra.mxu0 %v2590
      %3891 = vmatpush.bf16.msra.mxu0 %v2587
      %3892 = vmatpush.bf16.msra.mxu0 %v2584
      %3893 = vmatpush.bf16.msra.mxu0 %v2581
      %3894 = vmatpush.bf16.msra.mxu0 %v2578
      %3895 = vmatmul.bf16.gmra.mxu0 %v933
      %v3896 = vpop.f32.mrf.mxu0
      %v3897 = vadd.f32 %v3878, %v3896
      %v3898 = vpop.f32.mrf.mxu0
      %v3899 = vadd.f32 %v3880, %v3898
      %3900 = vmatmul.bf16.gmra.mxu0 %v949
      %v3901 = vpop.f32.mrf.mxu0
      %v3902 = vadd.f32 %v3883, %v3901
      %v3903 = vpop.f32.mrf.mxu0
      %v3904 = vadd.f32 %v3885, %v3903
      %3905 = vdwg.mxu0
      %3906 = vmatpush.bf16.msra.mxu0 %v2623
      %3907 = vmatpush.bf16.msra.mxu0 %v2620
      %3908 = vmatpush.bf16.msra.mxu0 %v2617
      %3909 = vmatpush.bf16.msra.mxu0 %v2614
      %3910 = vmatpush.bf16.msra.mxu0 %v2611
      %3911 = vmatpush.bf16.msra.mxu0 %v2608
      %3912 = vmatpush.bf16.msra.mxu0 %v2605
      %3913 = vmatpush.bf16.msra.mxu0 %v2602
      %3914 = vmatmul.bf16.gmra.mxu0 %v934
      %v3915 = vpop.f32.mrf.mxu0
      %v3916 = vadd.f32 %v3897, %v3915
      %v3917 = vpop.f32.mrf.mxu0
      %v3918 = vadd.f32 %v3899, %v3917
      %3919 = vmatmul.bf16.gmra.mxu0 %v950
      %v3920 = vpop.f32.mrf.mxu0
      %v3921 = vadd.f32 %v3902, %v3920
      %v3922 = vpop.f32.mrf.mxu0
      %v3923 = vadd.f32 %v3904, %v3922
      %3924 = vdwg.mxu0
      %3925 = vmatpush.bf16.msra.mxu0 %v2647
      %3926 = vmatpush.bf16.msra.mxu0 %v2644
      %3927 = vmatpush.bf16.msra.mxu0 %v2641
      %3928 = vmatpush.bf16.msra.mxu0 %v2638
      %3929 = vmatpush.bf16.msra.mxu0 %v2635
      %3930 = vmatpush.bf16.msra.mxu0 %v2632
      %3931 = vmatpush.bf16.msra.mxu0 %v2629
      %3932 = vmatpush.bf16.msra.mxu0 %v2626
      %3933 = vmatmul.bf16.gmra.mxu0 %v935
      %v3934 = vpop.f32.mrf.mxu0
      %v3935 = vadd.f32 %v3916, %v3934
      %v3936 = vpop.f32.mrf.mxu0
      %v3937 = vadd.f32 %v3918, %v3936
      %3938 = vmatmul.bf16.gmra.mxu0 %v951
      %v3939 = vpop.f32.mrf.mxu0
      %v3940 = vadd.f32 %v3921, %v3939
      %v3941 = vpop.f32.mrf.mxu0
      %v3942 = vadd.f32 %v3923, %v3941
      %3943 = vdwg.mxu0
      %3944 = vst [vmem:[#allocation2] sm:$0xff] 0.0
      %3945 = vst [vmem:[#allocation2 + $0x8] sm:$0xff] 0.0
      %3946 = vst [vmem:[#allocation2 + $0x10] sm:$0xff] 0.0
      %3947 = vst [vmem:[#allocation2 + $0x18] sm:$0xff] 0.0
      %3948 = vst [vmem:[#allocation2 + $0x20] sm:$0xff] 0.0
      %3949 = vst [vmem:[#allocation2 + $0x28] sm:$0xff] 0.0
      %3950 = vst [vmem:[#allocation2 + $0x30] sm:$0x1] 0.0
      %3951 = vst [vmem:[#allocation2 + $0x38] sm:$0x1] 0.0
      %3952 = vst [vmem:[#allocation2 + $0x40] sm:$0x1] 0.0
      %3953 = vst [vmem:[#allocation2 + $0x48] sm:$0xff] 0.0
      %3954 = vst [vmem:[#allocation2 + $0x50] sm:$0xff] 0.0
      %3955 = vst [vmem:[#allocation2 + $0x58] sm:$0xff] 0.0
      %3956 = vst [vmem:[#allocation2 + $0x60] sm:$0xff] 0.0
      %3957 = vst [vmem:[#allocation2 + $0x68] sm:$0xff] 0.0
      %3958 = vst [vmem:[#allocation2 + $0x70] sm:$0xff] 0.0
      %3959 = vst [vmem:[#allocation2 + $0x78] sm:$0x1] 0.0
      %3960 = vst [vmem:[#allocation2 + $0x80] sm:$0x1] 0.0
      %3961 = vst [vmem:[#allocation2 + $0x88] sm:$0x1] 0.0
      %3962 = vst [vmem:[#allocation2 + $0x90] sm:$0xff] 0.0
      %3963 = vst [vmem:[#allocation2 + $0x98] sm:$0xff] 0.0
      %3964 = vst [vmem:[#allocation2 + $0xa0] sm:$0xff] 0.0
      %3965 = vst [vmem:[#allocation2 + $0xa8] sm:$0xff] 0.0
      %3966 = vst [vmem:[#allocation2 + $0xb0] sm:$0xff] 0.0
      %3967 = vst [vmem:[#allocation2 + $0xb8] sm:$0xff] 0.0
      %3968 = vst [vmem:[#allocation2 + $0xc0] sm:$0x1] 0.0
      %3969 = vst [vmem:[#allocation2 + $0xc8] sm:$0x1] 0.0
      %3970 = vst [vmem:[#allocation2 + $0xd0] sm:$0x1] 0.0
      %3971 = vst [vmem:[#allocation2 + $0xd8] sm:$0xff] 0.0
      %3972 = vst [vmem:[#allocation2 + $0xe0] sm:$0xff] 0.0
      %3973 = vst [vmem:[#allocation2 + $0xe8] sm:$0xff] 0.0
      %3974 = vst [vmem:[#allocation2 + $0xf0] sm:$0xff] 0.0
      %3975 = vst [vmem:[#allocation2 + $0xf8] sm:$0xff] 0.0
      %3976 = vst [vmem:[#allocation2 + $0x100] sm:$0xff] 0.0
      %3977 = vst [vmem:[#allocation2 + $0x108] sm:$0x1] 0.0
      %3978 = vst [vmem:[#allocation2 + $0x110] sm:$0x1] 0.0
      %3979 = vst [vmem:[#allocation2 + $0x118] sm:$0x1] 0.0
      %3980 = vst [vmem:[#allocation2 + $0x120] sm:$0xff] 0.0
      %3981 = vst [vmem:[#allocation2 + $0x128] sm:$0xff] 0.0
      %3982 = vst [vmem:[#allocation2 + $0x130] sm:$0xff] 0.0
      %3983 = vst [vmem:[#allocation2 + $0x138] sm:$0xff] 0.0
      %3984 = vst [vmem:[#allocation2 + $0x140] sm:$0xff] 0.0
      %3985 = vst [vmem:[#allocation2 + $0x148] sm:$0xff] 0.0
      %3986 = vst [vmem:[#allocation2 + $0x150] sm:$0x1] 0.0
      %3987 = vst [vmem:[#allocation2 + $0x158] sm:$0x1] 0.0
      %3988 = vst [vmem:[#allocation2 + $0x160] sm:$0x1] 0.0
      %3989 = vst [vmem:[#allocation2 + $0x168] sm:$0xff] 0.0
      %3990 = vst [vmem:[#allocation2 + $0x170] sm:$0xff] 0.0
      %3991 = vst [vmem:[#allocation2 + $0x178] sm:$0xff] 0.0
      %3992 = vst [vmem:[#allocation2 + $0x180] sm:$0xff] 0.0
      %3993 = vst [vmem:[#allocation2 + $0x188] sm:$0xff] 0.0
      %3994 = vst [vmem:[#allocation2 + $0x190] sm:$0xff] 0.0
      %3995 = vst [vmem:[#allocation2 + $0x198] sm:$0x1] 0.0
      %3996 = vst [vmem:[#allocation2 + $0x1a0] sm:$0x1] 0.0
      %3997 = vst [vmem:[#allocation2 + $0x1a8] sm:$0x1] 0.0
      %s3998 = scalar_lea.vmem [#allocation2], 72
      %3999 = vst [vmem:[%s3998 + $0x18] sm:$0xff] %v3327
      %4000 = vst [vmem:[%s3998 + $0x20] sm:$0xff] %v3631
      %4001 = vst [vmem:[%s3998 + $0x28] sm:$0xff] %v3935
      %4002 = vst [vmem:[%s3998 + $0x60] sm:$0xff] %v3329
      %4003 = vst [vmem:[%s3998 + $0x68] sm:$0xff] %v3633
      %4004 = vst [vmem:[%s3998 + $0x70] sm:$0xff] %v3937
      %4005 = vst [vmem:[%s3998 + $0xa8] sm:$0xff] %v3332
      %4006 = vst [vmem:[%s3998 + $0xb0] sm:$0xff] %v3636
      %4007 = vst [vmem:[%s3998 + $0xb8] sm:$0xff] %v3940
      %4008 = vst [vmem:[%s3998 + $0xf0] sm:$0xff] %v3334
      %4009 = vst [vmem:[%s3998 + $0xf8] sm:$0xff] %v3638
      %4010 = vst [vmem:[%s3998 + $0x100] sm:$0xff] %v3942
      %v4011 = vld [vmem:[#allocation2] sm:$0x80]
      %v4012 = vld [vmem:[#allocation2 + $0x18] sm:$0x7f]
      %v4013 = vld [vmem:[#allocation2 + $0x48] sm:$0x80]
      %v4014 = vld [vmem:[#allocation2 + $0x60] sm:$0x7f]
      %v4015 = vld [vmem:[#allocation2 + $0x90] sm:$0x80]
      %v4016 = vld [vmem:[#allocation2 + $0xa8] sm:$0x7f]
      %v4017 = vld [vmem:[#allocation2 + $0xd8] sm:$0x80]
      %v4018 = vld [vmem:[#allocation2 + $0xf0] sm:$0x7f]
      %vm4027 = vcmask 1040384
      %v4028 = vrot.slane %v4011, 7
      %v4029 = vrot.slane %v4012, 7
      %v4030 = vsel %vm4027, %v4028, %v4029
      %v4031 = vrot.slane %v4013, 7
      %v4032 = vrot.slane %v4014, 7
      %v4033 = vsel %vm4027, %v4031, %v4032
      %v4034 = vrot.slane %v4015, 7
      %v4035 = vrot.slane %v4016, 7
      %v4036 = vsel %vm4027, %v4034, %v4035
      %v4037 = vrot.slane %v4017, 7
      %v4038 = vrot.slane %v4018, 7
      %v4039 = vsel %vm4027, %v4037, %v4038
      %v4044 = vadd.f32 %v4030, 0.0
      %v4045 = vadd.f32 %v4033, 0.0
      %v4046 = vadd.f32 %v4036, 0.0
      %v4047 = vadd.f32 %v4039, 0.0
      %v4048 = vld [vmem:[#allocation2 + $0x18] sm:$0xff]
      %v4049 = vld [vmem:[#allocation2 + $0x60] sm:$0xff]
      %v4050 = vld [vmem:[#allocation2 + $0xa8] sm:$0xff]
      %v4051 = vld [vmem:[#allocation2 + $0xf0] sm:$0xff]
      %4056 = vrot.lane.b32.xlu0 %v4048, 96
      %v4057 = vpop.permute.xlu0 %4056
      %4058 = vrot.lane.b32.xlu0 %v4049, 96
      %v4059 = vpop.permute.xlu0 %4058
      %4060 = vrot.lane.b32.xlu0 %v4050, 96
      %v4061 = vpop.permute.xlu0 %4060
      %4062 = vrot.lane.b32.xlu0 %v4051, 96
      %v4063 = vpop.permute.xlu0 %4062
      %v4068 = vadd.f32 %v4044, %v4057
      %v4069 = vadd.f32 %v4045, %v4059
      %v4070 = vadd.f32 %v4046, %v4061
      %v4071 = vadd.f32 %v4047, %v4063
      %v4072 = vld [vmem:[#allocation2 + $0x18] sm:$0xfe]
      %v4073 = vld [vmem:[#allocation2 + $0x30] sm:$0x1]
      %v4074 = vld [vmem:[#allocation2 + $0x60] sm:$0xfe]
      %v4075 = vld [vmem:[#allocation2 + $0x78] sm:$0x1]
      %v4076 = vld [vmem:[#allocation2 + $0xa8] sm:$0xfe]
      %v4077 = vld [vmem:[#allocation2 + $0xc0] sm:$0x1]
      %v4078 = vld [vmem:[#allocation2 + $0xf0] sm:$0xfe]
      %v4079 = vld [vmem:[#allocation2 + $0x108] sm:$0x1]
      %vm4088 = vcmask 1046528
      %v4089 = vrot.slane %v4072, 1
      %v4090 = vrot.slane %v4073, 1
      %v4091 = vsel %vm4088, %v4089, %v4090
      %v4092 = vrot.slane %v4074, 1
      %v4093 = vrot.slane %v4075, 1
      %v4094 = vsel %vm4088, %v4092, %v4093
      %v4095 = vrot.slane %v4076, 1
      %v4096 = vrot.slane %v4077, 1
      %v4097 = vsel %vm4088, %v4095, %v4096
      %v4098 = vrot.slane %v4078, 1
      %v4099 = vrot.slane %v4079, 1
      %v4100 = vsel %vm4088, %v4098, %v4099
      %4101 = vrot.lane.b32.xlu0 %v4091, 64
      %v4102 = vpop.permute.xlu0 %4101
      %4103 = vrot.lane.b32.xlu0 %v4094, 64
      %v4104 = vpop.permute.xlu0 %4103
      %4105 = vrot.lane.b32.xlu0 %v4097, 64
      %v4106 = vpop.permute.xlu0 %4105
      %4107 = vrot.lane.b32.xlu0 %v4100, 64
      %v4108 = vpop.permute.xlu0 %4107
      %v4113 = vadd.f32 %v4068, %v4102
      %v4114 = vadd.f32 %v4069, %v4104
      %v4115 = vadd.f32 %v4070, %v4106
      %v4116 = vadd.f32 %v4071, %v4108
      %v4117 = vld [vmem:[%s3998] sm:$0x80]
      %v4118 = vld [vmem:[%s3998 + $0x18] sm:$0x7f]
      %v4119 = vld [vmem:[%s3998 + $0x48] sm:$0x80]
      %v4120 = vld [vmem:[%s3998 + $0x60] sm:$0x7f]
      %v4121 = vld [vmem:[%s3998 + $0x90] sm:$0x80]
      %v4122 = vld [vmem:[%s3998 + $0xa8] sm:$0x7f]
      %v4123 = vld [vmem:[%s3998 + $0xd8] sm:$0x80]
      %v4124 = vld [vmem:[%s3998 + $0xf0] sm:$0x7f]
      %v4133 = vrot.slane %v4117, 7
      %v4134 = vrot.slane %v4118, 7
      %v4135 = vsel %vm4027, %v4133, %v4134
      %v4136 = vrot.slane %v4119, 7
      %v4137 = vrot.slane %v4120, 7
      %v4138 = vsel %vm4027, %v4136, %v4137
      %v4139 = vrot.slane %v4121, 7
      %v4140 = vrot.slane %v4122, 7
      %v4141 = vsel %vm4027, %v4139, %v4140
      %v4142 = vrot.slane %v4123, 7
      %v4143 = vrot.slane %v4124, 7
      %v4144 = vsel %vm4027, %v4142, %v4143
      %4145 = vrot.lane.b32.xlu0 %v4135, 32
      %v4146 = vpop.permute.xlu0 %4145
      %4147 = vrot.lane.b32.xlu0 %v4138, 32
      %v4148 = vpop.permute.xlu0 %4147
      %4149 = vrot.lane.b32.xlu0 %v4141, 32
      %v4150 = vpop.permute.xlu0 %4149
      %4151 = vrot.lane.b32.xlu0 %v4144, 32
      %v4152 = vpop.permute.xlu0 %4151
      %v4157 = vadd.f32 %v4113, %v4146
      %v4158 = vadd.f32 %v4114, %v4148
      %v4159 = vadd.f32 %v4115, %v4150
      %v4160 = vadd.f32 %v4116, %v4152
      %v4161 = vld [vmem:[%s3998 + $0x20] sm:$0xff]
      %v4162 = vld [vmem:[%s3998 + $0x68] sm:$0xff]
      %v4163 = vld [vmem:[%s3998 + $0xb0] sm:$0xff]
      %v4164 = vld [vmem:[%s3998 + $0xf8] sm:$0xff]
      %v4165 = vadd.f32 %v4157, %v4161
      %v4166 = vadd.f32 %v4158, %v4162
      %v4167 = vadd.f32 %v4159, %v4163
      %v4168 = vadd.f32 %v4160, %v4164
      %v4169 = vld [vmem:[%s3998 + $0x20] sm:$0xfe]
      %v4170 = vld [vmem:[%s3998 + $0x38] sm:$0x1]
      %v4171 = vld [vmem:[%s3998 + $0x68] sm:$0xfe]
      %v4172 = vld [vmem:[%s3998 + $0x80] sm:$0x1]
      %v4173 = vld [vmem:[%s3998 + $0xb0] sm:$0xfe]
      %v4174 = vld [vmem:[%s3998 + $0xc8] sm:$0x1]
      %v4175 = vld [vmem:[%s3998 + $0xf8] sm:$0xfe]
      %v4176 = vld [vmem:[%s3998 + $0x110] sm:$0x1]
      %v4185 = vrot.slane %v4169, 1
      %v4186 = vrot.slane %v4170, 1
      %v4187 = vsel %vm4088, %v4185, %v4186
      %v4188 = vrot.slane %v4171, 1
      %v4189 = vrot.slane %v4172, 1
      %v4190 = vsel %vm4088, %v4188, %v4189
      %v4191 = vrot.slane %v4173, 1
      %v4192 = vrot.slane %v4174, 1
      %v4193 = vsel %vm4088, %v4191, %v4192
      %v4194 = vrot.slane %v4175, 1
      %v4195 = vrot.slane %v4176, 1
      %v4196 = vsel %vm4088, %v4194, %v4195
      %4197 = vrot.lane.b32.xlu0 %v4187, 96
      %v4198 = vpop.permute.xlu0 %4197
      %4199 = vrot.lane.b32.xlu0 %v4190, 96
      %v4200 = vpop.permute.xlu0 %4199
      %4201 = vrot.lane.b32.xlu0 %v4193, 96
      %v4202 = vpop.permute.xlu0 %4201
      %4203 = vrot.lane.b32.xlu0 %v4196, 96
      %v4204 = vpop.permute.xlu0 %4203
      %v4209 = vadd.f32 %v4165, %v4198
      %v4210 = vadd.f32 %v4166, %v4200
      %v4211 = vadd.f32 %v4167, %v4202
      %v4212 = vadd.f32 %v4168, %v4204
      %s4213 = scalar_lea.vmem [#allocation2], 144
      %v4214 = vld [vmem:[%s4213 + $0x8] sm:$0x80]
      %v4215 = vld [vmem:[%s4213 + $0x20] sm:$0x7f]
      %v4216 = vld [vmem:[%s4213 + $0x50] sm:$0x80]
      %v4217 = vld [vmem:[%s4213 + $0x68] sm:$0x7f]
      %v4218 = vld [vmem:[%s4213 + $0x98] sm:$0x80]
      %v4219 = vld [vmem:[%s4213 + $0xb0] sm:$0x7f]
      %v4220 = vld [vmem:[%s4213 + $0xe0] sm:$0x80]
      %v4221 = vld [vmem:[%s4213 + $0xf8] sm:$0x7f]
      %v4230 = vrot.slane %v4214, 7
      %v4231 = vrot.slane %v4215, 7
      %v4232 = vsel %vm4027, %v4230, %v4231
      %v4233 = vrot.slane %v4216, 7
      %v4234 = vrot.slane %v4217, 7
      %v4235 = vsel %vm4027, %v4233, %v4234
      %v4236 = vrot.slane %v4218, 7
      %v4237 = vrot.slane %v4219, 7
      %v4238 = vsel %vm4027, %v4236, %v4237
      %v4239 = vrot.slane %v4220, 7
      %v4240 = vrot.slane %v4221, 7
      %v4241 = vsel %vm4027, %v4239, %v4240
      %4242 = vrot.lane.b32.xlu0 %v4232, 64
      %v4243 = vpop.permute.xlu0 %4242
      %4244 = vrot.lane.b32.xlu0 %v4235, 64
      %v4245 = vpop.permute.xlu0 %4244
      %4246 = vrot.lane.b32.xlu0 %v4238, 64
      %v4247 = vpop.permute.xlu0 %4246
      %4248 = vrot.lane.b32.xlu0 %v4241, 64
      %v4249 = vpop.permute.xlu0 %4248
      %v4254 = vadd.f32 %v4209, %v4243
      %v4255 = vadd.f32 %v4210, %v4245
      %v4256 = vadd.f32 %v4211, %v4247
      %v4257 = vadd.f32 %v4212, %v4249
      %v4258 = vld [vmem:[%s4213 + $0x20] sm:$0xff]
      %v4259 = vld [vmem:[%s4213 + $0x68] sm:$0xff]
      %v4260 = vld [vmem:[%s4213 + $0xb0] sm:$0xff]
      %v4261 = vld [vmem:[%s4213 + $0xf8] sm:$0xff]
      %4266 = vrot.lane.b32.xlu0 %v4258, 32
      %v4267 = vpop.permute.xlu0 %4266
      %4268 = vrot.lane.b32.xlu0 %v4259, 32
      %v4269 = vpop.permute.xlu0 %4268
      %4270 = vrot.lane.b32.xlu0 %v4260, 32
      %v4271 = vpop.permute.xlu0 %4270
      %4272 = vrot.lane.b32.xlu0 %v4261, 32
      %v4273 = vpop.permute.xlu0 %4272
      %v4278 = vadd.f32 %v4254, %v4267
      %v4279 = vadd.f32 %v4255, %v4269
      %v4280 = vadd.f32 %v4256, %v4271
      %v4281 = vadd.f32 %v4257, %v4273
      %v4282 = vld [vmem:[%s4213 + $0x28] sm:$0xfe]
      %v4283 = vld [vmem:[%s4213 + $0x40] sm:$0x1]
      %v4284 = vld [vmem:[%s4213 + $0x70] sm:$0xfe]
      %v4285 = vld [vmem:[%s4213 + $0x88] sm:$0x1]
      %v4286 = vld [vmem:[%s4213 + $0xb8] sm:$0xfe]
      %v4287 = vld [vmem:[%s4213 + $0xd0] sm:$0x1]
      %v4288 = vld [vmem:[%s4213 + $0x100] sm:$0xfe]
      %v4289 = vld [vmem:[%s4213 + $0x118] sm:$0x1]
      %v4298 = vrot.slane %v4282, 1
      %v4299 = vrot.slane %v4283, 1
      %v4300 = vsel %vm4088, %v4298, %v4299
      %v4301 = vrot.slane %v4284, 1
      %v4302 = vrot.slane %v4285, 1
      %v4303 = vsel %vm4088, %v4301, %v4302
      %v4304 = vrot.slane %v4286, 1
      %v4305 = vrot.slane %v4287, 1
      %v4306 = vsel %vm4088, %v4304, %v4305
      %v4307 = vrot.slane %v4288, 1
      %v4308 = vrot.slane %v4289, 1
      %v4309 = vsel %vm4088, %v4307, %v4308
      %v4314 = vadd.f32 %v4278, %v4300
      %v4315 = vadd.f32 %v4279, %v4303
      %v4316 = vadd.f32 %v4280, %v4306
      %v4317 = vadd.f32 %v4281, %v4309
      %v4318 = vld [vmem:[%s2] sm:$0x1]
      %v4320 = vperm.slane %v4318, 0
      %v4322 = vmul.f32 %v4314, %v4320
      %v4323 = vmul.f32 %v4315, %v4320
      %v4324 = vmul.f32 %v4316, %v4320
      %v4325 = vmul.f32 %v4317, %v4320
      %v4326 = vld [vmem:[%s3] sm:$0x1]
      %v4328 = vperm.slane %v4326, 0
      %v4330 = vadd.f32 %v4322, %v4328
      %v4331 = vadd.f32 %v4323, %v4328
      %v4332 = vadd.f32 %v4324, %v4328
      %v4333 = vadd.f32 %v4325, %v4328
      %v4334 = vmax.f32 %v4330, 0.0
      %v4335 = vmax.f32 %v4331, 0.0
      %v4336 = vmax.f32 %v4332, 0.0
      %v4337 = vmax.f32 %v4333, 0.0
      %vm4338 = vcmask 261120
      %4339 = vst.msk [vmem:[#allocation3] sm:$0xff] %vm4338, 0.0
      %4340 = vst.msk [vmem:[#allocation3 + $0x8] sm:$0xff] %vm4338, 0.0
      %vm4341 = vcmask 253952
      %4342 = vst.msk [vmem:[#allocation3 + $0x10] sm:$0x1] %vm4341, 0.0
      %4343 = vst.msk [vmem:[#allocation3 + $0x18] sm:$0xff] %vm4338, 0.0
      %4344 = vst.msk [vmem:[#allocation3 + $0x20] sm:$0xff] %vm4338, 0.0
      %4345 = vst.msk [vmem:[#allocation3 + $0x28] sm:$0x1] %vm4341, 0.0
      %4346 = vst.msk [vmem:[#allocation3 + $0x30] sm:$0xff] %vm4338, 0.0
      %4347 = vst.msk [vmem:[#allocation3 + $0x38] sm:$0xff] %vm4338, 0.0
      %4348 = vst.msk [vmem:[#allocation3 + $0x40] sm:$0x1] %vm4341, 0.0
      %4349 = vst.msk [vmem:[#allocation3 + $0x48] sm:$0xff] %vm4338, 0.0
      %4350 = vst.msk [vmem:[#allocation3 + $0x50] sm:$0xff] %vm4338, 0.0
      %4351 = vst.msk [vmem:[#allocation3 + $0x58] sm:$0x1] %vm4341, 0.0
      %4352 = vst.msk [vmem:[#allocation3 + $0x60] sm:$0xff] %vm4338, 0.0
      %4353 = vst.msk [vmem:[#allocation3 + $0x68] sm:$0xff] %vm4338, 0.0
      %4354 = vst.msk [vmem:[#allocation3 + $0x70] sm:$0x1] %vm4341, 0.0
      %4355 = vst.msk [vmem:[#allocation3 + $0x78] sm:$0xff] %vm4338, 0.0
      %4356 = vst.msk [vmem:[#allocation3 + $0x80] sm:$0xff] %vm4338, 0.0
      %4357 = vst.msk [vmem:[#allocation3 + $0x88] sm:$0x1] %vm4341, 0.0
      %s4358 = scalar_lea.vmem [#allocation3], 24
      %4359 = vst.msk [vmem:[%s4358 + $0x8] sm:$0xff] %vm4338, %v4334
      %4360 = vst.msk [vmem:[%s4358 + $0x20] sm:$0xff] %vm4338, %v4335
      %4361 = vst.msk [vmem:[%s4358 + $0x38] sm:$0xff] %vm4338, %v4336
      %4362 = vst.msk [vmem:[%s4358 + $0x50] sm:$0xff] %vm4338, %v4337
      %v4363 = vld [vmem:[#allocation3 + $0x7] sm:$0xff]
      %v4364 = vld [vmem:[#allocation3 + $0x1f] sm:$0xff]
      %v4365 = vld [vmem:[#allocation3 + $0x37] sm:$0xff]
      %v4366 = vld [vmem:[#allocation3 + $0x4f] sm:$0xff]
      %v4367 = vld [vmem:[#allocation3 + $0x8] sm:$0xff]
      %v4368 = vld [vmem:[#allocation3 + $0x20] sm:$0xff]
      %v4369 = vld [vmem:[#allocation3 + $0x38] sm:$0xff]
      %v4370 = vld [vmem:[#allocation3 + $0x50] sm:$0xff]
      %v4371 = vld [vmem:[#allocation3 + $0x9] sm:$0xff]
      %v4372 = vld [vmem:[#allocation3 + $0x21] sm:$0xff]
      %v4373 = vld [vmem:[#allocation3 + $0x39] sm:$0xff]
      %v4374 = vld [vmem:[#allocation3 + $0x51] sm:$0xff]
      %v4375 = vld [vmem:[%s4358 + $0x7] sm:$0xff]
      %v4376 = vld [vmem:[%s4358 + $0x1f] sm:$0xff]
      %v4377 = vld [vmem:[%s4358 + $0x37] sm:$0xff]
      %v4378 = vld [vmem:[%s4358 + $0x4f] sm:$0xff]
      %v4379 = vld [vmem:[%s4358 + $0x8] sm:$0xff]
      %v4380 = vld [vmem:[%s4358 + $0x20] sm:$0xff]
      %v4381 = vld [vmem:[%s4358 + $0x38] sm:$0xff]
      %v4382 = vld [vmem:[%s4358 + $0x50] sm:$0xff]
      %v4383 = vld [vmem:[%s4358 + $0x9] sm:$0xff]
      %v4384 = vld [vmem:[%s4358 + $0x21] sm:$0xff]
      %v4385 = vld [vmem:[%s4358 + $0x39] sm:$0xff]
      %v4386 = vld [vmem:[%s4358 + $0x51] sm:$0xff]
      %s4387 = scalar_lea.vmem [#allocation3], 48
      %v4388 = vld [vmem:[%s4387 + $0x7] sm:$0xff]
      %v4389 = vld [vmem:[%s4387 + $0x1f] sm:$0xff]
      %v4390 = vld [vmem:[%s4387 + $0x37] sm:$0xff]
      %v4391 = vld [vmem:[%s4387 + $0x4f] sm:$0xff]
      %v4392 = vld [vmem:[%s4387 + $0x8] sm:$0xff]
      %v4393 = vld [vmem:[%s4387 + $0x20] sm:$0xff]
      %v4394 = vld [vmem:[%s4387 + $0x38] sm:$0xff]
      %v4395 = vld [vmem:[%s4387 + $0x50] sm:$0xff]
      %v4396 = vld [vmem:[%s4387 + $0x9] sm:$0xff]
      %v4397 = vld [vmem:[%s4387 + $0x21] sm:$0xff]
      %v4398 = vld [vmem:[%s4387 + $0x39] sm:$0xff]
      %v4399 = vld [vmem:[%s4387 + $0x51] sm:$0xff]
      %4404 = vrot.lane.b32.xlu0 %v4367, 32
      %v4405 = vpop.permute.xlu0 %4404
      %4406 = vrot.lane.b32.xlu0 %v4368, 32
      %v4407 = vpop.permute.xlu0 %4406
      %4408 = vrot.lane.b32.xlu0 %v4369, 32
      %v4409 = vpop.permute.xlu0 %4408
      %4410 = vrot.lane.b32.xlu0 %v4370, 32
      %v4411 = vpop.permute.xlu0 %4410
      %4420 = vrot.lane.b32.xlu0 %v4371, 64
      %v4421 = vpop.permute.xlu0 %4420
      %4422 = vrot.lane.b32.xlu0 %v4372, 64
      %v4423 = vpop.permute.xlu0 %4422
      %4424 = vrot.lane.b32.xlu0 %v4373, 64
      %v4425 = vpop.permute.xlu0 %4424
      %4426 = vrot.lane.b32.xlu0 %v4374, 64
      %v4427 = vpop.permute.xlu0 %4426
      %4436 = vrot.lane.b32.xlu0 %v4375, 96
      %v4437 = vpop.permute.xlu0 %4436
      %4438 = vrot.lane.b32.xlu0 %v4376, 96
      %v4439 = vpop.permute.xlu0 %4438
      %4440 = vrot.lane.b32.xlu0 %v4377, 96
      %v4441 = vpop.permute.xlu0 %4440
      %4442 = vrot.lane.b32.xlu0 %v4378, 96
      %v4443 = vpop.permute.xlu0 %4442
      %4452 = vrot.lane.b32.xlu0 %v4383, 32
      %v4453 = vpop.permute.xlu0 %4452
      %4454 = vrot.lane.b32.xlu0 %v4384, 32
      %v4455 = vpop.permute.xlu0 %4454
      %4456 = vrot.lane.b32.xlu0 %v4385, 32
      %v4457 = vpop.permute.xlu0 %4456
      %4458 = vrot.lane.b32.xlu0 %v4386, 32
      %v4459 = vpop.permute.xlu0 %4458
      %4468 = vrot.lane.b32.xlu0 %v4388, 64
      %v4469 = vpop.permute.xlu0 %4468
      %4470 = vrot.lane.b32.xlu0 %v4389, 64
      %v4471 = vpop.permute.xlu0 %4470
      %4472 = vrot.lane.b32.xlu0 %v4390, 64
      %v4473 = vpop.permute.xlu0 %4472
      %4474 = vrot.lane.b32.xlu0 %v4391, 64
      %v4475 = vpop.permute.xlu0 %4474
      %4484 = vrot.lane.b32.xlu0 %v4392, 96
      %v4485 = vpop.permute.xlu0 %4484
      %4486 = vrot.lane.b32.xlu0 %v4393, 96
      %v4487 = vpop.permute.xlu0 %4486
      %4488 = vrot.lane.b32.xlu0 %v4394, 96
      %v4489 = vpop.permute.xlu0 %4488
      %4490 = vrot.lane.b32.xlu0 %v4395, 96
      %v4491 = vpop.permute.xlu0 %4490
      %v4496 = vsel %vm4338, %v4363, %v4405
      %v4497 = vsel %vm4338, %v4364, %v4407
      %v4498 = vsel %vm4338, %v4365, %v4409
      %v4499 = vsel %vm4338, %v4366, %v4411
      %vm4500 = vcmask 523264
      %v4501 = vsel %vm4500, %v4496, %v4421
      %v4502 = vsel %vm4500, %v4497, %v4423
      %v4503 = vsel %vm4500, %v4498, %v4425
      %v4504 = vsel %vm4500, %v4499, %v4427
      %vm4505 = vcmask 785408
      %v4506 = vsel %vm4505, %v4501, %v4437
      %v4507 = vsel %vm4505, %v4502, %v4439
      %v4508 = vsel %vm4505, %v4503, %v4441
      %v4509 = vsel %vm4505, %v4504, %v4443
      %v4510 = vsel %vm4338, %v4379, %v4453
      %v4511 = vsel %vm4338, %v4380, %v4455
      %v4512 = vsel %vm4338, %v4381, %v4457
      %v4513 = vsel %vm4338, %v4382, %v4459
      %v4514 = vsel %vm4500, %v4510, %v4469
      %v4515 = vsel %vm4500, %v4511, %v4471
      %v4516 = vsel %vm4500, %v4512, %v4473
      %v4517 = vsel %vm4500, %v4513, %v4475
      %v4518 = vsel %vm4505, %v4514, %v4485
      %v4519 = vsel %vm4505, %v4515, %v4487
      %v4520 = vsel %vm4505, %v4516, %v4489
      %v4521 = vsel %vm4505, %v4517, %v4491
      %v4522 = vpack.c.bf16 %v4507, %v4506
      %v4523 = vpack.c.bf16 %v4519, %v4518
      %v4524 = vpack.c.bf16 %v4397, %v4396
      %v4525 = vpack.c.bf16 %v4509, %v4508
      %v4526 = vpack.c.bf16 %v4521, %v4520
      %v4527 = vpack.c.bf16 %v4399, %v4398
      %v4528 = vld [vmem:[%s4] sm:$0xf]
      %v4529 = vld [vmem:[%s4 + $0x4] sm:$0xf]
      %v4530 = vld [vmem:[%s4 + $0x8] sm:$0xf]
      %v4531 = vld [vmem:[%s4 + $0xc] sm:$0xf]
      %v4532 = vld [vmem:[%s4 + $0x10] sm:$0xf]
      %v4533 = vld [vmem:[%s4 + $0x14] sm:$0xf]
      %v4534 = vld [vmem:[%s4 + $0x18] sm:$0xf]
      %v4535 = vld [vmem:[%s4 + $0x1c] sm:$0xf]
      %v4536 = vld [vmem:[%s4 + $0x20] sm:$0xf]
      %v4537 = vld [vmem:[%s4 + $0x24] sm:$0xf]
      %v4538 = vld [vmem:[%s4 + $0x28] sm:$0xf]
      %v4539 = vld [vmem:[%s4 + $0x2c] sm:$0xf]
      %v4540 = vld [vmem:[%s4 + $0x30] sm:$0xf]
      %v4541 = vld [vmem:[%s4 + $0x34] sm:$0xf]
      %v4542 = vld [vmem:[%s4 + $0x38] sm:$0xf]
      %v4543 = vld [vmem:[%s4 + $0x3c] sm:$0xf]
      %v4544 = vld [vmem:[%s4 + $0x40] sm:$0xf]
      %v4545 = vld [vmem:[%s4 + $0x44] sm:$0xf]
      %v4546 = vld [vmem:[%s4 + $0x48] sm:$0xf]
      %v4547 = vld [vmem:[%s4 + $0x4c] sm:$0xf]
      %v4548 = vld [vmem:[%s4 + $0x50] sm:$0xf]
      %v4549 = vld [vmem:[%s4 + $0x54] sm:$0xf]
      %v4550 = vld [vmem:[%s4 + $0x58] sm:$0xf]
      %v4551 = vld [vmem:[%s4 + $0x5c] sm:$0xf]
      %v4552 = vld [vmem:[%s4 + $0x60] sm:$0xf]
      %v4553 = vld [vmem:[%s4 + $0x64] sm:$0xf]
      %v4554 = vld [vmem:[%s4 + $0x68] sm:$0xf]
      %v4555 = vld [vmem:[%s4 + $0x6c] sm:$0xf]
      %v4556 = vld [vmem:[%s4 + $0x70] sm:$0xf]
      %v4557 = vld [vmem:[%s4 + $0x74] sm:$0xf]
      %v4558 = vld [vmem:[%s4 + $0x78] sm:$0xf]
      %v4559 = vld [vmem:[%s4 + $0x7c] sm:$0xf]
      %v4560 = vld [vmem:[%s4 + $0x80] sm:$0xf]
      %v4561 = vld [vmem:[%s4 + $0x84] sm:$0xf]
      %v4562 = vld [vmem:[%s4 + $0x88] sm:$0xf]
      %v4563 = vld [vmem:[%s4 + $0x8c] sm:$0xf]
      %v4600 = vunpack.c.l.b16 %v4528
      %v4601 = vunpack.c.l.b16 %v4529
      %v4602 = vunpack.c.l.b16 %v4530
      %v4603 = vunpack.c.l.b16 %v4531
      %v4604 = vunpack.c.l.b16 %v4532
      %v4605 = vunpack.c.l.b16 %v4533
      %v4606 = vunpack.c.l.b16 %v4534
      %v4607 = vunpack.c.l.b16 %v4535
      %v4608 = vunpack.c.l.b16 %v4536
      %v4609 = vunpack.c.l.b16 %v4537
      %v4610 = vunpack.c.l.b16 %v4538
      %v4611 = vunpack.c.l.b16 %v4539
      %v4612 = vunpack.c.l.b16 %v4540
      %v4613 = vunpack.c.l.b16 %v4541
      %v4614 = vunpack.c.l.b16 %v4542
      %v4615 = vunpack.c.l.b16 %v4543
      %v4616 = vunpack.c.l.b16 %v4544
      %v4617 = vunpack.c.l.b16 %v4545
      %v4618 = vunpack.c.l.b16 %v4546
      %v4619 = vunpack.c.l.b16 %v4547
      %v4620 = vunpack.c.l.b16 %v4548
      %v4621 = vunpack.c.l.b16 %v4549
      %v4622 = vunpack.c.l.b16 %v4550
      %v4623 = vunpack.c.l.b16 %v4551
      %v4624 = vunpack.c.l.b16 %v4552
      %v4625 = vunpack.c.l.b16 %v4553
      %v4626 = vunpack.c.l.b16 %v4554
      %v4627 = vunpack.c.l.b16 %v4555
      %v4628 = vunpack.c.l.b16 %v4556
      %v4629 = vunpack.c.l.b16 %v4557
      %v4630 = vunpack.c.l.b16 %v4558
      %v4631 = vunpack.c.l.b16 %v4559
      %v4632 = vunpack.c.l.b16 %v4560
      %v4633 = vunpack.c.l.b16 %v4561
      %v4634 = vunpack.c.l.b16 %v4562
      %v4635 = vunpack.c.l.b16 %v4563
      %v4636 = vpack.c.b16 %v4601, %v4600
      %v4637 = vpack.c.b16 %v4603, %v4602
      %v4638 = vpack.c.b16 %v4605, %v4604
      %v4639 = vpack.c.b16 %v4607, %v4606
      %v4640 = vpack.c.b16 %v4609, %v4608
      %v4641 = vpack.c.b16 %v4611, %v4610
      %v4642 = vpack.c.b16 %v4613, %v4612
      %v4643 = vpack.c.b16 %v4615, %v4614
      %v4644 = vpack.c.b16 %v4617, %v4616
      %v4645 = vpack.c.b16 %v4619, %v4618
      %v4646 = vpack.c.b16 %v4621, %v4620
      %v4647 = vpack.c.b16 %v4623, %v4622
      %v4648 = vpack.c.b16 %v4625, %v4624
      %v4649 = vpack.c.b16 %v4627, %v4626
      %v4650 = vpack.c.b16 %v4629, %v4628
      %v4651 = vpack.c.b16 %v4631, %v4630
      %v4652 = vpack.c.b16 %v4633, %v4632
      %v4653 = vpack.c.b16 %v4635, %v4634
      %v4673 = vsel %vm4338, %v4524, 0
      %v4676 = vsel %vm4338, %v4527, 0
      %4678 = vmatpush.bf16.msra.mxu0 %v4643
      %4679 = vmatpush.bf16.msra.mxu0 %v4642
      %4680 = vmatpush.bf16.msra.mxu0 %v4641
      %4681 = vmatpush.bf16.msra.mxu0 %v4640
      %4682 = vmatpush.bf16.msra.mxu0 %v4639
      %4683 = vmatpush.bf16.msra.mxu0 %v4638
      %4684 = vmatpush.bf16.msra.mxu0 %v4637
      %4685 = vmatpush.bf16.msra.mxu0 %v4636
      %4686 = vmatmul.bf16.gmra.mxu0 %v4522
      %v4687 = vpop.f32.mrf.mxu0
      %v4688 = vadd.f32 0.0, %v4687
      %v4689 = vpop.f32.mrf.mxu0
      %v4690 = vadd.f32 0.0, %v4689
      %4691 = vmatmul.bf16.gmra.mxu0 %v4525
      %v4692 = vpop.f32.mrf.mxu0
      %v4693 = vadd.f32 0.0, %v4692
      %v4694 = vpop.f32.mrf.mxu0
      %v4695 = vadd.f32 0.0, %v4694
      %4696 = vdwg.mxu0
      %4697 = vmatpush.bf16.msra.mxu0 %v4651
      %4698 = vmatpush.bf16.msra.mxu0 %v4650
      %4699 = vmatpush.bf16.msra.mxu0 %v4649
      %4700 = vmatpush.bf16.msra.mxu0 %v4648
      %4701 = vmatpush.bf16.msra.mxu0 %v4647
      %4702 = vmatpush.bf16.msra.mxu0 %v4646
      %4703 = vmatpush.bf16.msra.mxu0 %v4645
      %4704 = vmatpush.bf16.msra.mxu0 %v4644
      %4705 = vmatmul.bf16.gmra.mxu0 %v4523
      %v4706 = vpop.f32.mrf.mxu0
      %v4707 = vadd.f32 %v4688, %v4706
      %v4708 = vpop.f32.mrf.mxu0
      %v4709 = vadd.f32 %v4690, %v4708
      %4710 = vmatmul.bf16.gmra.mxu0 %v4526
      %v4711 = vpop.f32.mrf.mxu0
      %v4712 = vadd.f32 %v4693, %v4711
      %v4713 = vpop.f32.mrf.mxu0
      %v4714 = vadd.f32 %v4695, %v4713
      %4715 = vdwg.mxu0
      %4716 = vmatpush.bf16.msra.mxu0 0
      %4717 = vmatpush.bf16.msra.mxu0 0
      %4718 = vmatpush.bf16.msra.mxu0 0
      %4719 = vmatpush.bf16.msra.mxu0 0
      %4720 = vmatpush.bf16.msra.mxu0 0
      %4721 = vmatpush.bf16.msra.mxu0 0
      %4722 = vmatpush.bf16.msra.mxu0 %v4653
      %4723 = vmatpush.bf16.msra.mxu0 %v4652
      %4724 = vmatmul.bf16.gmra.mxu0 %v4673
      %v4725 = vpop.f32.mrf.mxu0
      %v4726 = vadd.f32 %v4707, %v4725
      %v4727 = vpop.f32.mrf.mxu0
      %v4728 = vadd.f32 %v4709, %v4727
      %4729 = vmatmul.bf16.gmra.mxu0 %v4676
      %v4730 = vpop.f32.mrf.mxu0
      %v4731 = vadd.f32 %v4712, %v4730
      %v4732 = vpop.f32.mrf.mxu0
      %v4733 = vadd.f32 %v4714, %v4732
      %4734 = vdwg.mxu0
      %v4735 = vld [vmem:[%s5] sm:$0x1]
      %v4737 = vperm.slane %v4735, 0
      %v4739 = vmul.f32 %v4726, %v4737
      %v4740 = vmul.f32 %v4728, %v4737
      %v4741 = vmul.f32 %v4731, %v4737
      %v4742 = vmul.f32 %v4733, %v4737
      %v4743 = vld [vmem:[%s6] sm:$0x1]
      %v4745 = vperm.slane %v4743, 0
      %v4747 = vadd.f32 %v4739, %v4745
      %v4748 = vadd.f32 %v4740, %v4745
      %v4749 = vadd.f32 %v4741, %v4745
      %v4750 = vadd.f32 %v4742, %v4745
      %4755 = vrot.lane.b32.xlu0 %v4747, 1
      %v4756 = vpop.permute.xlu0 %4755
      %4757 = vrot.lane.b32.xlu0 %v4748, 1
      %v4758 = vpop.permute.xlu0 %4757
      %4759 = vrot.lane.b32.xlu0 %v4749, 1
      %v4760 = vpop.permute.xlu0 %4759
      %4761 = vrot.lane.b32.xlu0 %v4750, 1
      %v4762 = vpop.permute.xlu0 %4761
      %v4767 = vsub.f32 %v4747, %v4756
      %v4768 = vsub.f32 %v4748, %v4758
      %v4769 = vsub.f32 %v4749, %v4760
      %v4770 = vsub.f32 %v4750, %v4762
      %v4771 = vmul.f32 %v4767, 1.442695
      %v4772 = vpow.pop %v4771
      %v4773 = vmul.f32 %v4768, 1.442695
      %v4774 = vpow.pop %v4773
      %v4775 = vmul.f32 %v4769, 1.442695
      %v4776 = vpow.pop %v4775
      %v4777 = vmul.f32 %v4770, 1.442695
      %v4778 = vpow.pop %v4777
      %v4779 = vadd.f32 %v4772, 1.0
      %v4780 = vadd.f32 %v4774, 1.0
      %v4781 = vadd.f32 %v4776, 1.0
      %v4782 = vadd.f32 %v4778, 1.0
      %v4783 = vrcp.pop %v4779
      %v4784 = vmul.f32 %v4779, %v4783
      %v4785 = vsub.f32 1.0, %v4784
      %v4786 = vmul.f32 %v4783, %v4785
      %v4787 = vadd.f32 %v4783, %v4786
      %vm4788 = vweird.f32 %v4779
      %vm4789 = vweird.f32 %v4783
      %vm4790 = vmor %vm4788, %vm4789
      %v4791 = vsel %vm4790, %v4783, %v4787
      %v4792 = vand.u32 2147483647, %v4779
      %vm4793 = vcmp.eq.f32.partialorder %v4792, 8.507059e+37
      %v4794 = vand.u32 %v4779, 2147483648
      %v4795 = vor.u32 1.1754944e-38, %v4794
      %v4796 = vsel %vm4793, %v4795, %v4791
      %v4797 = vmul.f32 1.0, %v4796
      %v4798 = vrcp.pop %v4780
      %v4799 = vmul.f32 %v4780, %v4798
      %v4800 = vsub.f32 1.0, %v4799
      %v4801 = vmul.f32 %v4798, %v4800
      %v4802 = vadd.f32 %v4798, %v4801
      %vm4803 = vweird.f32 %v4780
      %vm4804 = vweird.f32 %v4798
      %vm4805 = vmor %vm4803, %vm4804
      %v4806 = vsel %vm4805, %v4798, %v4802
      %v4807 = vand.u32 2147483647, %v4780
      %vm4808 = vcmp.eq.f32.partialorder %v4807, 8.507059e+37
      %v4809 = vand.u32 %v4780, 2147483648
      %v4810 = vor.u32 1.1754944e-38, %v4809
      %v4811 = vsel %vm4808, %v4810, %v4806
      %v4812 = vmul.f32 1.0, %v4811
      %v4813 = vrcp.pop %v4781
      %v4814 = vmul.f32 %v4781, %v4813
      %v4815 = vsub.f32 1.0, %v4814
      %v4816 = vmul.f32 %v4813, %v4815
      %v4817 = vadd.f32 %v4813, %v4816
      %vm4818 = vweird.f32 %v4781
      %vm4819 = vweird.f32 %v4813
      %vm4820 = vmor %vm4818, %vm4819
      %v4821 = vsel %vm4820, %v4813, %v4817
      %v4822 = vand.u32 2147483647, %v4781
      %vm4823 = vcmp.eq.f32.partialorder %v4822, 8.507059e+37
      %v4824 = vand.u32 %v4781, 2147483648
      %v4825 = vor.u32 1.1754944e-38, %v4824
      %v4826 = vsel %vm4823, %v4825, %v4821
      %v4827 = vmul.f32 1.0, %v4826
      %v4828 = vrcp.pop %v4782
      %v4829 = vmul.f32 %v4782, %v4828
      %v4830 = vsub.f32 1.0, %v4829
      %v4831 = vmul.f32 %v4828, %v4830
      %v4832 = vadd.f32 %v4828, %v4831
      %vm4833 = vweird.f32 %v4782
      %vm4834 = vweird.f32 %v4828
      %vm4835 = vmor %vm4833, %vm4834
      %v4836 = vsel %vm4835, %v4828, %v4832
      %v4837 = vand.u32 2147483647, %v4782
      %vm4838 = vcmp.eq.f32.partialorder %v4837, 8.507059e+37
      %v4839 = vand.u32 %v4782, 2147483648
      %v4840 = vor.u32 1.1754944e-38, %v4839
      %v4841 = vsel %vm4838, %v4840, %v4836
      %v4842 = vmul.f32 1.0, %v4841
      %v4843 = vsub.f32 1.0, %v4797
      %v4844 = vsub.f32 1.0, %v4812
      %v4845 = vsub.f32 1.0, %v4827
      %v4846 = vsub.f32 1.0, %v4842
      %v4847 = vlaneseq
      %v4848 = vand.u32 %v4847, 127
      %vm4849 = vcmp.lt.s32.totalorder %v4848, 19
      %v4850 = vmax.f32 %v4747, 0.0
      %v4851 = vmax.f32 %v4748, 0.0
      %v4852 = vmax.f32 %v4749, 0.0
      %v4853 = vmax.f32 %v4750, 0.0
      %v4854 = vsel %vm4849, %v4850, 0.0
      %v4855 = vsel %vm4849, %v4851, 0.0
      %v4856 = vsel %vm4849, %v4852, 0.0
      %v4857 = vsel %vm4849, %v4853, 0.0
      %vm4858 = vcmp.eq.s32.totalorder %v4848, 19
      %4860 = vset.pattern.permute.xlu0 20
      %4861 = vperm.xlu0 %4860, %v4797
      %v4862 = vpop.permute.xlu0 %4861
      %4865 = vset.pattern.permute.xlu0 20
      %4866 = vperm.xlu0 %4865, %v4812
      %v4867 = vpop.permute.xlu0 %4866
      %4870 = vset.pattern.permute.xlu0 20
      %4871 = vperm.xlu0 %4870, %v4827
      %v4872 = vpop.permute.xlu0 %4871
      %4875 = vset.pattern.permute.xlu0 20
      %4876 = vperm.xlu0 %4875, %v4842
      %v4877 = vpop.permute.xlu0 %4876
      %v4879 = vsel %vm4858, %v4862, %v4854
      %v4880 = vsel %vm4858, %v4867, %v4855
      %v4881 = vsel %vm4858, %v4872, %v4856
      %v4882 = vsel %vm4858, %v4877, %v4857
      %vm4883 = vcmp.eq.s32.totalorder %v4848, 20
      %4885 = vset.pattern.permute.xlu0 20
      %4886 = vperm.xlu0 %4885, %v4843
      %v4887 = vpop.permute.xlu0 %4886
      %4890 = vset.pattern.permute.xlu0 20
      %4891 = vperm.xlu0 %4890, %v4844
      %v4892 = vpop.permute.xlu0 %4891
      %4895 = vset.pattern.permute.xlu0 20
      %4896 = vperm.xlu0 %4895, %v4845
      %v4897 = vpop.permute.xlu0 %4896
      %4900 = vset.pattern.permute.xlu0 20
      %4901 = vperm.xlu0 %4900, %v4846
      %v4902 = vpop.permute.xlu0 %4901
      %v4904 = vsel %vm4883, %v4887, %v4879
      %v4905 = vsel %vm4883, %v4892, %v4880
      %v4906 = vsel %vm4883, %v4897, %v4881
      %v4907 = vsel %vm4883, %v4902, %v4882
      %v4908 = vpack.c.bf16 %v4904, %v4904
      %v4909 = vpack.c.bf16 %v4905, %v4905
      %v4910 = vpack.c.bf16 %v4906, %v4906
      %v4911 = vpack.c.bf16 %v4907, %v4907
      %4912 = vst [vmem:[%s278] sm:$0xf] %v4908
      %4913 = vst [vmem:[%s278 + $0x4] sm:$0xf] %v4909
      %4914 = vst [vmem:[%s278 + $0x8] sm:$0xf] %v4910
      %4915 = vst [vmem:[%s278 + $0xc] sm:$0xf] %v4911
      %p4916 = scmp.lt.s32.totalorder %s18, 1
      %s4917 = scalar_select %p4916, %s18, 1
      %s4918 = smul.addr %s4917, 4
      %s4919 = smul.addr %s4918, 4
      %s4920 = scalar_lea.vmem %s7, %s4919
      // Predicated region
      $region49: #{scnn_forward.1} parent=47 // pred_check
        %p4921 = pneg %p188
      $region50: #{scnn_forward.1} parent=47 // pred_check_branch
        %4923 = sbr.rel (%p4921) target = $region52
      $region51: #{scnn_forward.1} parent=47 // pred_region
        _
      $region52: #{scnn_forward.1} parent=47 // pred_fallthru
        _
    $region48: #{scnn_forward.1} parent=5 // pred_fallthru
      _
    %p4924 = scmp.le.s32.totalorder 2, %s13
    // Predicated region
    $region53: #{scnn_forward.1} parent=5 // pred_check
      %p4925 = pneg %p4924
    $region54: #{scnn_forward.1} parent=5 // pred_check_branch
      %4927 = sbr.rel (%p4925) target = $region56
    $region55: #{scnn_forward.1} parent=5 // pred_region
      %s4928 = ssub.s32 %s13, 2
      // Predicated region
      $region57: #{scnn_forward.1} parent=55 // pred_check
        %p4929 = pneg %p194
      $region58: #{scnn_forward.1} parent=55 // pred_check_branch
        %4931 = sbr.rel (%p4929) target = $region60
      $region59: #{scnn_forward.1} parent=55 // pred_region
        %p4932 = scmp.lt.s32.totalorder %s19, 1
        %s4933 = scalar_select %p4932, %s19, 1
        %s4934 = smul.addr %s4933, 4
        %s4935 = smul.addr %s4934, 4
        %s4936 = scalar_lea.vmem %s7, %s4935
      $region60: #{scnn_forward.1} parent=55 // pred_fallthru
        _
    $region56: #{scnn_forward.1} parent=5 // pred_fallthru
      _
  $region6: #{scnn_forward.1} parent=0 // loop_footer
    %s17 = sadd.s32 1, %s13
  $region7: #{scnn_forward.1} parent=0 // loop_footer_branch
    %12 = sbr.rel target = $region3
  $region8: #{scnn_forward.1} parent=0 // loop_exit
    _

</llo_original>
